<compile_context>
chip_gen: v7x
topology: tpu7x:2x2x1
jax: 0.10.0
libtpu: 0.0.40
codegen_flags: <defaults>
</compile_context>

<pallas_src>
import jax
import jax.numpy as jnp
from jax import lax
from jax.experimental import pallas as pl
from jax.experimental.pallas import tpu as pltpu

# ---- static block configuration -------------------------------------------
B, H, W = 2, 16, 16
C_IN = 8
EXPAND = 4
C_EXP = C_IN * EXPAND                 # 32
K = 3                                 # depthwise kernel size
STRIDE = 1
SE_RATIO = 0.25
C_SQ = max(1, int(C_IN * SE_RATIO))   # 2
C_OUT = C_IN                          # == input_filters -> id_skip active
BN_EPS = 1e-3

BH = B * H                            # 32  (sublane axis)
WCI = W * C_IN                        # 128 (lane axis, input / output)
WCE = W * C_EXP                       # 512 (lane axis, expanded)
WCO = W * C_OUT                       # 128

# slab row layout (each row is a (WCE,) f32 vector)
R_B0 = 0                              # BN0 bias, tiled over W
R_B1 = 1                              # BN1 bias, tiled over W
R_B2 = 2                              # BN2 bias, tiled over W (padded to WCE)
R_SER = 3                             # C_SQ rows: SE reduce weights (pool scale folded)
R_SEB = R_SER + C_SQ                  # C_SQ rows: SE reduce bias / WCE (spread over lane sum)
R_SEE = R_SEB + C_SQ                  # C_SQ rows: SE expand weights, tiled over W
R_BSEE = R_SEE + C_SQ                 # SE expand bias, tiled over W
N_SLAB = R_BSEE + 1

HIGHEST = lax.Precision.HIGHEST


# ---- fused Pallas kernel ----------------------------------------------------
def mbconv_kernel(x_ref, we_ref, wp_ref, kw_ref, slab_ref, o_ref):
    x = x_ref[...]                                            # (BH, WCI) f32

    # -- expand 1x1 conv (block-diag matmul, BN0 scale pre-folded) + swish --
    xe = jnp.dot(x, we_ref[...], precision=HIGHEST,
                 preferred_element_type=jnp.float32)          # (BH, WCE)
    xe = xe + slab_ref[R_B0:R_B0 + 1, :]
    xe = xe * jax.nn.sigmoid(xe)

    # -- depthwise 3x3, SAME padding, stride 1 (lane rolls + sublane rolls) --
    # W-shifted copies; W-edge zeroing is pre-folded into the tap weights.
    xp = pltpu.roll(xe, WCE - C_EXP, axis=1)                  # col w <- col w+1
    xm = pltpu.roll(xe, C_EXP, axis=1)                        # col w <- col w-1
    u = []                                                    # per kernel-row partials
    for i in range(K):
        u.append(xm * kw_ref[3 * i + 0:3 * i + 1, :]
                 + xe * kw_ref[3 * i + 1:3 * i + 2, :]
                 + xp * kw_ref[3 * i + 2:3 * i + 3, :])
    # H taps: sublane rolls + image-edge masks (also blocks cross-batch bleed).
    hh = lax.broadcasted_iota(jnp.int32, (BH, 1), 0) & (H - 1)  # row index in image
    dn = pltpu.roll(u[2], BH - 1, axis=0)                     # row h <- row h+1
    up = pltpu.roll(u[0], 1, axis=0)                          # row h <- row h-1
    xd = (u[1]
          + jnp.where(hh < H - 1, dn, 0.0)
          + jnp.where(hh > 0, up, 0.0)
          + slab_ref[R_B1:R_B1 + 1, :])                       # BN1 (scale pre-folded)
    xd = xd * jax.nn.sigmoid(xd)                              # swish

    # -- squeeze & excite (VPU/XLU only: sublane reduce + lane roll-tree) --
    rowsum = jnp.concatenate(
        [jnp.sum(xd[b * H:(b + 1) * H, :], axis=0, keepdims=True)
         for b in range(B)], axis=0)                          # (B, WCE)
    t = rowsum
    half = W // 2
    while half >= 1:                                          # all-reduce over W groups
        t = t + pltpu.roll(t, half * C_EXP, axis=1)
        half //= 2
    # every lane (w, c) of t now holds sum_{h,w'} xd[b, h, w', c]
    zs = []
    for s in range(C_SQ):
        z = jnp.sum(t * slab_ref[R_SER + s:R_SER + s + 1, :]
                    + slab_ref[R_SEB + s:R_SEB + s + 1, :],
                    axis=1, keepdims=True)                    # (B, 1)
        zs.append(z * jax.nn.sigmoid(z))                      # swish
    se = slab_ref[R_BSEE:R_BSEE + 1, :]                       # (1, WCE)
    for s in range(C_SQ):
        se = se + zs[s] * slab_ref[R_SEE + s:R_SEE + s + 1, :]
    gate = jax.nn.sigmoid(se)                                 # (B, WCE)
    gate_rows = jnp.concatenate(
        [jnp.broadcast_to(gate[b:b + 1, :], (H, WCE)) for b in range(B)],
        axis=0)                                               # (BH, WCE)
    xg = xd * gate_rows

    # -- project 1x1 conv (block-diag, BN2 scale pre-folded) + bias + id skip --
    y = jnp.dot(xg, wp_ref[...], precision=HIGHEST,
                preferred_element_type=jnp.float32)           # (BH, WCO)
    y = y + slab_ref[R_B2:R_B2 + 1, :WCO] + x
    o_ref[...] = y.astype(o_ref.dtype)


# ---- host-side parameter folding / packing ----------------------------------
def pack_params(p):
    s0 = p['s0'].reshape(-1); b0 = p['b0'].reshape(-1)
    s1 = p['s1'].reshape(-1); b1 = p['b1'].reshape(-1)
    s2 = p['s2'].reshape(-1); b2 = p['b2'].reshape(-1)

    we = p['w_expand'] * s0[None, :]                   # fold BN0 scale
    wp = p['w_proj'] * s2[None, :]                     # fold BN2 scale
    eye = jnp.eye(W, dtype=jnp.float32)
    we_bd = jnp.kron(eye, we)                          # (WCI, WCE) block-diagonal
    wp_bd = jnp.kron(eye, wp)                          # (WCE, WCO) block-diagonal

    wcol = jnp.arange(WCE) // C_EXP
    kw_rows = []
    for i in range(K):
        for j in range(K):
            row = jnp.tile(p['w_dw'][i, j] * s1, W)    # fold BN1 scale, tile over W
            if j == 0:                                 # dw = -1 invalid at w == 0
                row = jnp.where(wcol >= 1, row, 0.0)
            if j == K - 1:                             # dw = +1 invalid at w == W-1
                row = jnp.where(wcol <= W - 2, row, 0.0)
            kw_rows.append(row)
    kw = jnp.stack(kw_rows).astype(jnp.float32)        # (K*K, WCE)

    b_se_r = p['b_se_r'].reshape(-1)
    b_se_e = p['b_se_e'].reshape(-1)
    slab_rows = [jnp.tile(b0, W),
                 jnp.tile(b1, W),
                 jnp.pad(jnp.tile(b2, W), (0, WCE - WCO))]
    for s in range(C_SQ):   # SE reduce weight columns; mean + W-replication folded in
        slab_rows.append(jnp.tile(p['w_se_r'][:, s], W) / float(H * W * W))
    for s in range(C_SQ):   # SE reduce bias, spread so the lane-sum recovers it
        slab_rows.append(jnp.full((WCE,), 1.0, jnp.float32) * (b_se_r[s] / float(WCE)))
    for s in range(C_SQ):   # SE expand weight rows
        slab_rows.append(jnp.tile(p['w_se_e'][s, :], W))
    slab_rows.append(jnp.tile(b_se_e, W))
    slab = jnp.stack(slab_rows).astype(jnp.float32)    # (N_SLAB, WCE)

    return dict(we_bd=we_bd, wp_bd=wp_bd, kw=kw, slab=slab)


# ---- wrapper ----------------------------------------------------------------
@jax.jit
def mbconv_forward(x_nchw, pk):
    # NCHW -> NHWC -> lane-packed (B*H, W*C_IN)
    x2d = jnp.transpose(x_nchw, (0, 2, 3, 1)).reshape(BH, WCI)
    out2d = pl.pallas_call(
        mbconv_kernel,
        out_shape=jax.ShapeDtypeStruct((BH, WCO), jnp.float32),
        in_specs=[pl.BlockSpec(memory_space=pltpu.MemorySpace.VMEM)] * 5,
        out_specs=pl.BlockSpec(memory_space=pltpu.MemorySpace.VMEM),
    )(x2d, pk['we_bd'], pk['wp_bd'], pk['kw'], pk['slab'])
    # (B*H, W*C_OUT) -> NHWC -> NCHW
    return jnp.transpose(out2d.reshape(B, H, W, C_OUT), (0, 3, 1, 2))


# ---- pure-JAX reference (uses the raw, unfolded params) ----------------------
def ref_mbconv(x_nchw, p):
    x = jnp.transpose(x_nchw, (0, 2, 3, 1))
    xe = jnp.einsum('bhwc,cd->bhwd', x, p['w_expand'], precision=HIGHEST)
    xe = xe * p['s0'] + p['b0']
    xe = xe * jax.nn.sigmoid(xe)
    dw = lax.conv_general_dilated(
        xe, p['w_dw'].reshape(K, K, 1, C_EXP),
        window_strides=(STRIDE, STRIDE), padding='SAME',
        dimension_numbers=('NHWC', 'HWIO', 'NHWC'),
        feature_group_count=C_EXP, precision=HIGHEST)
    xd = dw * p['s1'] + p['b1']
    xd = xd * jax.nn.sigmoid(xd)
    pooled = jnp.mean(xd, axis=(1, 2))
    se = jnp.dot(pooled, p['w_se_r'], precision=HIGHEST) + p['b_se_r']
    se = se * jax.nn.sigmoid(se)
    se = jnp.dot(se, p['w_se_e'], precision=HIGHEST) + p['b_se_e']
    xg = xd * jax.nn.sigmoid(se)[:, None, None, :]
    y = jnp.einsum('bhwc,cd->bhwd', xg, p['w_proj'], precision=HIGHEST)
    y = y * p['s2'] + p['b2']
    y = y + x
    return jnp.transpose(y, (0, 3, 1, 2))


# ---- deterministic parameter construction -----------------------------------
def make_params(key):
    ks = jax.random.split(key, 20)

    def rnd(k, shape, scale=0.1):
        return jax.random.normal(k, shape, jnp.float32) * scale

    def fold_bn(kg, kb, km, kv, c):
        gamma = 1.0 + rnd(kg, (c,), 0.1)
        beta = rnd(kb, (c,), 0.1)
        mean = rnd(km, (c,), 0.1)
        var = 0.5 + jax.random.uniform(kv, (c,), jnp.float32)
        s = gamma / jnp.sqrt(var + BN_EPS)
        b = beta - mean * s
        return s.reshape(1, c), b.reshape(1, c)

    s0, b0 = fold_bn(ks[4], ks[5], ks[6], ks[7], C_EXP)
    s1, b1 = fold_bn(ks[8], ks[9], ks[10], ks[11], C_EXP)
    s2, b2 = fold_bn(ks[12], ks[13], ks[14], ks[15], C_OUT)
    return dict(
        w_expand=rnd(ks[0], (C_IN, C_EXP)),          # 1x1 conv, (Cin, Cexp)
        w_dw=rnd(ks[1], (K, K, C_EXP)),              # depthwise, (K, K, Cexp)
        w_se_r=rnd(ks[2], (C_EXP, C_SQ)),
        b_se_r=rnd(ks[16], (1, C_SQ)),
        w_se_e=rnd(ks[3], (C_SQ, C_EXP)),
        b_se_e=rnd(ks[17], (1, C_EXP)),
        w_proj=rnd(ks[18], (C_EXP, C_OUT)),
        s0=s0, b0=b0, s1=s1, b1=b1, s2=s2, b2=b2,
    )


if __name__ == "__main__":
    key = jax.random.PRNGKey(0)
    kx, kp = jax.random.split(key)
    x = jax.random.normal(kx, (B, C_IN, H, W), jnp.float32)   # NCHW like PyTorch
    params = make_params(kp)
    packed = pack_params(params)                              # one-time host-side folding

    out = jax.block_until_ready(mbconv_forward(x, packed))
    ref = jax.block_until_ready(ref_mbconv(x, params))

    assert out.shape == (B, C_OUT, H, W), out.shape
    err = float(jnp.max(jnp.abs(out - ref)))
    assert err < 1e-4, f"max abs error {err}"
    print("KERNEL_OK")
</pallas_src>

<mosaic_0001>
module attributes {stable_mosaic.version = 11 : i64} {
  func.func @mbconv_kernel(%arg0: memref<32x128xf32, #tpu.memory_space<vmem>>, %arg1: memref<128x512xf32, #tpu.memory_space<vmem>>, %arg2: memref<512x128xf32, #tpu.memory_space<vmem>>, %arg3: memref<9x512xf32, #tpu.memory_space<vmem>>, %arg4: memref<10x512xf32, #tpu.memory_space<vmem>>, %arg5: memref<32x128xf32, #tpu.memory_space<vmem>>) attributes {dimension_semantics = [], scalar_prefetch = 0 : i64, scratch_operands = 0 : i64, tpu.core_type = #tpu.core_type<tc>} {
    %c0 = arith.constant 0 : index
    %c0_0 = arith.constant 0 : index
    %0 = vector.load %arg0[%c0, %c0_0] : memref<32x128xf32, #tpu.memory_space<vmem>>, vector<32x128xf32>
    %c0_1 = arith.constant 0 : index
    %c0_2 = arith.constant 0 : index
    %1 = vector.load %arg1[%c0_1, %c0_2] : memref<128x512xf32, #tpu.memory_space<vmem>>, vector<128x512xf32>
    %cst = arith.constant dense<0.000000e+00> : vector<32x512xf32>
    %2 = tpu.matmul %0, %1, %cst {dimension_numbers = #tpu.dot_dimension_numbers<[1], [0], [0], [1], [0, 0, 1, 1], [], []>, precision = #tpu.contract_precision<fp32>} : vector<32x128xf32>, vector<128x512xf32>, vector<32x512xf32> -> vector<32x512xf32>
    %c0_3 = arith.constant 0 : index
    %c0_4 = arith.constant 0 : index
    %3 = vector.load %arg4[%c0_3, %c0_4] : memref<10x512xf32, #tpu.memory_space<vmem>>, vector<1x512xf32>
    %4 = vector.broadcast %3 : vector<1x512xf32> to vector<32x512xf32>
    %5 = arith.addf %2, %4 : vector<32x512xf32>
    %6 = arith.negf %5 : vector<32x512xf32>
    %7 = math.exp %6 : vector<32x512xf32>
    %cst_5 = arith.constant 1.000000e+00 : f32
    %8 = vector.broadcast %cst_5 : f32 to vector<32x512xf32>
    %9 = arith.addf %8, %7 : vector<32x512xf32>
    %10 = arith.divf %8, %9 : vector<32x512xf32>
    %11 = arith.mulf %5, %10 : vector<32x512xf32>
    %c480_i32 = arith.constant 480 : i32
    %12 = tpu.dynamic_rotate %11 by %c480_i32 dim 1 : vector<32x512xf32>, i32 -> vector<32x512xf32>
    %c32_i32 = arith.constant 32 : i32
    %13 = tpu.dynamic_rotate %11 by %c32_i32 dim 1 : vector<32x512xf32>, i32 -> vector<32x512xf32>
    %c0_6 = arith.constant 0 : index
    %c0_7 = arith.constant 0 : index
    %14 = vector.load %arg3[%c0_6, %c0_7] : memref<9x512xf32, #tpu.memory_space<vmem>>, vector<1x512xf32>
    %15 = vector.broadcast %14 : vector<1x512xf32> to vector<32x512xf32>
    %16 = arith.mulf %13, %15 : vector<32x512xf32>
    %c1 = arith.constant 1 : index
    %c0_8 = arith.constant 0 : index
    %17 = vector.load %arg3[%c1, %c0_8] : memref<9x512xf32, #tpu.memory_space<vmem>>, vector<1x512xf32>
    %18 = vector.broadcast %17 : vector<1x512xf32> to vector<32x512xf32>
    %19 = arith.mulf %11, %18 : vector<32x512xf32>
    %20 = arith.addf %16, %19 : vector<32x512xf32>
    %c2 = arith.constant 2 : index
    %c0_9 = arith.constant 0 : index
    %21 = vector.load %arg3[%c2, %c0_9] : memref<9x512xf32, #tpu.memory_space<vmem>>, vector<1x512xf32>
    %22 = vector.broadcast %21 : vector<1x512xf32> to vector<32x512xf32>
    %23 = arith.mulf %12, %22 : vector<32x512xf32>
    %24 = arith.addf %20, %23 : vector<32x512xf32>
    %c3 = arith.constant 3 : index
    %c0_10 = arith.constant 0 : index
    %25 = vector.load %arg3[%c3, %c0_10] : memref<9x512xf32, #tpu.memory_space<vmem>>, vector<1x512xf32>
    %26 = vector.broadcast %25 : vector<1x512xf32> to vector<32x512xf32>
    %27 = arith.mulf %13, %26 : vector<32x512xf32>
    %c4 = arith.constant 4 : index
    %c0_11 = arith.constant 0 : index
    %28 = vector.load %arg3[%c4, %c0_11] : memref<9x512xf32, #tpu.memory_space<vmem>>, vector<1x512xf32>
    %29 = vector.broadcast %28 : vector<1x512xf32> to vector<32x512xf32>
    %30 = arith.mulf %11, %29 : vector<32x512xf32>
    %31 = arith.addf %27, %30 : vector<32x512xf32>
    %c5 = arith.constant 5 : index
    %c0_12 = arith.constant 0 : index
    %32 = vector.load %arg3[%c5, %c0_12] : memref<9x512xf32, #tpu.memory_space<vmem>>, vector<1x512xf32>
    %33 = vector.broadcast %32 : vector<1x512xf32> to vector<32x512xf32>
    %34 = arith.mulf %12, %33 : vector<32x512xf32>
    %35 = arith.addf %31, %34 : vector<32x512xf32>
    %c6 = arith.constant 6 : index
    %c0_13 = arith.constant 0 : index
    %36 = vector.load %arg3[%c6, %c0_13] : memref<9x512xf32, #tpu.memory_space<vmem>>, vector<1x512xf32>
    %37 = vector.broadcast %36 : vector<1x512xf32> to vector<32x512xf32>
    %38 = arith.mulf %13, %37 : vector<32x512xf32>
    %c7 = arith.constant 7 : index
    %c0_14 = arith.constant 0 : index
    %39 = vector.load %arg3[%c7, %c0_14] : memref<9x512xf32, #tpu.memory_space<vmem>>, vector<1x512xf32>
    %40 = vector.broadcast %39 : vector<1x512xf32> to vector<32x512xf32>
    %41 = arith.mulf %11, %40 : vector<32x512xf32>
    %42 = arith.addf %38, %41 : vector<32x512xf32>
    %c8 = arith.constant 8 : index
    %c0_15 = arith.constant 0 : index
    %43 = vector.load %arg3[%c8, %c0_15] : memref<9x512xf32, #tpu.memory_space<vmem>>, vector<1x512xf32>
    %44 = vector.broadcast %43 : vector<1x512xf32> to vector<32x512xf32>
    %45 = arith.mulf %12, %44 : vector<32x512xf32>
    %46 = arith.addf %42, %45 : vector<32x512xf32>
    %47 = tpu.iota {dimensions = array<i32: 0>} : vector<32x1xi32>
    %c15_i32 = arith.constant 15 : i32
    %48 = vector.broadcast %c15_i32 : i32 to vector<32x1xi32>
    %49 = arith.andi %47, %48 : vector<32x1xi32>
    %c31_i32 = arith.constant 31 : i32
    %50 = tpu.dynamic_rotate %46 by %c31_i32 dim 0 : vector<32x512xf32>, i32 -> vector<32x512xf32>
    %c1_i32 = arith.constant 1 : i32
    %51 = tpu.dynamic_rotate %24 by %c1_i32 dim 0 : vector<32x512xf32>, i32 -> vector<32x512xf32>
    %c15_i32_16 = arith.constant 15 : i32
    %52 = vector.broadcast %c15_i32_16 : i32 to vector<32x1xi32>
    %53 = arith.cmpi slt, %49, %52 : vector<32x1xi32>
    %cst_17 = arith.constant 0.000000e+00 : f32
    %54 = vector.shape_cast %53 : vector<32x1xi1> to vector<32x1xi1>
    %55 = vector.broadcast %54 : vector<32x1xi1> to vector<32x512xi1>
    %56 = vector.broadcast %cst_17 : f32 to vector<32x512xf32>
    %57 = arith.select %55, %50, %56 : vector<32x512xi1>, vector<32x512xf32>
    %58 = arith.addf %35, %57 : vector<32x512xf32>
    %c0_i32 = arith.constant 0 : i32
    %59 = vector.broadcast %c0_i32 : i32 to vector<32x1xi32>
    %60 = arith.cmpi sgt, %49, %59 : vector<32x1xi32>
    %cst_18 = arith.constant 0.000000e+00 : f32
    %61 = vector.shape_cast %60 : vector<32x1xi1> to vector<32x1xi1>
    %62 = vector.broadcast %61 : vector<32x1xi1> to vector<32x512xi1>
    %63 = vector.broadcast %cst_18 : f32 to vector<32x512xf32>
    %64 = arith.select %62, %51, %63 : vector<32x512xi1>, vector<32x512xf32>
    %65 = arith.addf %58, %64 : vector<32x512xf32>
    %c1_19 = arith.constant 1 : index
    %c0_20 = arith.constant 0 : index
    %66 = vector.load %arg4[%c1_19, %c0_20] : memref<10x512xf32, #tpu.memory_space<vmem>>, vector<1x512xf32>
    %67 = vector.broadcast %66 : vector<1x512xf32> to vector<32x512xf32>
    %68 = arith.addf %65, %67 : vector<32x512xf32>
    %69 = arith.negf %68 : vector<32x512xf32>
    %70 = math.exp %69 : vector<32x512xf32>
    %cst_21 = arith.constant 1.000000e+00 : f32
    %71 = vector.broadcast %cst_21 : f32 to vector<32x512xf32>
    %72 = arith.addf %71, %70 : vector<32x512xf32>
    %73 = arith.divf %71, %72 : vector<32x512xf32>
    %74 = arith.mulf %68, %73 : vector<32x512xf32>
    %75 = vector.extract_strided_slice %74 {offsets = [0, 0], sizes = [16, 512], strides = [1, 1]} : vector<32x512xf32> to vector<16x512xf32>
    %cst_22 = arith.constant dense<0.000000e+00> : vector<512xf32>
    %76 = vector.multi_reduction <add>, %75, %cst_22 [0] : vector<16x512xf32> to vector<512xf32>
    %77 = vector.shape_cast %76 : vector<512xf32> to vector<1x512xf32>
    %78 = vector.extract_strided_slice %74 {offsets = [16, 0], sizes = [16, 512], strides = [1, 1]} : vector<32x512xf32> to vector<16x512xf32>
    %cst_23 = arith.constant dense<0.000000e+00> : vector<512xf32>
    %79 = vector.multi_reduction <add>, %78, %cst_23 [0] : vector<16x512xf32> to vector<512xf32>
    %80 = vector.shape_cast %79 : vector<512xf32> to vector<1x512xf32>
    %81 = tpu.concatenate %77, %80 in 0 : vector<1x512xf32>, vector<1x512xf32> -> vector<2x512xf32>
    %c256_i32 = arith.constant 256 : i32
    %82 = tpu.dynamic_rotate %81 by %c256_i32 dim 1 : vector<2x512xf32>, i32 -> vector<2x512xf32>
    %83 = arith.addf %81, %82 : vector<2x512xf32>
    %c128_i32 = arith.constant 128 : i32
    %84 = tpu.dynamic_rotate %83 by %c128_i32 dim 1 : vector<2x512xf32>, i32 -> vector<2x512xf32>
    %85 = arith.addf %83, %84 : vector<2x512xf32>
    %c64_i32 = arith.constant 64 : i32
    %86 = tpu.dynamic_rotate %85 by %c64_i32 dim 1 : vector<2x512xf32>, i32 -> vector<2x512xf32>
    %87 = arith.addf %85, %86 : vector<2x512xf32>
    %c32_i32_24 = arith.constant 32 : i32
    %88 = tpu.dynamic_rotate %87 by %c32_i32_24 dim 1 : vector<2x512xf32>, i32 -> vector<2x512xf32>
    %89 = arith.addf %87, %88 : vector<2x512xf32>
    %c3_25 = arith.constant 3 : index
    %c0_26 = arith.constant 0 : index
    %90 = vector.load %arg4[%c3_25, %c0_26] : memref<10x512xf32, #tpu.memory_space<vmem>>, vector<1x512xf32>
    %91 = vector.broadcast %90 : vector<1x512xf32> to vector<2x512xf32>
    %92 = arith.mulf %89, %91 : vector<2x512xf32>
    %c5_27 = arith.constant 5 : index
    %c0_28 = arith.constant 0 : index
    %93 = vector.load %arg4[%c5_27, %c0_28] : memref<10x512xf32, #tpu.memory_space<vmem>>, vector<1x512xf32>
    %94 = vector.broadcast %93 : vector<1x512xf32> to vector<2x512xf32>
    %95 = arith.addf %92, %94 : vector<2x512xf32>
    %cst_29 = arith.constant dense<0.000000e+00> : vector<2xf32>
    %96 = vector.multi_reduction <add>, %95, %cst_29 [1] : vector<2x512xf32> to vector<2xf32>
    %97 = vector.shape_cast %96 : vector<2xf32> to vector<2x1xf32>
    %98 = arith.negf %97 : vector<2x1xf32>
    %99 = math.exp %98 : vector<2x1xf32>
    %cst_30 = arith.constant 1.000000e+00 : f32
    %100 = vector.broadcast %cst_30 : f32 to vector<2x1xf32>
    %101 = arith.addf %100, %99 : vector<2x1xf32>
    %102 = arith.divf %100, %101 : vector<2x1xf32>
    %103 = arith.mulf %97, %102 : vector<2x1xf32>
    %c4_31 = arith.constant 4 : index
    %c0_32 = arith.constant 0 : index
    %104 = vector.load %arg4[%c4_31, %c0_32] : memref<10x512xf32, #tpu.memory_space<vmem>>, vector<1x512xf32>
    %105 = vector.broadcast %104 : vector<1x512xf32> to vector<2x512xf32>
    %106 = arith.mulf %89, %105 : vector<2x512xf32>
    %c6_33 = arith.constant 6 : index
    %c0_34 = arith.constant 0 : index
    %107 = vector.load %arg4[%c6_33, %c0_34] : memref<10x512xf32, #tpu.memory_space<vmem>>, vector<1x512xf32>
    %108 = vector.broadcast %107 : vector<1x512xf32> to vector<2x512xf32>
    %109 = arith.addf %106, %108 : vector<2x512xf32>
    %cst_35 = arith.constant dense<0.000000e+00> : vector<2xf32>
    %110 = vector.multi_reduction <add>, %109, %cst_35 [1] : vector<2x512xf32> to vector<2xf32>
    %111 = vector.shape_cast %110 : vector<2xf32> to vector<2x1xf32>
    %112 = arith.negf %111 : vector<2x1xf32>
    %113 = math.exp %112 : vector<2x1xf32>
    %cst_36 = arith.constant 1.000000e+00 : f32
    %114 = vector.broadcast %cst_36 : f32 to vector<2x1xf32>
    %115 = arith.addf %114, %113 : vector<2x1xf32>
    %116 = arith.divf %114, %115 : vector<2x1xf32>
    %117 = arith.mulf %111, %116 : vector<2x1xf32>
    %c9 = arith.constant 9 : index
    %c0_37 = arith.constant 0 : index
    %118 = vector.load %arg4[%c9, %c0_37] : memref<10x512xf32, #tpu.memory_space<vmem>>, vector<1x512xf32>
    %c7_38 = arith.constant 7 : index
    %c0_39 = arith.constant 0 : index
    %119 = vector.load %arg4[%c7_38, %c0_39] : memref<10x512xf32, #tpu.memory_space<vmem>>, vector<1x512xf32>
    %120 = vector.broadcast %103 : vector<2x1xf32> to vector<2x512xf32>
    %121 = vector.broadcast %119 : vector<1x512xf32> to vector<2x512xf32>
    %122 = arith.mulf %120, %121 : vector<2x512xf32>
    %123 = vector.broadcast %118 : vector<1x512xf32> to vector<2x512xf32>
    %124 = arith.addf %123, %122 : vector<2x512xf32>
    %c8_40 = arith.constant 8 : index
    %c0_41 = arith.constant 0 : index
    %125 = vector.load %arg4[%c8_40, %c0_41] : memref<10x512xf32, #tpu.memory_space<vmem>>, vector<1x512xf32>
    %126 = vector.broadcast %117 : vector<2x1xf32> to vector<2x512xf32>
    %127 = vector.broadcast %125 : vector<1x512xf32> to vector<2x512xf32>
    %128 = arith.mulf %126, %127 : vector<2x512xf32>
    %129 = arith.addf %124, %128 : vector<2x512xf32>
    %130 = arith.negf %129 : vector<2x512xf32>
    %131 = math.exp %130 : vector<2x512xf32>
    %cst_42 = arith.constant 1.000000e+00 : f32
    %132 = vector.broadcast %cst_42 : f32 to vector<2x512xf32>
    %133 = arith.addf %132, %131 : vector<2x512xf32>
    %134 = arith.divf %132, %133 : vector<2x512xf32>
    %135 = vector.extract_strided_slice %134 {offsets = [0, 0], sizes = [1, 512], strides = [1, 1]} : vector<2x512xf32> to vector<1x512xf32>
    %136 = vector.shape_cast %135 : vector<1x512xf32> to vector<1x512xf32>
    %137 = vector.broadcast %136 : vector<1x512xf32> to vector<16x512xf32>
    %138 = vector.extract_strided_slice %134 {offsets = [1, 0], sizes = [1, 512], strides = [1, 1]} : vector<2x512xf32> to vector<1x512xf32>
    %139 = vector.shape_cast %138 : vector<1x512xf32> to vector<1x512xf32>
    %140 = vector.broadcast %139 : vector<1x512xf32> to vector<16x512xf32>
    %141 = tpu.concatenate %137, %140 in 0 : vector<16x512xf32>, vector<16x512xf32> -> vector<32x512xf32>
    %142 = arith.mulf %74, %141 : vector<32x512xf32>
    %c0_43 = arith.constant 0 : index
    %c0_44 = arith.constant 0 : index
    %143 = vector.load %arg2[%c0_43, %c0_44] : memref<512x128xf32, #tpu.memory_space<vmem>>, vector<512x128xf32>
    %cst_45 = arith.constant dense<0.000000e+00> : vector<32x128xf32>
    %144 = tpu.matmul %142, %143, %cst_45 {dimension_numbers = #tpu.dot_dimension_numbers<[1], [0], [0], [1], [0, 0, 1, 1], [], []>, precision = #tpu.contract_precision<fp32>} : vector<32x512xf32>, vector<512x128xf32>, vector<32x128xf32> -> vector<32x128xf32>
    %c2_46 = arith.constant 2 : index
    %c0_47 = arith.constant 0 : index
    %145 = vector.load %arg4[%c2_46, %c0_47] : memref<10x512xf32, #tpu.memory_space<vmem>>, vector<1x128xf32>
    %146 = vector.broadcast %145 : vector<1x128xf32> to vector<32x128xf32>
    %147 = arith.addf %144, %146 : vector<32x128xf32>
    %148 = arith.addf %147, %0 : vector<32x128xf32>
    %c0_48 = arith.constant 0 : index
    %c0_49 = arith.constant 0 : index
    %149 = vector.load %arg5[%c0_48, %c0_49] : memref<32x128xf32, #tpu.memory_space<vmem>>, vector<32x128xf32>
    tpu.vector_store %arg5[%c0_48, %c0_49], %148 {strides = array<i32>} : memref<32x128xf32, #tpu.memory_space<vmem>>, vector<32x128xf32>,
    return
  }
}

</mosaic_0001>

<llo_original>
// kernel: mbconv_forward.1
$region0: #{mbconv_forward.1}
  #allocation0 [shape = 'u32[]', space=smem, size = 0x4, offset = 0x4, fixed_abs, tag = 'smem constant byte address 0x4 - core index']
  #allocation1 [shape = 'u32[144,128]{1,0:T(1,128)}', space=vmem, size = 0x12000, scoped, tag = 'internal scratch']
  %s0 = inlined_call_operand.vmem [shape: f32[32,128], index: 0, kind: input, shape index: {}]
  %s1 = inlined_call_operand.vmem [shape: f32[128,512], index: 1, kind: input, shape index: {}]
  %s2 = inlined_call_operand.vmem [shape: f32[512,128], index: 2, kind: input, shape index: {}]
  %s3 = inlined_call_operand.hbm [shape: f32[9,512], index: 3, kind: input, shape index: {}]
  %s4 = inlined_call_operand.hbm [shape: f32[10,512], index: 4, kind: input, shape index: {}]
  %s5 = inlined_call_operand.vmem [shape: f32[32,128], index: 5, kind: output, shape index: {}]
  %s6 = sld [smem:[#allocation0]]
  $region38: #{mbconv_forward.1} parent=0
    _
  %s8 = ssub.s32 1, %s6
  %s9 = scalar_select 0, %s8, %s6
  $region1: #{mbconv_forward.1} parent=0
    #allocation2 [shape = 'u8[32768]{0}', space=vmem, size = 0x8000, scoped, tag = 'input window, operand 3, single buffered']
    #allocation3 [shape = 's32[1]{0}', space=sflag, size = 0x4, scoped, tag = 'scoped memory for mbconv_forward.1']
    #allocation4 [shape = 'u8[32768]{0}', space=vmem, size = 0x8000, scoped, tag = 'input window, operand 4, single buffered']
    #allocation5 [shape = 's32[1]{0}', space=sflag, size = 0x4, scoped, tag = 'scoped memory for mbconv_forward.1']
    %10 = vsyncpa [#allocation3], 0
    %11 = vsyncpa [#allocation5], 0
    // Predicated region
    $region2: #{mbconv_forward.1} parent=1 // pred_check
      _
    $region3: #{mbconv_forward.1} parent=1 // pred_check_branch
      %13 = sbr.rel (0) target = $region5
    $region4: #{mbconv_forward.1} parent=1 // pred_region
      _
    $region5: #{mbconv_forward.1} parent=1 // pred_fallthru
      _
    // Predicated region
    $region6: #{mbconv_forward.1} parent=1 // pred_check
      _
    $region7: #{mbconv_forward.1} parent=1 // pred_check_branch
      %15 = sbr.rel (0) target = $region9
    $region8: #{mbconv_forward.1} parent=1 // pred_region
      _
    $region9: #{mbconv_forward.1} parent=1 // pred_fallthru
      _
    // Predicated region
    $region10: #{mbconv_forward.1} parent=1 // pred_check
      _
    $region11: #{mbconv_forward.1} parent=1 // pred_check_branch
      %17 = sbr.rel (0) target = $region13
    $region12: #{mbconv_forward.1} parent=1 // pred_region
      _
    $region13: #{mbconv_forward.1} parent=1 // pred_fallthru
      _
    // Predicated region
    $region14: #{mbconv_forward.1} parent=1 // pred_check
      _
    $region15: #{mbconv_forward.1} parent=1 // pred_check_branch
      %19 = sbr.rel (0) target = $region17
    $region16: #{mbconv_forward.1} parent=1 // pred_region
      %s21 = ssub.s32 1024, 1024
      %22 = vsyncadd [#allocation3], %s21
      %s23 = sshll.u32 [#allocation2], 4
      %s24 = int_to_ptr.vmem [resolvable:$true] %s23
      %29 = dma.hbm_to_vmem [thread:$0]  %s3, 1024, %s24, [#allocation3], 512, 512, 32
    $region17: #{mbconv_forward.1} parent=1 // pred_fallthru
      _
    // Predicated region
    $region18: #{mbconv_forward.1} parent=1 // pred_check
      _
    $region19: #{mbconv_forward.1} parent=1 // pred_check_branch
      %31 = sbr.rel (0) target = $region21
    $region20: #{mbconv_forward.1} parent=1 // pred_region
      %s33 = ssub.s32 1024, 1024
      %34 = vsyncadd [#allocation5], %s33
      %s35 = sshll.u32 [#allocation4], 4
      %s36 = int_to_ptr.vmem [resolvable:$true] %s35
      %41 = dma.hbm_to_vmem [thread:$0]  %s4, 1024, %s36, [#allocation5], 512, 512, 32
    $region21: #{mbconv_forward.1} parent=1 // pred_fallthru
      _
    // Predicated region
    $region22: #{mbconv_forward.1} parent=1 // pred_check
      _
    $region23: #{mbconv_forward.1} parent=1 // pred_check_branch
      %43 = sbr.rel (0) target = $region25
    $region24: #{mbconv_forward.1} parent=1 // pred_region
      %44 = dma.done [#allocation3], 1024
    $region25: #{mbconv_forward.1} parent=1 // pred_fallthru
      _
    // Predicated region
    $region26: #{mbconv_forward.1} parent=1 // pred_check
      _
    $region27: #{mbconv_forward.1} parent=1 // pred_check_branch
      %46 = sbr.rel (0) target = $region29
    $region28: #{mbconv_forward.1} parent=1 // pred_region
      %47 = dma.done [#allocation5], 1024
    $region29: #{mbconv_forward.1} parent=1 // pred_fallthru
      _
    %v48 = vld [vmem:[%s0] sm:$0xff]
    %v49 = vld [vmem:[%s0 + $0x8] sm:$0xff]
    %v50 = vld [vmem:[%s0 + $0x10] sm:$0xff]
    %v51 = vld [vmem:[%s0 + $0x18] sm:$0xff]
    %v52 = vld [vmem:[%s1] sm:$0xff]
    %v53 = vld [vmem:[%s1 + $0x8] sm:$0xff]
    %v54 = vld [vmem:[%s1 + $0x10] sm:$0xff]
    %v55 = vld [vmem:[%s1 + $0x18] sm:$0xff]
    %v56 = vld [vmem:[%s1 + $0x20] sm:$0xff]
    %v57 = vld [vmem:[%s1 + $0x28] sm:$0xff]
    %v58 = vld [vmem:[%s1 + $0x30] sm:$0xff]
    %v59 = vld [vmem:[%s1 + $0x38] sm:$0xff]
    %v60 = vld [vmem:[%s1 + $0x40] sm:$0xff]
    %v61 = vld [vmem:[%s1 + $0x48] sm:$0xff]
    %v62 = vld [vmem:[%s1 + $0x50] sm:$0xff]
    %v63 = vld [vmem:[%s1 + $0x58] sm:$0xff]
    %v64 = vld [vmem:[%s1 + $0x60] sm:$0xff]
    %v65 = vld [vmem:[%s1 + $0x68] sm:$0xff]
    %v66 = vld [vmem:[%s1 + $0x70] sm:$0xff]
    %v67 = vld [vmem:[%s1 + $0x78] sm:$0xff]
    %v68 = vld [vmem:[%s1 + $0x80] sm:$0xff]
    %v69 = vld [vmem:[%s1 + $0x88] sm:$0xff]
    %v70 = vld [vmem:[%s1 + $0x90] sm:$0xff]
    %v71 = vld [vmem:[%s1 + $0x98] sm:$0xff]
    %v72 = vld [vmem:[%s1 + $0xa0] sm:$0xff]
    %v73 = vld [vmem:[%s1 + $0xa8] sm:$0xff]
    %v74 = vld [vmem:[%s1 + $0xb0] sm:$0xff]
    %v75 = vld [vmem:[%s1 + $0xb8] sm:$0xff]
    %v76 = vld [vmem:[%s1 + $0xc0] sm:$0xff]
    %v77 = vld [vmem:[%s1 + $0xc8] sm:$0xff]
    %v78 = vld [vmem:[%s1 + $0xd0] sm:$0xff]
    %v79 = vld [vmem:[%s1 + $0xd8] sm:$0xff]
    %v80 = vld [vmem:[%s1 + $0xe0] sm:$0xff]
    %v81 = vld [vmem:[%s1 + $0xe8] sm:$0xff]
    %v82 = vld [vmem:[%s1 + $0xf0] sm:$0xff]
    %v83 = vld [vmem:[%s1 + $0xf8] sm:$0xff]
    %v84 = vld [vmem:[%s1 + $0x100] sm:$0xff]
    %v85 = vld [vmem:[%s1 + $0x108] sm:$0xff]
    %v86 = vld [vmem:[%s1 + $0x110] sm:$0xff]
    %v87 = vld [vmem:[%s1 + $0x118] sm:$0xff]
    %v88 = vld [vmem:[%s1 + $0x120] sm:$0xff]
    %v89 = vld [vmem:[%s1 + $0x128] sm:$0xff]
    %v90 = vld [vmem:[%s1 + $0x130] sm:$0xff]
    %v91 = vld [vmem:[%s1 + $0x138] sm:$0xff]
    %v92 = vld [vmem:[%s1 + $0x140] sm:$0xff]
    %v93 = vld [vmem:[%s1 + $0x148] sm:$0xff]
    %v94 = vld [vmem:[%s1 + $0x150] sm:$0xff]
    %v95 = vld [vmem:[%s1 + $0x158] sm:$0xff]
    %v96 = vld [vmem:[%s1 + $0x160] sm:$0xff]
    %v97 = vld [vmem:[%s1 + $0x168] sm:$0xff]
    %v98 = vld [vmem:[%s1 + $0x170] sm:$0xff]
    %v99 = vld [vmem:[%s1 + $0x178] sm:$0xff]
    %v100 = vld [vmem:[%s1 + $0x180] sm:$0xff]
    %v101 = vld [vmem:[%s1 + $0x188] sm:$0xff]
    %v102 = vld [vmem:[%s1 + $0x190] sm:$0xff]
    %v103 = vld [vmem:[%s1 + $0x198] sm:$0xff]
    %v104 = vld [vmem:[%s1 + $0x1a0] sm:$0xff]
    %v105 = vld [vmem:[%s1 + $0x1a8] sm:$0xff]
    %v106 = vld [vmem:[%s1 + $0x1b0] sm:$0xff]
    %v107 = vld [vmem:[%s1 + $0x1b8] sm:$0xff]
    %v108 = vld [vmem:[%s1 + $0x1c0] sm:$0xff]
    %v109 = vld [vmem:[%s1 + $0x1c8] sm:$0xff]
    %v110 = vld [vmem:[%s1 + $0x1d0] sm:$0xff]
    %v111 = vld [vmem:[%s1 + $0x1d8] sm:$0xff]
    %v112 = vld [vmem:[%s1 + $0x1e0] sm:$0xff]
    %v113 = vld [vmem:[%s1 + $0x1e8] sm:$0xff]
    %v114 = vld [vmem:[%s1 + $0x1f0] sm:$0xff]
    %v115 = vld [vmem:[%s1 + $0x1f8] sm:$0xff]
    %v116 = vld [vmem:[#allocation4] ss:$8 sm:$0xf]
    %v118 = vlaneseq
    %v119 = vshrl.u32 %v118, 7
    %v120 = vsub.s32 0, %v119
    %v121 = vrot.slane %v116, %v120
    %v122 = vlaneseq
    %v123 = vshrl.u32 %v122, 7
    %v124 = vsub.s32 1, %v123
    %v125 = vrot.slane %v116, %v124
    %v126 = vlaneseq
    %v127 = vshrl.u32 %v126, 7
    %v128 = vsub.s32 2, %v127
    %v129 = vrot.slane %v116, %v128
    %v130 = vlaneseq
    %v131 = vshrl.u32 %v130, 7
    %v132 = vsub.s32 3, %v131
    %v133 = vrot.slane %v116, %v132
    %v138 = vand.u32 %v53, 4294901760
    %139 = vmatprep.subr.mxu0 %v138
    %v140 = vand.u32 %v52, 4294901760
    %141 = vmatpush1.msra.mxu0 %v140
    %v142 = vand.u32 %v57, 4294901760
    %143 = vmatprep.subr.mxu0 %v142
    %v144 = vand.u32 %v56, 4294901760
    %145 = vmatpush1.msra.mxu0 %v144
    %v146 = vand.u32 %v61, 4294901760
    %147 = vmatprep.subr.mxu0 %v146
    %v148 = vand.u32 %v60, 4294901760
    %149 = vmatpush1.msra.mxu0 %v148
    %v150 = vand.u32 %v65, 4294901760
    %151 = vmatprep.subr.mxu0 %v150
    %v152 = vand.u32 %v64, 4294901760
    %153 = vmatpush1.msra.mxu0 %v152
    %v154 = vand.u32 %v69, 4294901760
    %155 = vmatprep.subr.mxu0 %v154
    %v156 = vand.u32 %v68, 4294901760
    %157 = vmatpush1.msra.mxu0 %v156
    %v158 = vand.u32 %v73, 4294901760
    %159 = vmatprep.subr.mxu0 %v158
    %v160 = vand.u32 %v72, 4294901760
    %161 = vmatpush1.msra.mxu0 %v160
    %v162 = vand.u32 %v77, 4294901760
    %163 = vmatprep.subr.mxu0 %v162
    %v164 = vand.u32 %v76, 4294901760
    %165 = vmatpush1.msra.mxu0 %v164
    %v166 = vand.u32 %v81, 4294901760
    %167 = vmatprep.subr.mxu0 %v166
    %v168 = vand.u32 %v80, 4294901760
    %169 = vmatpush1.msra.mxu0 %v168
    %v170 = vand.u32 %v85, 4294901760
    %171 = vmatprep.subr.mxu0 %v170
    %v172 = vand.u32 %v84, 4294901760
    %173 = vmatpush1.msra.mxu0 %v172
    %v174 = vand.u32 %v89, 4294901760
    %175 = vmatprep.subr.mxu0 %v174
    %v176 = vand.u32 %v88, 4294901760
    %177 = vmatpush1.msra.mxu0 %v176
    %v178 = vand.u32 %v93, 4294901760
    %179 = vmatprep.subr.mxu0 %v178
    %v180 = vand.u32 %v92, 4294901760
    %181 = vmatpush1.msra.mxu0 %v180
    %v182 = vand.u32 %v97, 4294901760
    %183 = vmatprep.subr.mxu0 %v182
    %v184 = vand.u32 %v96, 4294901760
    %185 = vmatpush1.msra.mxu0 %v184
    %v186 = vand.u32 %v101, 4294901760
    %187 = vmatprep.subr.mxu0 %v186
    %v188 = vand.u32 %v100, 4294901760
    %189 = vmatpush1.msra.mxu0 %v188
    %v190 = vand.u32 %v105, 4294901760
    %191 = vmatprep.subr.mxu0 %v190
    %v192 = vand.u32 %v104, 4294901760
    %193 = vmatpush1.msra.mxu0 %v192
    %v194 = vand.u32 %v109, 4294901760
    %195 = vmatprep.subr.mxu0 %v194
    %v196 = vand.u32 %v108, 4294901760
    %197 = vmatpush1.msra.mxu0 %v196
    %v198 = vand.u32 %v113, 4294901760
    %199 = vmatprep.subr.mxu0 %v198
    %v200 = vand.u32 %v112, 4294901760
    %201 = vmatpush1.msra.mxu0 %v200
    %202 = vmatprep.subr.mxu0 0.0
    %203 = vmatpush1.msra.mxu0 0.0
    %204 = vmatprep.subr.mxu0 0.0
    %205 = vmatpush1.msra.mxu0 0.0
    %206 = vmatprep.subr.mxu0 0.0
    %207 = vmatpush1.msra.mxu0 0.0
    %208 = vmatprep.subr.mxu0 0.0
    %209 = vmatpush1.msra.mxu0 0.0
    %210 = vmatprep.subr.mxu0 0.0
    %211 = vmatpush1.msra.mxu0 0.0
    %212 = vmatprep.subr.mxu0 0.0
    %213 = vmatpush1.msra.mxu0 0.0
    %214 = vmatprep.subr.mxu0 0.0
    %215 = vmatpush1.msra.mxu0 0.0
    %216 = vmatprep.subr.mxu0 0.0
    %217 = vmatpush1.msra.mxu0 0.0
    %218 = vmatprep.subr.mxu0 0.0
    %219 = vmatpush1.msra.mxu0 0.0
    %220 = vmatprep.subr.mxu0 0.0
    %221 = vmatpush1.msra.mxu0 0.0
    %222 = vmatprep.subr.mxu0 0.0
    %223 = vmatpush1.msra.mxu0 0.0
    %224 = vmatprep.subr.mxu0 0.0
    %225 = vmatpush1.msra.mxu0 0.0
    %226 = vmatprep.subr.mxu0 0.0
    %227 = vmatpush1.msra.mxu0 0.0
    %228 = vmatprep.subr.mxu0 0.0
    %229 = vmatpush1.msra.mxu0 0.0
    %230 = vmatprep.subr.mxu0 0.0
    %231 = vmatpush1.msra.mxu0 0.0
    %232 = vmatprep.subr.mxu0 0.0
    %233 = vmatpush1.msra.mxu0 0.0
    %234 = vmatprep.mubr.f32.mxu0 0.0
    %v235 = vand.u32 %v48, 4294901760
    %v236 = vsub.f32 %v48, %v235
    %v237 = vand.u32 %v236, 4294901760
    %v238 = vsub.f32 %v236, %v237
    %v239 = vand.u32 %v238, 4294901760
    %240 = vmatmul.mubr.f32.gmra.mrb[0].mxu0 %v239
    %v241 = vpop.f32.mrb[0].mxu0
    %v242 = vadd.f32 %v121, %v241
    %v243 = vpop.f32.mrb[0].mxu0
    %v244 = vadd.f32 %v125, %v243
    %245 = vmatprep.mubr.f32.mxu0 0.0
    %v246 = vand.u32 %v49, 4294901760
    %v247 = vsub.f32 %v49, %v246
    %v248 = vand.u32 %v247, 4294901760
    %v249 = vsub.f32 %v247, %v248
    %v250 = vand.u32 %v249, 4294901760
    %251 = vmatmul.mubr.f32.gmra.mrb[0].mxu0 %v250
    %v252 = vpop.f32.mrb[0].mxu0
    %v253 = vadd.f32 %v121, %v252
    %v254 = vpop.f32.mrb[0].mxu0
    %v255 = vadd.f32 %v125, %v254
    %256 = vmatprep.mubr.f32.mxu0 0.0
    %v257 = vand.u32 %v50, 4294901760
    %v258 = vsub.f32 %v50, %v257
    %v259 = vand.u32 %v258, 4294901760
    %v260 = vsub.f32 %v258, %v259
    %v261 = vand.u32 %v260, 4294901760
    %262 = vmatmul.mubr.f32.gmra.mrb[0].mxu0 %v261
    %v263 = vpop.f32.mrb[0].mxu0
    %v264 = vadd.f32 %v121, %v263
    %v265 = vpop.f32.mrb[0].mxu0
    %v266 = vadd.f32 %v125, %v265
    %267 = vmatprep.mubr.f32.mxu0 0.0
    %v268 = vand.u32 %v51, 4294901760
    %v269 = vsub.f32 %v51, %v268
    %v270 = vand.u32 %v269, 4294901760
    %v271 = vsub.f32 %v269, %v270
    %v272 = vand.u32 %v271, 4294901760
    %273 = vmatmul.mubr.f32.gmra.mrb[0].mxu0 %v272
    %v274 = vpop.f32.mrb[0].mxu0
    %v275 = vadd.f32 %v121, %v274
    %v276 = vpop.f32.mrb[0].mxu0
    %v277 = vadd.f32 %v125, %v276
    %278 = vdwg.mxu0
    %v279 = vand.u32 %v53, 4294901760
    %v280 = vsub.f32 %v53, %v279
    %v281 = vand.u32 %v280, 4294901760
    %v282 = vsub.f32 %v280, %v281
    %v283 = vand.u32 %v282, 4294901760
    %284 = vmatprep.subr.mxu0 %v283
    %v285 = vand.u32 %v52, 4294901760
    %v286 = vsub.f32 %v52, %v285
    %v287 = vand.u32 %v286, 4294901760
    %v288 = vsub.f32 %v286, %v287
    %v289 = vand.u32 %v288, 4294901760
    %290 = vmatpush1.msra.mxu0 %v289
    %v291 = vand.u32 %v57, 4294901760
    %v292 = vsub.f32 %v57, %v291
    %v293 = vand.u32 %v292, 4294901760
    %v294 = vsub.f32 %v292, %v293
    %v295 = vand.u32 %v294, 4294901760
    %296 = vmatprep.subr.mxu0 %v295
    %v297 = vand.u32 %v56, 4294901760
    %v298 = vsub.f32 %v56, %v297
    %v299 = vand.u32 %v298, 4294901760
    %v300 = vsub.f32 %v298, %v299
    %v301 = vand.u32 %v300, 4294901760
    %302 = vmatpush1.msra.mxu0 %v301
    %v303 = vand.u32 %v61, 4294901760
    %v304 = vsub.f32 %v61, %v303
    %v305 = vand.u32 %v304, 4294901760
    %v306 = vsub.f32 %v304, %v305
    %v307 = vand.u32 %v306, 4294901760
    %308 = vmatprep.subr.mxu0 %v307
    %v309 = vand.u32 %v60, 4294901760
    %v310 = vsub.f32 %v60, %v309
    %v311 = vand.u32 %v310, 4294901760
    %v312 = vsub.f32 %v310, %v311
    %v313 = vand.u32 %v312, 4294901760
    %314 = vmatpush1.msra.mxu0 %v313
    %v315 = vand.u32 %v65, 4294901760
    %v316 = vsub.f32 %v65, %v315
    %v317 = vand.u32 %v316, 4294901760
    %v318 = vsub.f32 %v316, %v317
    %v319 = vand.u32 %v318, 4294901760
    %320 = vmatprep.subr.mxu0 %v319
    %v321 = vand.u32 %v64, 4294901760
    %v322 = vsub.f32 %v64, %v321
    %v323 = vand.u32 %v322, 4294901760
    %v324 = vsub.f32 %v322, %v323
    %v325 = vand.u32 %v324, 4294901760
    %326 = vmatpush1.msra.mxu0 %v325
    %v327 = vand.u32 %v69, 4294901760
    %v328 = vsub.f32 %v69, %v327
    %v329 = vand.u32 %v328, 4294901760
    %v330 = vsub.f32 %v328, %v329
    %v331 = vand.u32 %v330, 4294901760
    %332 = vmatprep.subr.mxu0 %v331
    %v333 = vand.u32 %v68, 4294901760
    %v334 = vsub.f32 %v68, %v333
    %v335 = vand.u32 %v334, 4294901760
    %v336 = vsub.f32 %v334, %v335
    %v337 = vand.u32 %v336, 4294901760
    %338 = vmatpush1.msra.mxu0 %v337
    %v339 = vand.u32 %v73, 4294901760
    %v340 = vsub.f32 %v73, %v339
    %v341 = vand.u32 %v340, 4294901760
    %v342 = vsub.f32 %v340, %v341
    %v343 = vand.u32 %v342, 4294901760
    %344 = vmatprep.subr.mxu0 %v343
    %v345 = vand.u32 %v72, 4294901760
    %v346 = vsub.f32 %v72, %v345
    %v347 = vand.u32 %v346, 4294901760
    %v348 = vsub.f32 %v346, %v347
    %v349 = vand.u32 %v348, 4294901760
    %350 = vmatpush1.msra.mxu0 %v349
    %v351 = vand.u32 %v77, 4294901760
    %v352 = vsub.f32 %v77, %v351
    %v353 = vand.u32 %v352, 4294901760
    %v354 = vsub.f32 %v352, %v353
    %v355 = vand.u32 %v354, 4294901760
    %356 = vmatprep.subr.mxu0 %v355
    %v357 = vand.u32 %v76, 4294901760
    %v358 = vsub.f32 %v76, %v357
    %v359 = vand.u32 %v358, 4294901760
    %v360 = vsub.f32 %v358, %v359
    %v361 = vand.u32 %v360, 4294901760
    %362 = vmatpush1.msra.mxu0 %v361
    %v363 = vand.u32 %v81, 4294901760
    %v364 = vsub.f32 %v81, %v363
    %v365 = vand.u32 %v364, 4294901760
    %v366 = vsub.f32 %v364, %v365
    %v367 = vand.u32 %v366, 4294901760
    %368 = vmatprep.subr.mxu0 %v367
    %v369 = vand.u32 %v80, 4294901760
    %v370 = vsub.f32 %v80, %v369
    %v371 = vand.u32 %v370, 4294901760
    %v372 = vsub.f32 %v370, %v371
    %v373 = vand.u32 %v372, 4294901760
    %374 = vmatpush1.msra.mxu0 %v373
    %v375 = vand.u32 %v85, 4294901760
    %v376 = vsub.f32 %v85, %v375
    %v377 = vand.u32 %v376, 4294901760
    %v378 = vsub.f32 %v376, %v377
    %v379 = vand.u32 %v378, 4294901760
    %380 = vmatprep.subr.mxu0 %v379
    %v381 = vand.u32 %v84, 4294901760
    %v382 = vsub.f32 %v84, %v381
    %v383 = vand.u32 %v382, 4294901760
    %v384 = vsub.f32 %v382, %v383
    %v385 = vand.u32 %v384, 4294901760
    %386 = vmatpush1.msra.mxu0 %v385
    %v387 = vand.u32 %v89, 4294901760
    %v388 = vsub.f32 %v89, %v387
    %v389 = vand.u32 %v388, 4294901760
    %v390 = vsub.f32 %v388, %v389
    %v391 = vand.u32 %v390, 4294901760
    %392 = vmatprep.subr.mxu0 %v391
    %v393 = vand.u32 %v88, 4294901760
    %v394 = vsub.f32 %v88, %v393
    %v395 = vand.u32 %v394, 4294901760
    %v396 = vsub.f32 %v394, %v395
    %v397 = vand.u32 %v396, 4294901760
    %398 = vmatpush1.msra.mxu0 %v397
    %v399 = vand.u32 %v93, 4294901760
    %v400 = vsub.f32 %v93, %v399
    %v401 = vand.u32 %v400, 4294901760
    %v402 = vsub.f32 %v400, %v401
    %v403 = vand.u32 %v402, 4294901760
    %404 = vmatprep.subr.mxu0 %v403
    %v405 = vand.u32 %v92, 4294901760
    %v406 = vsub.f32 %v92, %v405
    %v407 = vand.u32 %v406, 4294901760
    %v408 = vsub.f32 %v406, %v407
    %v409 = vand.u32 %v408, 4294901760
    %410 = vmatpush1.msra.mxu0 %v409
    %v411 = vand.u32 %v97, 4294901760
    %v412 = vsub.f32 %v97, %v411
    %v413 = vand.u32 %v412, 4294901760
    %v414 = vsub.f32 %v412, %v413
    %v415 = vand.u32 %v414, 4294901760
    %416 = vmatprep.subr.mxu0 %v415
    %v417 = vand.u32 %v96, 4294901760
    %v418 = vsub.f32 %v96, %v417
    %v419 = vand.u32 %v418, 4294901760
    %v420 = vsub.f32 %v418, %v419
    %v421 = vand.u32 %v420, 4294901760
    %422 = vmatpush1.msra.mxu0 %v421
    %v423 = vand.u32 %v101, 4294901760
    %v424 = vsub.f32 %v101, %v423
    %v425 = vand.u32 %v424, 4294901760
    %v426 = vsub.f32 %v424, %v425
    %v427 = vand.u32 %v426, 4294901760
    %428 = vmatprep.subr.mxu0 %v427
    %v429 = vand.u32 %v100, 4294901760
    %v430 = vsub.f32 %v100, %v429
    %v431 = vand.u32 %v430, 4294901760
    %v432 = vsub.f32 %v430, %v431
    %v433 = vand.u32 %v432, 4294901760
    %434 = vmatpush1.msra.mxu0 %v433
    %v435 = vand.u32 %v105, 4294901760
    %v436 = vsub.f32 %v105, %v435
    %v437 = vand.u32 %v436, 4294901760
    %v438 = vsub.f32 %v436, %v437
    %v439 = vand.u32 %v438, 4294901760
    %440 = vmatprep.subr.mxu0 %v439
    %v441 = vand.u32 %v104, 4294901760
    %v442 = vsub.f32 %v104, %v441
    %v443 = vand.u32 %v442, 4294901760
    %v444 = vsub.f32 %v442, %v443
    %v445 = vand.u32 %v444, 4294901760
    %446 = vmatpush1.msra.mxu0 %v445
    %v447 = vand.u32 %v109, 4294901760
    %v448 = vsub.f32 %v109, %v447
    %v449 = vand.u32 %v448, 4294901760
    %v450 = vsub.f32 %v448, %v449
    %v451 = vand.u32 %v450, 4294901760
    %452 = vmatprep.subr.mxu0 %v451
    %v453 = vand.u32 %v108, 4294901760
    %v454 = vsub.f32 %v108, %v453
    %v455 = vand.u32 %v454, 4294901760
    %v456 = vsub.f32 %v454, %v455
    %v457 = vand.u32 %v456, 4294901760
    %458 = vmatpush1.msra.mxu0 %v457
    %v459 = vand.u32 %v113, 4294901760
    %v460 = vsub.f32 %v113, %v459
    %v461 = vand.u32 %v460, 4294901760
    %v462 = vsub.f32 %v460, %v461
    %v463 = vand.u32 %v462, 4294901760
    %464 = vmatprep.subr.mxu0 %v463
    %v465 = vand.u32 %v112, 4294901760
    %v466 = vsub.f32 %v112, %v465
    %v467 = vand.u32 %v466, 4294901760
    %v468 = vsub.f32 %v466, %v467
    %v469 = vand.u32 %v468, 4294901760
    %470 = vmatpush1.msra.mxu0 %v469
    %471 = vmatprep.subr.mxu0 0.0
    %472 = vmatpush1.msra.mxu0 0.0
    %473 = vmatprep.subr.mxu0 0.0
    %474 = vmatpush1.msra.mxu0 0.0
    %475 = vmatprep.subr.mxu0 0.0
    %476 = vmatpush1.msra.mxu0 0.0
    %477 = vmatprep.subr.mxu0 0.0
    %478 = vmatpush1.msra.mxu0 0.0
    %479 = vmatprep.subr.mxu0 0.0
    %480 = vmatpush1.msra.mxu0 0.0
    %481 = vmatprep.subr.mxu0 0.0
    %482 = vmatpush1.msra.mxu0 0.0
    %483 = vmatprep.subr.mxu0 0.0
    %484 = vmatpush1.msra.mxu0 0.0
    %485 = vmatprep.subr.mxu0 0.0
    %486 = vmatpush1.msra.mxu0 0.0
    %487 = vmatprep.subr.mxu0 0.0
    %488 = vmatpush1.msra.mxu0 0.0
    %489 = vmatprep.subr.mxu0 0.0
    %490 = vmatpush1.msra.mxu0 0.0
    %491 = vmatprep.subr.mxu0 0.0
    %492 = vmatpush1.msra.mxu0 0.0
    %493 = vmatprep.subr.mxu0 0.0
    %494 = vmatpush1.msra.mxu0 0.0
    %495 = vmatprep.subr.mxu0 0.0
    %496 = vmatpush1.msra.mxu0 0.0
    %497 = vmatprep.subr.mxu0 0.0
    %498 = vmatpush1.msra.mxu0 0.0
    %499 = vmatprep.subr.mxu0 0.0
    %500 = vmatpush1.msra.mxu0 0.0
    %501 = vmatprep.subr.mxu0 0.0
    %502 = vmatpush1.msra.mxu0 0.0
    %503 = vmatprep.mubr.f32.mxu0 0.0
    %v504 = vand.u32 %v48, 4294901760
    %505 = vmatmul.mubr.f32.gmra.mrb[0].mxu0 %v504
    %v506 = vpop.f32.mrb[0].mxu0
    %v507 = vadd.f32 %v242, %v506
    %v508 = vpop.f32.mrb[0].mxu0
    %v509 = vadd.f32 %v244, %v508
    %510 = vmatprep.mubr.f32.mxu0 0.0
    %v511 = vand.u32 %v49, 4294901760
    %512 = vmatmul.mubr.f32.gmra.mrb[0].mxu0 %v511
    %v513 = vpop.f32.mrb[0].mxu0
    %v514 = vadd.f32 %v253, %v513
    %v515 = vpop.f32.mrb[0].mxu0
    %v516 = vadd.f32 %v255, %v515
    %517 = vmatprep.mubr.f32.mxu0 0.0
    %v518 = vand.u32 %v50, 4294901760
    %519 = vmatmul.mubr.f32.gmra.mrb[0].mxu0 %v518
    %v520 = vpop.f32.mrb[0].mxu0
    %v521 = vadd.f32 %v264, %v520
    %v522 = vpop.f32.mrb[0].mxu0
    %v523 = vadd.f32 %v266, %v522
    %524 = vmatprep.mubr.f32.mxu0 0.0
    %v525 = vand.u32 %v51, 4294901760
    %526 = vmatmul.mubr.f32.gmra.mrb[0].mxu0 %v525
    %v527 = vpop.f32.mrb[0].mxu0
    %v528 = vadd.f32 %v275, %v527
    %v529 = vpop.f32.mrb[0].mxu0
    %v530 = vadd.f32 %v277, %v529
    %531 = vdwg.mxu0
    %v532 = vand.u32 %v53, 4294901760
    %v533 = vsub.f32 %v53, %v532
    %534 = vmatprep.subr.mxu0 %v533
    %v535 = vand.u32 %v52, 4294901760
    %v536 = vsub.f32 %v52, %v535
    %537 = vmatpush1.msra.mxu0 %v536
    %v538 = vand.u32 %v57, 4294901760
    %v539 = vsub.f32 %v57, %v538
    %540 = vmatprep.subr.mxu0 %v539
    %v541 = vand.u32 %v56, 4294901760
    %v542 = vsub.f32 %v56, %v541
    %543 = vmatpush1.msra.mxu0 %v542
    %v544 = vand.u32 %v61, 4294901760
    %v545 = vsub.f32 %v61, %v544
    %546 = vmatprep.subr.mxu0 %v545
    %v547 = vand.u32 %v60, 4294901760
    %v548 = vsub.f32 %v60, %v547
    %549 = vmatpush1.msra.mxu0 %v548
    %v550 = vand.u32 %v65, 4294901760
    %v551 = vsub.f32 %v65, %v550
    %552 = vmatprep.subr.mxu0 %v551
    %v553 = vand.u32 %v64, 4294901760
    %v554 = vsub.f32 %v64, %v553
    %555 = vmatpush1.msra.mxu0 %v554
    %v556 = vand.u32 %v69, 4294901760
    %v557 = vsub.f32 %v69, %v556
    %558 = vmatprep.subr.mxu0 %v557
    %v559 = vand.u32 %v68, 4294901760
    %v560 = vsub.f32 %v68, %v559
    %561 = vmatpush1.msra.mxu0 %v560
    %v562 = vand.u32 %v73, 4294901760
    %v563 = vsub.f32 %v73, %v562
    %564 = vmatprep.subr.mxu0 %v563
    %v565 = vand.u32 %v72, 4294901760
    %v566 = vsub.f32 %v72, %v565
    %567 = vmatpush1.msra.mxu0 %v566
    %v568 = vand.u32 %v77, 4294901760
    %v569 = vsub.f32 %v77, %v568
    %570 = vmatprep.subr.mxu0 %v569
    %v571 = vand.u32 %v76, 4294901760
    %v572 = vsub.f32 %v76, %v571
    %573 = vmatpush1.msra.mxu0 %v572
    %v574 = vand.u32 %v81, 4294901760
    %v575 = vsub.f32 %v81, %v574
    %576 = vmatprep.subr.mxu0 %v575
    %v577 = vand.u32 %v80, 4294901760
    %v578 = vsub.f32 %v80, %v577
    %579 = vmatpush1.msra.mxu0 %v578
    %v580 = vand.u32 %v85, 4294901760
    %v581 = vsub.f32 %v85, %v580
    %582 = vmatprep.subr.mxu0 %v581
    %v583 = vand.u32 %v84, 4294901760
    %v584 = vsub.f32 %v84, %v583
    %585 = vmatpush1.msra.mxu0 %v584
    %v586 = vand.u32 %v89, 4294901760
    %v587 = vsub.f32 %v89, %v586
    %588 = vmatprep.subr.mxu0 %v587
    %v589 = vand.u32 %v88, 4294901760
    %v590 = vsub.f32 %v88, %v589
    %591 = vmatpush1.msra.mxu0 %v590
    %v592 = vand.u32 %v93, 4294901760
    %v593 = vsub.f32 %v93, %v592
    %594 = vmatprep.subr.mxu0 %v593
    %v595 = vand.u32 %v92, 4294901760
    %v596 = vsub.f32 %v92, %v595
    %597 = vmatpush1.msra.mxu0 %v596
    %v598 = vand.u32 %v97, 4294901760
    %v599 = vsub.f32 %v97, %v598
    %600 = vmatprep.subr.mxu0 %v599
    %v601 = vand.u32 %v96, 4294901760
    %v602 = vsub.f32 %v96, %v601
    %603 = vmatpush1.msra.mxu0 %v602
    %v604 = vand.u32 %v101, 4294901760
    %v605 = vsub.f32 %v101, %v604
    %606 = vmatprep.subr.mxu0 %v605
    %v607 = vand.u32 %v100, 4294901760
    %v608 = vsub.f32 %v100, %v607
    %609 = vmatpush1.msra.mxu0 %v608
    %v610 = vand.u32 %v105, 4294901760
    %v611 = vsub.f32 %v105, %v610
    %612 = vmatprep.subr.mxu0 %v611
    %v613 = vand.u32 %v104, 4294901760
    %v614 = vsub.f32 %v104, %v613
    %615 = vmatpush1.msra.mxu0 %v614
    %v616 = vand.u32 %v109, 4294901760
    %v617 = vsub.f32 %v109, %v616
    %618 = vmatprep.subr.mxu0 %v617
    %v619 = vand.u32 %v108, 4294901760
    %v620 = vsub.f32 %v108, %v619
    %621 = vmatpush1.msra.mxu0 %v620
    %v622 = vand.u32 %v113, 4294901760
    %v623 = vsub.f32 %v113, %v622
    %624 = vmatprep.subr.mxu0 %v623
    %v625 = vand.u32 %v112, 4294901760
    %v626 = vsub.f32 %v112, %v625
    %627 = vmatpush1.msra.mxu0 %v626
    %628 = vmatprep.subr.mxu0 0.0
    %629 = vmatpush1.msra.mxu0 0.0
    %630 = vmatprep.subr.mxu0 0.0
    %631 = vmatpush1.msra.mxu0 0.0
    %632 = vmatprep.subr.mxu0 0.0
    %633 = vmatpush1.msra.mxu0 0.0
    %634 = vmatprep.subr.mxu0 0.0
    %635 = vmatpush1.msra.mxu0 0.0
    %636 = vmatprep.subr.mxu0 0.0
    %637 = vmatpush1.msra.mxu0 0.0
    %638 = vmatprep.subr.mxu0 0.0
    %639 = vmatpush1.msra.mxu0 0.0
    %640 = vmatprep.subr.mxu0 0.0
    %641 = vmatpush1.msra.mxu0 0.0
    %642 = vmatprep.subr.mxu0 0.0
    %643 = vmatpush1.msra.mxu0 0.0
    %644 = vmatprep.subr.mxu0 0.0
    %645 = vmatpush1.msra.mxu0 0.0
    %646 = vmatprep.subr.mxu0 0.0
    %647 = vmatpush1.msra.mxu0 0.0
    %648 = vmatprep.subr.mxu0 0.0
    %649 = vmatpush1.msra.mxu0 0.0
    %650 = vmatprep.subr.mxu0 0.0
    %651 = vmatpush1.msra.mxu0 0.0
    %652 = vmatprep.subr.mxu0 0.0
    %653 = vmatpush1.msra.mxu0 0.0
    %654 = vmatprep.subr.mxu0 0.0
    %655 = vmatpush1.msra.mxu0 0.0
    %656 = vmatprep.subr.mxu0 0.0
    %657 = vmatpush1.msra.mxu0 0.0
    %658 = vmatprep.subr.mxu0 0.0
    %659 = vmatpush1.msra.mxu0 0.0
    %660 = vmatprep.mubr.f32.mxu0 0.0
    %v661 = vand.u32 %v48, 4294901760
    %v662 = vsub.f32 %v48, %v661
    %663 = vmatmul.mubr.f32.gmra.mrb[0].mxu0 %v662
    %v664 = vpop.f32.mrb[0].mxu0
    %v665 = vadd.f32 %v507, %v664
    %v666 = vpop.f32.mrb[0].mxu0
    %v667 = vadd.f32 %v509, %v666
    %668 = vmatprep.mubr.f32.mxu0 0.0
    %v669 = vand.u32 %v49, 4294901760
    %v670 = vsub.f32 %v49, %v669
    %671 = vmatmul.mubr.f32.gmra.mrb[0].mxu0 %v670
    %v672 = vpop.f32.mrb[0].mxu0
    %v673 = vadd.f32 %v514, %v672
    %v674 = vpop.f32.mrb[0].mxu0
    %v675 = vadd.f32 %v516, %v674
    %676 = vmatprep.mubr.f32.mxu0 0.0
    %v677 = vand.u32 %v50, 4294901760
    %v678 = vsub.f32 %v50, %v677
    %679 = vmatmul.mubr.f32.gmra.mrb[0].mxu0 %v678
    %v680 = vpop.f32.mrb[0].mxu0
    %v681 = vadd.f32 %v521, %v680
    %v682 = vpop.f32.mrb[0].mxu0
    %v683 = vadd.f32 %v523, %v682
    %684 = vmatprep.mubr.f32.mxu0 0.0
    %v685 = vand.u32 %v51, 4294901760
    %v686 = vsub.f32 %v51, %v685
    %687 = vmatmul.mubr.f32.gmra.mrb[0].mxu0 %v686
    %v688 = vpop.f32.mrb[0].mxu0
    %v689 = vadd.f32 %v528, %v688
    %v690 = vpop.f32.mrb[0].mxu0
    %v691 = vadd.f32 %v530, %v690
    %692 = vdwg.mxu0
    %v693 = vand.u32 %v53, 4294901760
    %694 = vmatprep.subr.mxu0 %v693
    %v695 = vand.u32 %v52, 4294901760
    %696 = vmatpush1.msra.mxu0 %v695
    %v697 = vand.u32 %v57, 4294901760
    %698 = vmatprep.subr.mxu0 %v697
    %v699 = vand.u32 %v56, 4294901760
    %700 = vmatpush1.msra.mxu0 %v699
    %v701 = vand.u32 %v61, 4294901760
    %702 = vmatprep.subr.mxu0 %v701
    %v703 = vand.u32 %v60, 4294901760
    %704 = vmatpush1.msra.mxu0 %v703
    %v705 = vand.u32 %v65, 4294901760
    %706 = vmatprep.subr.mxu0 %v705
    %v707 = vand.u32 %v64, 4294901760
    %708 = vmatpush1.msra.mxu0 %v707
    %v709 = vand.u32 %v69, 4294901760
    %710 = vmatprep.subr.mxu0 %v709
    %v711 = vand.u32 %v68, 4294901760
    %712 = vmatpush1.msra.mxu0 %v711
    %v713 = vand.u32 %v73, 4294901760
    %714 = vmatprep.subr.mxu0 %v713
    %v715 = vand.u32 %v72, 4294901760
    %716 = vmatpush1.msra.mxu0 %v715
    %v717 = vand.u32 %v77, 4294901760
    %718 = vmatprep.subr.mxu0 %v717
    %v719 = vand.u32 %v76, 4294901760
    %720 = vmatpush1.msra.mxu0 %v719
    %v721 = vand.u32 %v81, 4294901760
    %722 = vmatprep.subr.mxu0 %v721
    %v723 = vand.u32 %v80, 4294901760
    %724 = vmatpush1.msra.mxu0 %v723
    %v725 = vand.u32 %v85, 4294901760
    %726 = vmatprep.subr.mxu0 %v725
    %v727 = vand.u32 %v84, 4294901760
    %728 = vmatpush1.msra.mxu0 %v727
    %v729 = vand.u32 %v89, 4294901760
    %730 = vmatprep.subr.mxu0 %v729
    %v731 = vand.u32 %v88, 4294901760
    %732 = vmatpush1.msra.mxu0 %v731
    %v733 = vand.u32 %v93, 4294901760
    %734 = vmatprep.subr.mxu0 %v733
    %v735 = vand.u32 %v92, 4294901760
    %736 = vmatpush1.msra.mxu0 %v735
    %v737 = vand.u32 %v97, 4294901760
    %738 = vmatprep.subr.mxu0 %v737
    %v739 = vand.u32 %v96, 4294901760
    %740 = vmatpush1.msra.mxu0 %v739
    %v741 = vand.u32 %v101, 4294901760
    %742 = vmatprep.subr.mxu0 %v741
    %v743 = vand.u32 %v100, 4294901760
    %744 = vmatpush1.msra.mxu0 %v743
    %v745 = vand.u32 %v105, 4294901760
    %746 = vmatprep.subr.mxu0 %v745
    %v747 = vand.u32 %v104, 4294901760
    %748 = vmatpush1.msra.mxu0 %v747
    %v749 = vand.u32 %v109, 4294901760
    %750 = vmatprep.subr.mxu0 %v749
    %v751 = vand.u32 %v108, 4294901760
    %752 = vmatpush1.msra.mxu0 %v751
    %v753 = vand.u32 %v113, 4294901760
    %754 = vmatprep.subr.mxu0 %v753
    %v755 = vand.u32 %v112, 4294901760
    %756 = vmatpush1.msra.mxu0 %v755
    %757 = vmatprep.subr.mxu0 0.0
    %758 = vmatpush1.msra.mxu0 0.0
    %759 = vmatprep.subr.mxu0 0.0
    %760 = vmatpush1.msra.mxu0 0.0
    %761 = vmatprep.subr.mxu0 0.0
    %762 = vmatpush1.msra.mxu0 0.0
    %763 = vmatprep.subr.mxu0 0.0
    %764 = vmatpush1.msra.mxu0 0.0
    %765 = vmatprep.subr.mxu0 0.0
    %766 = vmatpush1.msra.mxu0 0.0
    %767 = vmatprep.subr.mxu0 0.0
    %768 = vmatpush1.msra.mxu0 0.0
    %769 = vmatprep.subr.mxu0 0.0
    %770 = vmatpush1.msra.mxu0 0.0
    %771 = vmatprep.subr.mxu0 0.0
    %772 = vmatpush1.msra.mxu0 0.0
    %773 = vmatprep.subr.mxu0 0.0
    %774 = vmatpush1.msra.mxu0 0.0
    %775 = vmatprep.subr.mxu0 0.0
    %776 = vmatpush1.msra.mxu0 0.0
    %777 = vmatprep.subr.mxu0 0.0
    %778 = vmatpush1.msra.mxu0 0.0
    %779 = vmatprep.subr.mxu0 0.0
    %780 = vmatpush1.msra.mxu0 0.0
    %781 = vmatprep.subr.mxu0 0.0
    %782 = vmatpush1.msra.mxu0 0.0
    %783 = vmatprep.subr.mxu0 0.0
    %784 = vmatpush1.msra.mxu0 0.0
    %785 = vmatprep.subr.mxu0 0.0
    %786 = vmatpush1.msra.mxu0 0.0
    %787 = vmatprep.subr.mxu0 0.0
    %788 = vmatpush1.msra.mxu0 0.0
    %789 = vmatprep.mubr.f32.mxu0 0.0
    %v790 = vand.u32 %v48, 4294901760
    %v791 = vsub.f32 %v48, %v790
    %v792 = vand.u32 %v791, 4294901760
    %793 = vmatmul.mubr.f32.gmra.mrb[0].mxu0 %v792
    %v794 = vpop.f32.mrb[0].mxu0
    %v795 = vadd.f32 %v665, %v794
    %v796 = vpop.f32.mrb[0].mxu0
    %v797 = vadd.f32 %v667, %v796
    %798 = vmatprep.mubr.f32.mxu0 0.0
    %v799 = vand.u32 %v49, 4294901760
    %v800 = vsub.f32 %v49, %v799
    %v801 = vand.u32 %v800, 4294901760
    %802 = vmatmul.mubr.f32.gmra.mrb[0].mxu0 %v801
    %v803 = vpop.f32.mrb[0].mxu0
    %v804 = vadd.f32 %v673, %v803
    %v805 = vpop.f32.mrb[0].mxu0
    %v806 = vadd.f32 %v675, %v805
    %807 = vmatprep.mubr.f32.mxu0 0.0
    %v808 = vand.u32 %v50, 4294901760
    %v809 = vsub.f32 %v50, %v808
    %v810 = vand.u32 %v809, 4294901760
    %811 = vmatmul.mubr.f32.gmra.mrb[0].mxu0 %v810
    %v812 = vpop.f32.mrb[0].mxu0
    %v813 = vadd.f32 %v681, %v812
    %v814 = vpop.f32.mrb[0].mxu0
    %v815 = vadd.f32 %v683, %v814
    %816 = vmatprep.mubr.f32.mxu0 0.0
    %v817 = vand.u32 %v51, 4294901760
    %v818 = vsub.f32 %v51, %v817
    %v819 = vand.u32 %v818, 4294901760
    %820 = vmatmul.mubr.f32.gmra.mrb[0].mxu0 %v819
    %v821 = vpop.f32.mrb[0].mxu0
    %v822 = vadd.f32 %v689, %v821
    %v823 = vpop.f32.mrb[0].mxu0
    %v824 = vadd.f32 %v691, %v823
    %825 = vdwg.mxu0
    %v826 = vand.u32 %v53, 4294901760
    %v827 = vsub.f32 %v53, %v826
    %v828 = vand.u32 %v827, 4294901760
    %829 = vmatprep.subr.mxu0 %v828
    %v830 = vand.u32 %v52, 4294901760
    %v831 = vsub.f32 %v52, %v830
    %v832 = vand.u32 %v831, 4294901760
    %833 = vmatpush1.msra.mxu0 %v832
    %v834 = vand.u32 %v57, 4294901760
    %v835 = vsub.f32 %v57, %v834
    %v836 = vand.u32 %v835, 4294901760
    %837 = vmatprep.subr.mxu0 %v836
    %v838 = vand.u32 %v56, 4294901760
    %v839 = vsub.f32 %v56, %v838
    %v840 = vand.u32 %v839, 4294901760
    %841 = vmatpush1.msra.mxu0 %v840
    %v842 = vand.u32 %v61, 4294901760
    %v843 = vsub.f32 %v61, %v842
    %v844 = vand.u32 %v843, 4294901760
    %845 = vmatprep.subr.mxu0 %v844
    %v846 = vand.u32 %v60, 4294901760
    %v847 = vsub.f32 %v60, %v846
    %v848 = vand.u32 %v847, 4294901760
    %849 = vmatpush1.msra.mxu0 %v848
    %v850 = vand.u32 %v65, 4294901760
    %v851 = vsub.f32 %v65, %v850
    %v852 = vand.u32 %v851, 4294901760
    %853 = vmatprep.subr.mxu0 %v852
    %v854 = vand.u32 %v64, 4294901760
    %v855 = vsub.f32 %v64, %v854
    %v856 = vand.u32 %v855, 4294901760
    %857 = vmatpush1.msra.mxu0 %v856
    %v858 = vand.u32 %v69, 4294901760
    %v859 = vsub.f32 %v69, %v858
    %v860 = vand.u32 %v859, 4294901760
    %861 = vmatprep.subr.mxu0 %v860
    %v862 = vand.u32 %v68, 4294901760
    %v863 = vsub.f32 %v68, %v862
    %v864 = vand.u32 %v863, 4294901760
    %865 = vmatpush1.msra.mxu0 %v864
    %v866 = vand.u32 %v73, 4294901760
    %v867 = vsub.f32 %v73, %v866
    %v868 = vand.u32 %v867, 4294901760
    %869 = vmatprep.subr.mxu0 %v868
    %v870 = vand.u32 %v72, 4294901760
    %v871 = vsub.f32 %v72, %v870
    %v872 = vand.u32 %v871, 4294901760
    %873 = vmatpush1.msra.mxu0 %v872
    %v874 = vand.u32 %v77, 4294901760
    %v875 = vsub.f32 %v77, %v874
    %v876 = vand.u32 %v875, 4294901760
    %877 = vmatprep.subr.mxu0 %v876
    %v878 = vand.u32 %v76, 4294901760
    %v879 = vsub.f32 %v76, %v878
    %v880 = vand.u32 %v879, 4294901760
    %881 = vmatpush1.msra.mxu0 %v880
    %v882 = vand.u32 %v81, 4294901760
    %v883 = vsub.f32 %v81, %v882
    %v884 = vand.u32 %v883, 4294901760
    %885 = vmatprep.subr.mxu0 %v884
    %v886 = vand.u32 %v80, 4294901760
    %v887 = vsub.f32 %v80, %v886
    %v888 = vand.u32 %v887, 4294901760
    %889 = vmatpush1.msra.mxu0 %v888
    %v890 = vand.u32 %v85, 4294901760
    %v891 = vsub.f32 %v85, %v890
    %v892 = vand.u32 %v891, 4294901760
    %893 = vmatprep.subr.mxu0 %v892
    %v894 = vand.u32 %v84, 4294901760
    %v895 = vsub.f32 %v84, %v894
    %v896 = vand.u32 %v895, 4294901760
    %897 = vmatpush1.msra.mxu0 %v896
    %v898 = vand.u32 %v89, 4294901760
    %v899 = vsub.f32 %v89, %v898
    %v900 = vand.u32 %v899, 4294901760
    %901 = vmatprep.subr.mxu0 %v900
    %v902 = vand.u32 %v88, 4294901760
    %v903 = vsub.f32 %v88, %v902
    %v904 = vand.u32 %v903, 4294901760
    %905 = vmatpush1.msra.mxu0 %v904
    %v906 = vand.u32 %v93, 4294901760
    %v907 = vsub.f32 %v93, %v906
    %v908 = vand.u32 %v907, 4294901760
    %909 = vmatprep.subr.mxu0 %v908
    %v910 = vand.u32 %v92, 4294901760
    %v911 = vsub.f32 %v92, %v910
    %v912 = vand.u32 %v911, 4294901760
    %913 = vmatpush1.msra.mxu0 %v912
    %v914 = vand.u32 %v97, 4294901760
    %v915 = vsub.f32 %v97, %v914
    %v916 = vand.u32 %v915, 4294901760
    %917 = vmatprep.subr.mxu0 %v916
    %v918 = vand.u32 %v96, 4294901760
    %v919 = vsub.f32 %v96, %v918
    %v920 = vand.u32 %v919, 4294901760
    %921 = vmatpush1.msra.mxu0 %v920
    %v922 = vand.u32 %v101, 4294901760
    %v923 = vsub.f32 %v101, %v922
    %v924 = vand.u32 %v923, 4294901760
    %925 = vmatprep.subr.mxu0 %v924
    %v926 = vand.u32 %v100, 4294901760
    %v927 = vsub.f32 %v100, %v926
    %v928 = vand.u32 %v927, 4294901760
    %929 = vmatpush1.msra.mxu0 %v928
    %v930 = vand.u32 %v105, 4294901760
    %v931 = vsub.f32 %v105, %v930
    %v932 = vand.u32 %v931, 4294901760
    %933 = vmatprep.subr.mxu0 %v932
    %v934 = vand.u32 %v104, 4294901760
    %v935 = vsub.f32 %v104, %v934
    %v936 = vand.u32 %v935, 4294901760
    %937 = vmatpush1.msra.mxu0 %v936
    %v938 = vand.u32 %v109, 4294901760
    %v939 = vsub.f32 %v109, %v938
    %v940 = vand.u32 %v939, 4294901760
    %941 = vmatprep.subr.mxu0 %v940
    %v942 = vand.u32 %v108, 4294901760
    %v943 = vsub.f32 %v108, %v942
    %v944 = vand.u32 %v943, 4294901760
    %945 = vmatpush1.msra.mxu0 %v944
    %v946 = vand.u32 %v113, 4294901760
    %v947 = vsub.f32 %v113, %v946
    %v948 = vand.u32 %v947, 4294901760
    %949 = vmatprep.subr.mxu0 %v948
    %v950 = vand.u32 %v112, 4294901760
    %v951 = vsub.f32 %v112, %v950
    %v952 = vand.u32 %v951, 4294901760
    %953 = vmatpush1.msra.mxu0 %v952
    %954 = vmatprep.subr.mxu0 0.0
    %955 = vmatpush1.msra.mxu0 0.0
    %956 = vmatprep.subr.mxu0 0.0
    %957 = vmatpush1.msra.mxu0 0.0
    %958 = vmatprep.subr.mxu0 0.0
    %959 = vmatpush1.msra.mxu0 0.0
    %960 = vmatprep.subr.mxu0 0.0
    %961 = vmatpush1.msra.mxu0 0.0
    %962 = vmatprep.subr.mxu0 0.0
    %963 = vmatpush1.msra.mxu0 0.0
    %964 = vmatprep.subr.mxu0 0.0
    %965 = vmatpush1.msra.mxu0 0.0
    %966 = vmatprep.subr.mxu0 0.0
    %967 = vmatpush1.msra.mxu0 0.0
    %968 = vmatprep.subr.mxu0 0.0
    %969 = vmatpush1.msra.mxu0 0.0
    %970 = vmatprep.subr.mxu0 0.0
    %971 = vmatpush1.msra.mxu0 0.0
    %972 = vmatprep.subr.mxu0 0.0
    %973 = vmatpush1.msra.mxu0 0.0
    %974 = vmatprep.subr.mxu0 0.0
    %975 = vmatpush1.msra.mxu0 0.0
    %976 = vmatprep.subr.mxu0 0.0
    %977 = vmatpush1.msra.mxu0 0.0
    %978 = vmatprep.subr.mxu0 0.0
    %979 = vmatpush1.msra.mxu0 0.0
    %980 = vmatprep.subr.mxu0 0.0
    %981 = vmatpush1.msra.mxu0 0.0
    %982 = vmatprep.subr.mxu0 0.0
    %983 = vmatpush1.msra.mxu0 0.0
    %984 = vmatprep.subr.mxu0 0.0
    %985 = vmatpush1.msra.mxu0 0.0
    %986 = vmatprep.mubr.f32.mxu0 0.0
    %v987 = vand.u32 %v48, 4294901760
    %988 = vmatmul.mubr.f32.gmra.mrb[0].mxu0 %v987
    %v989 = vpop.f32.mrb[0].mxu0
    %v990 = vadd.f32 %v795, %v989
    %v991 = vpop.f32.mrb[0].mxu0
    %v992 = vadd.f32 %v797, %v991
    %993 = vmatprep.mubr.f32.mxu0 0.0
    %v994 = vand.u32 %v49, 4294901760
    %995 = vmatmul.mubr.f32.gmra.mrb[0].mxu0 %v994
    %v996 = vpop.f32.mrb[0].mxu0
    %v997 = vadd.f32 %v804, %v996
    %v998 = vpop.f32.mrb[0].mxu0
    %v999 = vadd.f32 %v806, %v998
    %1000 = vmatprep.mubr.f32.mxu0 0.0
    %v1001 = vand.u32 %v50, 4294901760
    %1002 = vmatmul.mubr.f32.gmra.mrb[0].mxu0 %v1001
    %v1003 = vpop.f32.mrb[0].mxu0
    %v1004 = vadd.f32 %v813, %v1003
    %v1005 = vpop.f32.mrb[0].mxu0
    %v1006 = vadd.f32 %v815, %v1005
    %1007 = vmatprep.mubr.f32.mxu0 0.0
    %v1008 = vand.u32 %v51, 4294901760
    %1009 = vmatmul.mubr.f32.gmra.mrb[0].mxu0 %v1008
    %v1010 = vpop.f32.mrb[0].mxu0
    %v1011 = vadd.f32 %v822, %v1010
    %v1012 = vpop.f32.mrb[0].mxu0
    %v1013 = vadd.f32 %v824, %v1012
    %1014 = vdwg.mxu0
    %v1015 = vand.u32 %v53, 4294901760
    %1016 = vmatprep.subr.mxu0 %v1015
    %v1017 = vand.u32 %v52, 4294901760
    %1018 = vmatpush1.msra.mxu0 %v1017
    %v1019 = vand.u32 %v57, 4294901760
    %1020 = vmatprep.subr.mxu0 %v1019
    %v1021 = vand.u32 %v56, 4294901760
    %1022 = vmatpush1.msra.mxu0 %v1021
    %v1023 = vand.u32 %v61, 4294901760
    %1024 = vmatprep.subr.mxu0 %v1023
    %v1025 = vand.u32 %v60, 4294901760
    %1026 = vmatpush1.msra.mxu0 %v1025
    %v1027 = vand.u32 %v65, 4294901760
    %1028 = vmatprep.subr.mxu0 %v1027
    %v1029 = vand.u32 %v64, 4294901760
    %1030 = vmatpush1.msra.mxu0 %v1029
    %v1031 = vand.u32 %v69, 4294901760
    %1032 = vmatprep.subr.mxu0 %v1031
    %v1033 = vand.u32 %v68, 4294901760
    %1034 = vmatpush1.msra.mxu0 %v1033
    %v1035 = vand.u32 %v73, 4294901760
    %1036 = vmatprep.subr.mxu0 %v1035
    %v1037 = vand.u32 %v72, 4294901760
    %1038 = vmatpush1.msra.mxu0 %v1037
    %v1039 = vand.u32 %v77, 4294901760
    %1040 = vmatprep.subr.mxu0 %v1039
    %v1041 = vand.u32 %v76, 4294901760
    %1042 = vmatpush1.msra.mxu0 %v1041
    %v1043 = vand.u32 %v81, 4294901760
    %1044 = vmatprep.subr.mxu0 %v1043
    %v1045 = vand.u32 %v80, 4294901760
    %1046 = vmatpush1.msra.mxu0 %v1045
    %v1047 = vand.u32 %v85, 4294901760
    %1048 = vmatprep.subr.mxu0 %v1047
    %v1049 = vand.u32 %v84, 4294901760
    %1050 = vmatpush1.msra.mxu0 %v1049
    %v1051 = vand.u32 %v89, 4294901760
    %1052 = vmatprep.subr.mxu0 %v1051
    %v1053 = vand.u32 %v88, 4294901760
    %1054 = vmatpush1.msra.mxu0 %v1053
    %v1055 = vand.u32 %v93, 4294901760
    %1056 = vmatprep.subr.mxu0 %v1055
    %v1057 = vand.u32 %v92, 4294901760
    %1058 = vmatpush1.msra.mxu0 %v1057
    %v1059 = vand.u32 %v97, 4294901760
    %1060 = vmatprep.subr.mxu0 %v1059
    %v1061 = vand.u32 %v96, 4294901760
    %1062 = vmatpush1.msra.mxu0 %v1061
    %v1063 = vand.u32 %v101, 4294901760
    %1064 = vmatprep.subr.mxu0 %v1063
    %v1065 = vand.u32 %v100, 4294901760
    %1066 = vmatpush1.msra.mxu0 %v1065
    %v1067 = vand.u32 %v105, 4294901760
    %1068 = vmatprep.subr.mxu0 %v1067
    %v1069 = vand.u32 %v104, 4294901760
    %1070 = vmatpush1.msra.mxu0 %v1069
    %v1071 = vand.u32 %v109, 4294901760
    %1072 = vmatprep.subr.mxu0 %v1071
    %v1073 = vand.u32 %v108, 4294901760
    %1074 = vmatpush1.msra.mxu0 %v1073
    %v1075 = vand.u32 %v113, 4294901760
    %1076 = vmatprep.subr.mxu0 %v1075
    %v1077 = vand.u32 %v112, 4294901760
    %1078 = vmatpush1.msra.mxu0 %v1077
    %1079 = vmatprep.subr.mxu0 0.0
    %1080 = vmatpush1.msra.mxu0 0.0
    %1081 = vmatprep.subr.mxu0 0.0
    %1082 = vmatpush1.msra.mxu0 0.0
    %1083 = vmatprep.subr.mxu0 0.0
    %1084 = vmatpush1.msra.mxu0 0.0
    %1085 = vmatprep.subr.mxu0 0.0
    %1086 = vmatpush1.msra.mxu0 0.0
    %1087 = vmatprep.subr.mxu0 0.0
    %1088 = vmatpush1.msra.mxu0 0.0
    %1089 = vmatprep.subr.mxu0 0.0
    %1090 = vmatpush1.msra.mxu0 0.0
    %1091 = vmatprep.subr.mxu0 0.0
    %1092 = vmatpush1.msra.mxu0 0.0
    %1093 = vmatprep.subr.mxu0 0.0
    %1094 = vmatpush1.msra.mxu0 0.0
    %1095 = vmatprep.subr.mxu0 0.0
    %1096 = vmatpush1.msra.mxu0 0.0
    %1097 = vmatprep.subr.mxu0 0.0
    %1098 = vmatpush1.msra.mxu0 0.0
    %1099 = vmatprep.subr.mxu0 0.0
    %1100 = vmatpush1.msra.mxu0 0.0
    %1101 = vmatprep.subr.mxu0 0.0
    %1102 = vmatpush1.msra.mxu0 0.0
    %1103 = vmatprep.subr.mxu0 0.0
    %1104 = vmatpush1.msra.mxu0 0.0
    %1105 = vmatprep.subr.mxu0 0.0
    %1106 = vmatpush1.msra.mxu0 0.0
    %1107 = vmatprep.subr.mxu0 0.0
    %1108 = vmatpush1.msra.mxu0 0.0
    %1109 = vmatprep.subr.mxu0 0.0
    %1110 = vmatpush1.msra.mxu0 0.0
    %1111 = vmatprep.mubr.f32.mxu0 0.0
    %v1112 = vand.u32 %v48, 4294901760
    %1113 = vmatmul.mubr.f32.gmra.mrb[0].mxu0 %v1112
    %v1114 = vpop.f32.mrb[0].mxu0
    %v1115 = vadd.f32 %v990, %v1114
    %v1116 = vpop.f32.mrb[0].mxu0
    %v1117 = vadd.f32 %v992, %v1116
    %1118 = vmatprep.mubr.f32.mxu0 0.0
    %v1119 = vand.u32 %v49, 4294901760
    %1120 = vmatmul.mubr.f32.gmra.mrb[0].mxu0 %v1119
    %v1121 = vpop.f32.mrb[0].mxu0
    %v1122 = vadd.f32 %v997, %v1121
    %v1123 = vpop.f32.mrb[0].mxu0
    %v1124 = vadd.f32 %v999, %v1123
    %1125 = vmatprep.mubr.f32.mxu0 0.0
    %v1126 = vand.u32 %v50, 4294901760
    %1127 = vmatmul.mubr.f32.gmra.mrb[0].mxu0 %v1126
    %v1128 = vpop.f32.mrb[0].mxu0
    %v1129 = vadd.f32 %v1004, %v1128
    %v1130 = vpop.f32.mrb[0].mxu0
    %v1131 = vadd.f32 %v1006, %v1130
    %1132 = vmatprep.mubr.f32.mxu0 0.0
    %v1133 = vand.u32 %v51, 4294901760
    %1134 = vmatmul.mubr.f32.gmra.mrb[0].mxu0 %v1133
    %v1135 = vpop.f32.mrb[0].mxu0
    %v1136 = vadd.f32 %v1011, %v1135
    %v1137 = vpop.f32.mrb[0].mxu0
    %v1138 = vadd.f32 %v1013, %v1137
    %1139 = vdwg.mxu0
    %v1140 = vand.u32 %v55, 4294901760
    %1141 = vmatprep.subr.mxu0 %v1140
    %v1142 = vand.u32 %v54, 4294901760
    %1143 = vmatpush1.msra.mxu0 %v1142
    %v1144 = vand.u32 %v59, 4294901760
    %1145 = vmatprep.subr.mxu0 %v1144
    %v1146 = vand.u32 %v58, 4294901760
    %1147 = vmatpush1.msra.mxu0 %v1146
    %v1148 = vand.u32 %v63, 4294901760
    %1149 = vmatprep.subr.mxu0 %v1148
    %v1150 = vand.u32 %v62, 4294901760
    %1151 = vmatpush1.msra.mxu0 %v1150
    %v1152 = vand.u32 %v67, 4294901760
    %1153 = vmatprep.subr.mxu0 %v1152
    %v1154 = vand.u32 %v66, 4294901760
    %1155 = vmatpush1.msra.mxu0 %v1154
    %v1156 = vand.u32 %v71, 4294901760
    %1157 = vmatprep.subr.mxu0 %v1156
    %v1158 = vand.u32 %v70, 4294901760
    %1159 = vmatpush1.msra.mxu0 %v1158
    %v1160 = vand.u32 %v75, 4294901760
    %1161 = vmatprep.subr.mxu0 %v1160
    %v1162 = vand.u32 %v74, 4294901760
    %1163 = vmatpush1.msra.mxu0 %v1162
    %v1164 = vand.u32 %v79, 4294901760
    %1165 = vmatprep.subr.mxu0 %v1164
    %v1166 = vand.u32 %v78, 4294901760
    %1167 = vmatpush1.msra.mxu0 %v1166
    %v1168 = vand.u32 %v83, 4294901760
    %1169 = vmatprep.subr.mxu0 %v1168
    %v1170 = vand.u32 %v82, 4294901760
    %1171 = vmatpush1.msra.mxu0 %v1170
    %v1172 = vand.u32 %v87, 4294901760
    %1173 = vmatprep.subr.mxu0 %v1172
    %v1174 = vand.u32 %v86, 4294901760
    %1175 = vmatpush1.msra.mxu0 %v1174
    %v1176 = vand.u32 %v91, 4294901760
    %1177 = vmatprep.subr.mxu0 %v1176
    %v1178 = vand.u32 %v90, 4294901760
    %1179 = vmatpush1.msra.mxu0 %v1178
    %v1180 = vand.u32 %v95, 4294901760
    %1181 = vmatprep.subr.mxu0 %v1180
    %v1182 = vand.u32 %v94, 4294901760
    %1183 = vmatpush1.msra.mxu0 %v1182
    %v1184 = vand.u32 %v99, 4294901760
    %1185 = vmatprep.subr.mxu0 %v1184
    %v1186 = vand.u32 %v98, 4294901760
    %1187 = vmatpush1.msra.mxu0 %v1186
    %v1188 = vand.u32 %v103, 4294901760
    %1189 = vmatprep.subr.mxu0 %v1188
    %v1190 = vand.u32 %v102, 4294901760
    %1191 = vmatpush1.msra.mxu0 %v1190
    %v1192 = vand.u32 %v107, 4294901760
    %1193 = vmatprep.subr.mxu0 %v1192
    %v1194 = vand.u32 %v106, 4294901760
    %1195 = vmatpush1.msra.mxu0 %v1194
    %v1196 = vand.u32 %v111, 4294901760
    %1197 = vmatprep.subr.mxu0 %v1196
    %v1198 = vand.u32 %v110, 4294901760
    %1199 = vmatpush1.msra.mxu0 %v1198
    %v1200 = vand.u32 %v115, 4294901760
    %1201 = vmatprep.subr.mxu0 %v1200
    %v1202 = vand.u32 %v114, 4294901760
    %1203 = vmatpush1.msra.mxu0 %v1202
    %1204 = vmatprep.subr.mxu0 0.0
    %1205 = vmatpush1.msra.mxu0 0.0
    %1206 = vmatprep.subr.mxu0 0.0
    %1207 = vmatpush1.msra.mxu0 0.0
    %1208 = vmatprep.subr.mxu0 0.0
    %1209 = vmatpush1.msra.mxu0 0.0
    %1210 = vmatprep.subr.mxu0 0.0
    %1211 = vmatpush1.msra.mxu0 0.0
    %1212 = vmatprep.subr.mxu0 0.0
    %1213 = vmatpush1.msra.mxu0 0.0
    %1214 = vmatprep.subr.mxu0 0.0
    %1215 = vmatpush1.msra.mxu0 0.0
    %1216 = vmatprep.subr.mxu0 0.0
    %1217 = vmatpush1.msra.mxu0 0.0
    %1218 = vmatprep.subr.mxu0 0.0
    %1219 = vmatpush1.msra.mxu0 0.0
    %1220 = vmatprep.subr.mxu0 0.0
    %1221 = vmatpush1.msra.mxu0 0.0
    %1222 = vmatprep.subr.mxu0 0.0
    %1223 = vmatpush1.msra.mxu0 0.0
    %1224 = vmatprep.subr.mxu0 0.0
    %1225 = vmatpush1.msra.mxu0 0.0
    %1226 = vmatprep.subr.mxu0 0.0
    %1227 = vmatpush1.msra.mxu0 0.0
    %1228 = vmatprep.subr.mxu0 0.0
    %1229 = vmatpush1.msra.mxu0 0.0
    %1230 = vmatprep.subr.mxu0 0.0
    %1231 = vmatpush1.msra.mxu0 0.0
    %1232 = vmatprep.subr.mxu0 0.0
    %1233 = vmatpush1.msra.mxu0 0.0
    %1234 = vmatprep.subr.mxu0 0.0
    %1235 = vmatpush1.msra.mxu0 0.0
    %1236 = vmatprep.mubr.f32.mxu0 0.0
    %v1237 = vand.u32 %v48, 4294901760
    %v1238 = vsub.f32 %v48, %v1237
    %v1239 = vand.u32 %v1238, 4294901760
    %v1240 = vsub.f32 %v1238, %v1239
    %v1241 = vand.u32 %v1240, 4294901760
    %1242 = vmatmul.mubr.f32.gmra.mrb[0].mxu0 %v1241
    %v1243 = vpop.f32.mrb[0].mxu0
    %v1244 = vadd.f32 %v129, %v1243
    %v1245 = vpop.f32.mrb[0].mxu0
    %v1246 = vadd.f32 %v133, %v1245
    %1247 = vmatprep.mubr.f32.mxu0 0.0
    %v1248 = vand.u32 %v49, 4294901760
    %v1249 = vsub.f32 %v49, %v1248
    %v1250 = vand.u32 %v1249, 4294901760
    %v1251 = vsub.f32 %v1249, %v1250
    %v1252 = vand.u32 %v1251, 4294901760
    %1253 = vmatmul.mubr.f32.gmra.mrb[0].mxu0 %v1252
    %v1254 = vpop.f32.mrb[0].mxu0
    %v1255 = vadd.f32 %v129, %v1254
    %v1256 = vpop.f32.mrb[0].mxu0
    %v1257 = vadd.f32 %v133, %v1256
    %1258 = vmatprep.mubr.f32.mxu0 0.0
    %v1259 = vand.u32 %v50, 4294901760
    %v1260 = vsub.f32 %v50, %v1259
    %v1261 = vand.u32 %v1260, 4294901760
    %v1262 = vsub.f32 %v1260, %v1261
    %v1263 = vand.u32 %v1262, 4294901760
    %1264 = vmatmul.mubr.f32.gmra.mrb[0].mxu0 %v1263
    %v1265 = vpop.f32.mrb[0].mxu0
    %v1266 = vadd.f32 %v129, %v1265
    %v1267 = vpop.f32.mrb[0].mxu0
    %v1268 = vadd.f32 %v133, %v1267
    %1269 = vmatprep.mubr.f32.mxu0 0.0
    %v1270 = vand.u32 %v51, 4294901760
    %v1271 = vsub.f32 %v51, %v1270
    %v1272 = vand.u32 %v1271, 4294901760
    %v1273 = vsub.f32 %v1271, %v1272
    %v1274 = vand.u32 %v1273, 4294901760
    %1275 = vmatmul.mubr.f32.gmra.mrb[0].mxu0 %v1274
    %v1276 = vpop.f32.mrb[0].mxu0
    %v1277 = vadd.f32 %v129, %v1276
    %v1278 = vpop.f32.mrb[0].mxu0
    %v1279 = vadd.f32 %v133, %v1278
    %1280 = vdwg.mxu0
    %v1281 = vand.u32 %v55, 4294901760
    %v1282 = vsub.f32 %v55, %v1281
    %v1283 = vand.u32 %v1282, 4294901760
    %v1284 = vsub.f32 %v1282, %v1283
    %v1285 = vand.u32 %v1284, 4294901760
    %1286 = vmatprep.subr.mxu0 %v1285
    %v1287 = vand.u32 %v54, 4294901760
    %v1288 = vsub.f32 %v54, %v1287
    %v1289 = vand.u32 %v1288, 4294901760
    %v1290 = vsub.f32 %v1288, %v1289
    %v1291 = vand.u32 %v1290, 4294901760
    %1292 = vmatpush1.msra.mxu0 %v1291
    %v1293 = vand.u32 %v59, 4294901760
    %v1294 = vsub.f32 %v59, %v1293
    %v1295 = vand.u32 %v1294, 4294901760
    %v1296 = vsub.f32 %v1294, %v1295
    %v1297 = vand.u32 %v1296, 4294901760
    %1298 = vmatprep.subr.mxu0 %v1297
    %v1299 = vand.u32 %v58, 4294901760
    %v1300 = vsub.f32 %v58, %v1299
    %v1301 = vand.u32 %v1300, 4294901760
    %v1302 = vsub.f32 %v1300, %v1301
    %v1303 = vand.u32 %v1302, 4294901760
    %1304 = vmatpush1.msra.mxu0 %v1303
    %v1305 = vand.u32 %v63, 4294901760
    %v1306 = vsub.f32 %v63, %v1305
    %v1307 = vand.u32 %v1306, 4294901760
    %v1308 = vsub.f32 %v1306, %v1307
    %v1309 = vand.u32 %v1308, 4294901760
    %1310 = vmatprep.subr.mxu0 %v1309
    %v1311 = vand.u32 %v62, 4294901760
    %v1312 = vsub.f32 %v62, %v1311
    %v1313 = vand.u32 %v1312, 4294901760
    %v1314 = vsub.f32 %v1312, %v1313
    %v1315 = vand.u32 %v1314, 4294901760
    %1316 = vmatpush1.msra.mxu0 %v1315
    %v1317 = vand.u32 %v67, 4294901760
    %v1318 = vsub.f32 %v67, %v1317
    %v1319 = vand.u32 %v1318, 4294901760
    %v1320 = vsub.f32 %v1318, %v1319
    %v1321 = vand.u32 %v1320, 4294901760
    %1322 = vmatprep.subr.mxu0 %v1321
    %v1323 = vand.u32 %v66, 4294901760
    %v1324 = vsub.f32 %v66, %v1323
    %v1325 = vand.u32 %v1324, 4294901760
    %v1326 = vsub.f32 %v1324, %v1325
    %v1327 = vand.u32 %v1326, 4294901760
    %1328 = vmatpush1.msra.mxu0 %v1327
    %v1329 = vand.u32 %v71, 4294901760
    %v1330 = vsub.f32 %v71, %v1329
    %v1331 = vand.u32 %v1330, 4294901760
    %v1332 = vsub.f32 %v1330, %v1331
    %v1333 = vand.u32 %v1332, 4294901760
    %1334 = vmatprep.subr.mxu0 %v1333
    %v1335 = vand.u32 %v70, 4294901760
    %v1336 = vsub.f32 %v70, %v1335
    %v1337 = vand.u32 %v1336, 4294901760
    %v1338 = vsub.f32 %v1336, %v1337
    %v1339 = vand.u32 %v1338, 4294901760
    %1340 = vmatpush1.msra.mxu0 %v1339
    %v1341 = vand.u32 %v75, 4294901760
    %v1342 = vsub.f32 %v75, %v1341
    %v1343 = vand.u32 %v1342, 4294901760
    %v1344 = vsub.f32 %v1342, %v1343
    %v1345 = vand.u32 %v1344, 4294901760
    %1346 = vmatprep.subr.mxu0 %v1345
    %v1347 = vand.u32 %v74, 4294901760
    %v1348 = vsub.f32 %v74, %v1347
    %v1349 = vand.u32 %v1348, 4294901760
    %v1350 = vsub.f32 %v1348, %v1349
    %v1351 = vand.u32 %v1350, 4294901760
    %1352 = vmatpush1.msra.mxu0 %v1351
    %v1353 = vand.u32 %v79, 4294901760
    %v1354 = vsub.f32 %v79, %v1353
    %v1355 = vand.u32 %v1354, 4294901760
    %v1356 = vsub.f32 %v1354, %v1355
    %v1357 = vand.u32 %v1356, 4294901760
    %1358 = vmatprep.subr.mxu0 %v1357
    %v1359 = vand.u32 %v78, 4294901760
    %v1360 = vsub.f32 %v78, %v1359
    %v1361 = vand.u32 %v1360, 4294901760
    %v1362 = vsub.f32 %v1360, %v1361
    %v1363 = vand.u32 %v1362, 4294901760
    %1364 = vmatpush1.msra.mxu0 %v1363
    %v1365 = vand.u32 %v83, 4294901760
    %v1366 = vsub.f32 %v83, %v1365
    %v1367 = vand.u32 %v1366, 4294901760
    %v1368 = vsub.f32 %v1366, %v1367
    %v1369 = vand.u32 %v1368, 4294901760
    %1370 = vmatprep.subr.mxu0 %v1369
    %v1371 = vand.u32 %v82, 4294901760
    %v1372 = vsub.f32 %v82, %v1371
    %v1373 = vand.u32 %v1372, 4294901760
    %v1374 = vsub.f32 %v1372, %v1373
    %v1375 = vand.u32 %v1374, 4294901760
    %1376 = vmatpush1.msra.mxu0 %v1375
    %v1377 = vand.u32 %v87, 4294901760
    %v1378 = vsub.f32 %v87, %v1377
    %v1379 = vand.u32 %v1378, 4294901760
    %v1380 = vsub.f32 %v1378, %v1379
    %v1381 = vand.u32 %v1380, 4294901760
    %1382 = vmatprep.subr.mxu0 %v1381
    %v1383 = vand.u32 %v86, 4294901760
    %v1384 = vsub.f32 %v86, %v1383
    %v1385 = vand.u32 %v1384, 4294901760
    %v1386 = vsub.f32 %v1384, %v1385
    %v1387 = vand.u32 %v1386, 4294901760
    %1388 = vmatpush1.msra.mxu0 %v1387
    %v1389 = vand.u32 %v91, 4294901760
    %v1390 = vsub.f32 %v91, %v1389
    %v1391 = vand.u32 %v1390, 4294901760
    %v1392 = vsub.f32 %v1390, %v1391
    %v1393 = vand.u32 %v1392, 4294901760
    %1394 = vmatprep.subr.mxu0 %v1393
    %v1395 = vand.u32 %v90, 4294901760
    %v1396 = vsub.f32 %v90, %v1395
    %v1397 = vand.u32 %v1396, 4294901760
    %v1398 = vsub.f32 %v1396, %v1397
    %v1399 = vand.u32 %v1398, 4294901760
    %1400 = vmatpush1.msra.mxu0 %v1399
    %v1401 = vand.u32 %v95, 4294901760
    %v1402 = vsub.f32 %v95, %v1401
    %v1403 = vand.u32 %v1402, 4294901760
    %v1404 = vsub.f32 %v1402, %v1403
    %v1405 = vand.u32 %v1404, 4294901760
    %1406 = vmatprep.subr.mxu0 %v1405
    %v1407 = vand.u32 %v94, 4294901760
    %v1408 = vsub.f32 %v94, %v1407
    %v1409 = vand.u32 %v1408, 4294901760
    %v1410 = vsub.f32 %v1408, %v1409
    %v1411 = vand.u32 %v1410, 4294901760
    %1412 = vmatpush1.msra.mxu0 %v1411
    %v1413 = vand.u32 %v99, 4294901760
    %v1414 = vsub.f32 %v99, %v1413
    %v1415 = vand.u32 %v1414, 4294901760
    %v1416 = vsub.f32 %v1414, %v1415
    %v1417 = vand.u32 %v1416, 4294901760
    %1418 = vmatprep.subr.mxu0 %v1417
    %v1419 = vand.u32 %v98, 4294901760
    %v1420 = vsub.f32 %v98, %v1419
    %v1421 = vand.u32 %v1420, 4294901760
    %v1422 = vsub.f32 %v1420, %v1421
    %v1423 = vand.u32 %v1422, 4294901760
    %1424 = vmatpush1.msra.mxu0 %v1423
    %v1425 = vand.u32 %v103, 4294901760
    %v1426 = vsub.f32 %v103, %v1425
    %v1427 = vand.u32 %v1426, 4294901760
    %v1428 = vsub.f32 %v1426, %v1427
    %v1429 = vand.u32 %v1428, 4294901760
    %1430 = vmatprep.subr.mxu0 %v1429
    %v1431 = vand.u32 %v102, 4294901760
    %v1432 = vsub.f32 %v102, %v1431
    %v1433 = vand.u32 %v1432, 4294901760
    %v1434 = vsub.f32 %v1432, %v1433
    %v1435 = vand.u32 %v1434, 4294901760
    %1436 = vmatpush1.msra.mxu0 %v1435
    %v1437 = vand.u32 %v107, 4294901760
    %v1438 = vsub.f32 %v107, %v1437
    %v1439 = vand.u32 %v1438, 4294901760
    %v1440 = vsub.f32 %v1438, %v1439
    %v1441 = vand.u32 %v1440, 4294901760
    %1442 = vmatprep.subr.mxu0 %v1441
    %v1443 = vand.u32 %v106, 4294901760
    %v1444 = vsub.f32 %v106, %v1443
    %v1445 = vand.u32 %v1444, 4294901760
    %v1446 = vsub.f32 %v1444, %v1445
    %v1447 = vand.u32 %v1446, 4294901760
    %1448 = vmatpush1.msra.mxu0 %v1447
    %v1449 = vand.u32 %v111, 4294901760
    %v1450 = vsub.f32 %v111, %v1449
    %v1451 = vand.u32 %v1450, 4294901760
    %v1452 = vsub.f32 %v1450, %v1451
    %v1453 = vand.u32 %v1452, 4294901760
    %1454 = vmatprep.subr.mxu0 %v1453
    %v1455 = vand.u32 %v110, 4294901760
    %v1456 = vsub.f32 %v110, %v1455
    %v1457 = vand.u32 %v1456, 4294901760
    %v1458 = vsub.f32 %v1456, %v1457
    %v1459 = vand.u32 %v1458, 4294901760
    %1460 = vmatpush1.msra.mxu0 %v1459
    %v1461 = vand.u32 %v115, 4294901760
    %v1462 = vsub.f32 %v115, %v1461
    %v1463 = vand.u32 %v1462, 4294901760
    %v1464 = vsub.f32 %v1462, %v1463
    %v1465 = vand.u32 %v1464, 4294901760
    %1466 = vmatprep.subr.mxu0 %v1465
    %v1467 = vand.u32 %v114, 4294901760
    %v1468 = vsub.f32 %v114, %v1467
    %v1469 = vand.u32 %v1468, 4294901760
    %v1470 = vsub.f32 %v1468, %v1469
    %v1471 = vand.u32 %v1470, 4294901760
    %1472 = vmatpush1.msra.mxu0 %v1471
    %1473 = vmatprep.subr.mxu0 0.0
    %1474 = vmatpush1.msra.mxu0 0.0
    %1475 = vmatprep.subr.mxu0 0.0
    %1476 = vmatpush1.msra.mxu0 0.0
    %1477 = vmatprep.subr.mxu0 0.0
    %1478 = vmatpush1.msra.mxu0 0.0
    %1479 = vmatprep.subr.mxu0 0.0
    %1480 = vmatpush1.msra.mxu0 0.0
    %1481 = vmatprep.subr.mxu0 0.0
    %1482 = vmatpush1.msra.mxu0 0.0
    %1483 = vmatprep.subr.mxu0 0.0
    %1484 = vmatpush1.msra.mxu0 0.0
    %1485 = vmatprep.subr.mxu0 0.0
    %1486 = vmatpush1.msra.mxu0 0.0
    %1487 = vmatprep.subr.mxu0 0.0
    %1488 = vmatpush1.msra.mxu0 0.0
    %1489 = vmatprep.subr.mxu0 0.0
    %1490 = vmatpush1.msra.mxu0 0.0
    %1491 = vmatprep.subr.mxu0 0.0
    %1492 = vmatpush1.msra.mxu0 0.0
    %1493 = vmatprep.subr.mxu0 0.0
    %1494 = vmatpush1.msra.mxu0 0.0
    %1495 = vmatprep.subr.mxu0 0.0
    %1496 = vmatpush1.msra.mxu0 0.0
    %1497 = vmatprep.subr.mxu0 0.0
    %1498 = vmatpush1.msra.mxu0 0.0
    %1499 = vmatprep.subr.mxu0 0.0
    %1500 = vmatpush1.msra.mxu0 0.0
    %1501 = vmatprep.subr.mxu0 0.0
    %1502 = vmatpush1.msra.mxu0 0.0
    %1503 = vmatprep.subr.mxu0 0.0
    %1504 = vmatpush1.msra.mxu0 0.0
    %1505 = vmatprep.mubr.f32.mxu0 0.0
    %v1506 = vand.u32 %v48, 4294901760
    %1507 = vmatmul.mubr.f32.gmra.mrb[0].mxu0 %v1506
    %v1508 = vpop.f32.mrb[0].mxu0
    %v1509 = vadd.f32 %v1244, %v1508
    %v1510 = vpop.f32.mrb[0].mxu0
    %v1511 = vadd.f32 %v1246, %v1510
    %1512 = vmatprep.mubr.f32.mxu0 0.0
    %v1513 = vand.u32 %v49, 4294901760
    %1514 = vmatmul.mubr.f32.gmra.mrb[0].mxu0 %v1513
    %v1515 = vpop.f32.mrb[0].mxu0
    %v1516 = vadd.f32 %v1255, %v1515
    %v1517 = vpop.f32.mrb[0].mxu0
    %v1518 = vadd.f32 %v1257, %v1517
    %1519 = vmatprep.mubr.f32.mxu0 0.0
    %v1520 = vand.u32 %v50, 4294901760
    %1521 = vmatmul.mubr.f32.gmra.mrb[0].mxu0 %v1520
    %v1522 = vpop.f32.mrb[0].mxu0
    %v1523 = vadd.f32 %v1266, %v1522
    %v1524 = vpop.f32.mrb[0].mxu0
    %v1525 = vadd.f32 %v1268, %v1524
    %1526 = vmatprep.mubr.f32.mxu0 0.0
    %v1527 = vand.u32 %v51, 4294901760
    %1528 = vmatmul.mubr.f32.gmra.mrb[0].mxu0 %v1527
    %v1529 = vpop.f32.mrb[0].mxu0
    %v1530 = vadd.f32 %v1277, %v1529
    %v1531 = vpop.f32.mrb[0].mxu0
    %v1532 = vadd.f32 %v1279, %v1531
    %1533 = vdwg.mxu0
    %v1534 = vand.u32 %v55, 4294901760
    %v1535 = vsub.f32 %v55, %v1534
    %1536 = vmatprep.subr.mxu0 %v1535
    %v1537 = vand.u32 %v54, 4294901760
    %v1538 = vsub.f32 %v54, %v1537
    %1539 = vmatpush1.msra.mxu0 %v1538
    %v1540 = vand.u32 %v59, 4294901760
    %v1541 = vsub.f32 %v59, %v1540
    %1542 = vmatprep.subr.mxu0 %v1541
    %v1543 = vand.u32 %v58, 4294901760
    %v1544 = vsub.f32 %v58, %v1543
    %1545 = vmatpush1.msra.mxu0 %v1544
    %v1546 = vand.u32 %v63, 4294901760
    %v1547 = vsub.f32 %v63, %v1546
    %1548 = vmatprep.subr.mxu0 %v1547
    %v1549 = vand.u32 %v62, 4294901760
    %v1550 = vsub.f32 %v62, %v1549
    %1551 = vmatpush1.msra.mxu0 %v1550
    %v1552 = vand.u32 %v67, 4294901760
    %v1553 = vsub.f32 %v67, %v1552
    %1554 = vmatprep.subr.mxu0 %v1553
    %v1555 = vand.u32 %v66, 4294901760
    %v1556 = vsub.f32 %v66, %v1555
    %1557 = vmatpush1.msra.mxu0 %v1556
    %v1558 = vand.u32 %v71, 4294901760
    %v1559 = vsub.f32 %v71, %v1558
    %1560 = vmatprep.subr.mxu0 %v1559
    %v1561 = vand.u32 %v70, 4294901760
    %v1562 = vsub.f32 %v70, %v1561
    %1563 = vmatpush1.msra.mxu0 %v1562
    %v1564 = vand.u32 %v75, 4294901760
    %v1565 = vsub.f32 %v75, %v1564
    %1566 = vmatprep.subr.mxu0 %v1565
    %v1567 = vand.u32 %v74, 4294901760
    %v1568 = vsub.f32 %v74, %v1567
    %1569 = vmatpush1.msra.mxu0 %v1568
    %v1570 = vand.u32 %v79, 4294901760
    %v1571 = vsub.f32 %v79, %v1570
    %1572 = vmatprep.subr.mxu0 %v1571
    %v1573 = vand.u32 %v78, 4294901760
    %v1574 = vsub.f32 %v78, %v1573
    %1575 = vmatpush1.msra.mxu0 %v1574
    %v1576 = vand.u32 %v83, 4294901760
    %v1577 = vsub.f32 %v83, %v1576
    %1578 = vmatprep.subr.mxu0 %v1577
    %v1579 = vand.u32 %v82, 4294901760
    %v1580 = vsub.f32 %v82, %v1579
    %1581 = vmatpush1.msra.mxu0 %v1580
    %v1582 = vand.u32 %v87, 4294901760
    %v1583 = vsub.f32 %v87, %v1582
    %1584 = vmatprep.subr.mxu0 %v1583
    %v1585 = vand.u32 %v86, 4294901760
    %v1586 = vsub.f32 %v86, %v1585
    %1587 = vmatpush1.msra.mxu0 %v1586
    %v1588 = vand.u32 %v91, 4294901760
    %v1589 = vsub.f32 %v91, %v1588
    %1590 = vmatprep.subr.mxu0 %v1589
    %v1591 = vand.u32 %v90, 4294901760
    %v1592 = vsub.f32 %v90, %v1591
    %1593 = vmatpush1.msra.mxu0 %v1592
    %v1594 = vand.u32 %v95, 4294901760
    %v1595 = vsub.f32 %v95, %v1594
    %1596 = vmatprep.subr.mxu0 %v1595
    %v1597 = vand.u32 %v94, 4294901760
    %v1598 = vsub.f32 %v94, %v1597
    %1599 = vmatpush1.msra.mxu0 %v1598
    %v1600 = vand.u32 %v99, 4294901760
    %v1601 = vsub.f32 %v99, %v1600
    %1602 = vmatprep.subr.mxu0 %v1601
    %v1603 = vand.u32 %v98, 4294901760
    %v1604 = vsub.f32 %v98, %v1603
    %1605 = vmatpush1.msra.mxu0 %v1604
    %v1606 = vand.u32 %v103, 4294901760
    %v1607 = vsub.f32 %v103, %v1606
    %1608 = vmatprep.subr.mxu0 %v1607
    %v1609 = vand.u32 %v102, 4294901760
    %v1610 = vsub.f32 %v102, %v1609
    %1611 = vmatpush1.msra.mxu0 %v1610
    %v1612 = vand.u32 %v107, 4294901760
    %v1613 = vsub.f32 %v107, %v1612
    %1614 = vmatprep.subr.mxu0 %v1613
    %v1615 = vand.u32 %v106, 4294901760
    %v1616 = vsub.f32 %v106, %v1615
    %1617 = vmatpush1.msra.mxu0 %v1616
    %v1618 = vand.u32 %v111, 4294901760
    %v1619 = vsub.f32 %v111, %v1618
    %1620 = vmatprep.subr.mxu0 %v1619
    %v1621 = vand.u32 %v110, 4294901760
    %v1622 = vsub.f32 %v110, %v1621
    %1623 = vmatpush1.msra.mxu0 %v1622
    %v1624 = vand.u32 %v115, 4294901760
    %v1625 = vsub.f32 %v115, %v1624
    %1626 = vmatprep.subr.mxu0 %v1625
    %v1627 = vand.u32 %v114, 4294901760
    %v1628 = vsub.f32 %v114, %v1627
    %1629 = vmatpush1.msra.mxu0 %v1628
    %1630 = vmatprep.subr.mxu0 0.0
    %1631 = vmatpush1.msra.mxu0 0.0
    %1632 = vmatprep.subr.mxu0 0.0
    %1633 = vmatpush1.msra.mxu0 0.0
    %1634 = vmatprep.subr.mxu0 0.0
    %1635 = vmatpush1.msra.mxu0 0.0
    %1636 = vmatprep.subr.mxu0 0.0
    %1637 = vmatpush1.msra.mxu0 0.0
    %1638 = vmatprep.subr.mxu0 0.0
    %1639 = vmatpush1.msra.mxu0 0.0
    %1640 = vmatprep.subr.mxu0 0.0
    %1641 = vmatpush1.msra.mxu0 0.0
    %1642 = vmatprep.subr.mxu0 0.0
    %1643 = vmatpush1.msra.mxu0 0.0
    %1644 = vmatprep.subr.mxu0 0.0
    %1645 = vmatpush1.msra.mxu0 0.0
    %1646 = vmatprep.subr.mxu0 0.0
    %1647 = vmatpush1.msra.mxu0 0.0
    %1648 = vmatprep.subr.mxu0 0.0
    %1649 = vmatpush1.msra.mxu0 0.0
    %1650 = vmatprep.subr.mxu0 0.0
    %1651 = vmatpush1.msra.mxu0 0.0
    %1652 = vmatprep.subr.mxu0 0.0
    %1653 = vmatpush1.msra.mxu0 0.0
    %1654 = vmatprep.subr.mxu0 0.0
    %1655 = vmatpush1.msra.mxu0 0.0
    %1656 = vmatprep.subr.mxu0 0.0
    %1657 = vmatpush1.msra.mxu0 0.0
    %1658 = vmatprep.subr.mxu0 0.0
    %1659 = vmatpush1.msra.mxu0 0.0
    %1660 = vmatprep.subr.mxu0 0.0
    %1661 = vmatpush1.msra.mxu0 0.0
    %1662 = vmatprep.mubr.f32.mxu0 0.0
    %v1663 = vand.u32 %v48, 4294901760
    %v1664 = vsub.f32 %v48, %v1663
    %1665 = vmatmul.mubr.f32.gmra.mrb[0].mxu0 %v1664
    %v1666 = vpop.f32.mrb[0].mxu0
    %v1667 = vadd.f32 %v1509, %v1666
    %v1668 = vpop.f32.mrb[0].mxu0
    %v1669 = vadd.f32 %v1511, %v1668
    %1670 = vmatprep.mubr.f32.mxu0 0.0
    %v1671 = vand.u32 %v49, 4294901760
    %v1672 = vsub.f32 %v49, %v1671
    %1673 = vmatmul.mubr.f32.gmra.mrb[0].mxu0 %v1672
    %v1674 = vpop.f32.mrb[0].mxu0
    %v1675 = vadd.f32 %v1516, %v1674
    %v1676 = vpop.f32.mrb[0].mxu0
    %v1677 = vadd.f32 %v1518, %v1676
    %1678 = vmatprep.mubr.f32.mxu0 0.0
    %v1679 = vand.u32 %v50, 4294901760
    %v1680 = vsub.f32 %v50, %v1679
    %1681 = vmatmul.mubr.f32.gmra.mrb[0].mxu0 %v1680
    %v1682 = vpop.f32.mrb[0].mxu0
    %v1683 = vadd.f32 %v1523, %v1682
    %v1684 = vpop.f32.mrb[0].mxu0
    %v1685 = vadd.f32 %v1525, %v1684
    %1686 = vmatprep.mubr.f32.mxu0 0.0
    %v1687 = vand.u32 %v51, 4294901760
    %v1688 = vsub.f32 %v51, %v1687
    %1689 = vmatmul.mubr.f32.gmra.mrb[0].mxu0 %v1688
    %v1690 = vpop.f32.mrb[0].mxu0
    %v1691 = vadd.f32 %v1530, %v1690
    %v1692 = vpop.f32.mrb[0].mxu0
    %v1693 = vadd.f32 %v1532, %v1692
    %1694 = vdwg.mxu0
    %v1695 = vand.u32 %v55, 4294901760
    %1696 = vmatprep.subr.mxu0 %v1695
    %v1697 = vand.u32 %v54, 4294901760
    %1698 = vmatpush1.msra.mxu0 %v1697
    %v1699 = vand.u32 %v59, 4294901760
    %1700 = vmatprep.subr.mxu0 %v1699
    %v1701 = vand.u32 %v58, 4294901760
    %1702 = vmatpush1.msra.mxu0 %v1701
    %v1703 = vand.u32 %v63, 4294901760
    %1704 = vmatprep.subr.mxu0 %v1703
    %v1705 = vand.u32 %v62, 4294901760
    %1706 = vmatpush1.msra.mxu0 %v1705
    %v1707 = vand.u32 %v67, 4294901760
    %1708 = vmatprep.subr.mxu0 %v1707
    %v1709 = vand.u32 %v66, 4294901760
    %1710 = vmatpush1.msra.mxu0 %v1709
    %v1711 = vand.u32 %v71, 4294901760
    %1712 = vmatprep.subr.mxu0 %v1711
    %v1713 = vand.u32 %v70, 4294901760
    %1714 = vmatpush1.msra.mxu0 %v1713
    %v1715 = vand.u32 %v75, 4294901760
    %1716 = vmatprep.subr.mxu0 %v1715
    %v1717 = vand.u32 %v74, 4294901760
    %1718 = vmatpush1.msra.mxu0 %v1717
    %v1719 = vand.u32 %v79, 4294901760
    %1720 = vmatprep.subr.mxu0 %v1719
    %v1721 = vand.u32 %v78, 4294901760
    %1722 = vmatpush1.msra.mxu0 %v1721
    %v1723 = vand.u32 %v83, 4294901760
    %1724 = vmatprep.subr.mxu0 %v1723
    %v1725 = vand.u32 %v82, 4294901760
    %1726 = vmatpush1.msra.mxu0 %v1725
    %v1727 = vand.u32 %v87, 4294901760
    %1728 = vmatprep.subr.mxu0 %v1727
    %v1729 = vand.u32 %v86, 4294901760
    %1730 = vmatpush1.msra.mxu0 %v1729
    %v1731 = vand.u32 %v91, 4294901760
    %1732 = vmatprep.subr.mxu0 %v1731
    %v1733 = vand.u32 %v90, 4294901760
    %1734 = vmatpush1.msra.mxu0 %v1733
    %v1735 = vand.u32 %v95, 4294901760
    %1736 = vmatprep.subr.mxu0 %v1735
    %v1737 = vand.u32 %v94, 4294901760
    %1738 = vmatpush1.msra.mxu0 %v1737
    %v1739 = vand.u32 %v99, 4294901760
    %1740 = vmatprep.subr.mxu0 %v1739
    %v1741 = vand.u32 %v98, 4294901760
    %1742 = vmatpush1.msra.mxu0 %v1741
    %v1743 = vand.u32 %v103, 4294901760
    %1744 = vmatprep.subr.mxu0 %v1743
    %v1745 = vand.u32 %v102, 4294901760
    %1746 = vmatpush1.msra.mxu0 %v1745
    %v1747 = vand.u32 %v107, 4294901760
    %1748 = vmatprep.subr.mxu0 %v1747
    %v1749 = vand.u32 %v106, 4294901760
    %1750 = vmatpush1.msra.mxu0 %v1749
    %v1751 = vand.u32 %v111, 4294901760
    %1752 = vmatprep.subr.mxu0 %v1751
    %v1753 = vand.u32 %v110, 4294901760
    %1754 = vmatpush1.msra.mxu0 %v1753
    %v1755 = vand.u32 %v115, 4294901760
    %1756 = vmatprep.subr.mxu0 %v1755
    %v1757 = vand.u32 %v114, 4294901760
    %1758 = vmatpush1.msra.mxu0 %v1757
    %1759 = vmatprep.subr.mxu0 0.0
    %1760 = vmatpush1.msra.mxu0 0.0
    %1761 = vmatprep.subr.mxu0 0.0
    %1762 = vmatpush1.msra.mxu0 0.0
    %1763 = vmatprep.subr.mxu0 0.0
    %1764 = vmatpush1.msra.mxu0 0.0
    %1765 = vmatprep.subr.mxu0 0.0
    %1766 = vmatpush1.msra.mxu0 0.0
    %1767 = vmatprep.subr.mxu0 0.0
    %1768 = vmatpush1.msra.mxu0 0.0
    %1769 = vmatprep.subr.mxu0 0.0
    %1770 = vmatpush1.msra.mxu0 0.0
    %1771 = vmatprep.subr.mxu0 0.0
    %1772 = vmatpush1.msra.mxu0 0.0
    %1773 = vmatprep.subr.mxu0 0.0
    %1774 = vmatpush1.msra.mxu0 0.0
    %1775 = vmatprep.subr.mxu0 0.0
    %1776 = vmatpush1.msra.mxu0 0.0
    %1777 = vmatprep.subr.mxu0 0.0
    %1778 = vmatpush1.msra.mxu0 0.0
    %1779 = vmatprep.subr.mxu0 0.0
    %1780 = vmatpush1.msra.mxu0 0.0
    %1781 = vmatprep.subr.mxu0 0.0
    %1782 = vmatpush1.msra.mxu0 0.0
    %1783 = vmatprep.subr.mxu0 0.0
    %1784 = vmatpush1.msra.mxu0 0.0
    %1785 = vmatprep.subr.mxu0 0.0
    %1786 = vmatpush1.msra.mxu0 0.0
    %1787 = vmatprep.subr.mxu0 0.0
    %1788 = vmatpush1.msra.mxu0 0.0
    %1789 = vmatprep.subr.mxu0 0.0
    %1790 = vmatpush1.msra.mxu0 0.0
    %1791 = vmatprep.mubr.f32.mxu0 0.0
    %v1792 = vand.u32 %v48, 4294901760
    %v1793 = vsub.f32 %v48, %v1792
    %v1794 = vand.u32 %v1793, 4294901760
    %1795 = vmatmul.mubr.f32.gmra.mrb[0].mxu0 %v1794
    %v1796 = vpop.f32.mrb[0].mxu0
    %v1797 = vadd.f32 %v1667, %v1796
    %v1798 = vpop.f32.mrb[0].mxu0
    %v1799 = vadd.f32 %v1669, %v1798
    %1800 = vmatprep.mubr.f32.mxu0 0.0
    %v1801 = vand.u32 %v49, 4294901760
    %v1802 = vsub.f32 %v49, %v1801
    %v1803 = vand.u32 %v1802, 4294901760
    %1804 = vmatmul.mubr.f32.gmra.mrb[0].mxu0 %v1803
    %v1805 = vpop.f32.mrb[0].mxu0
    %v1806 = vadd.f32 %v1675, %v1805
    %v1807 = vpop.f32.mrb[0].mxu0
    %v1808 = vadd.f32 %v1677, %v1807
    %1809 = vmatprep.mubr.f32.mxu0 0.0
    %v1810 = vand.u32 %v50, 4294901760
    %v1811 = vsub.f32 %v50, %v1810
    %v1812 = vand.u32 %v1811, 4294901760
    %1813 = vmatmul.mubr.f32.gmra.mrb[0].mxu0 %v1812
    %v1814 = vpop.f32.mrb[0].mxu0
    %v1815 = vadd.f32 %v1683, %v1814
    %v1816 = vpop.f32.mrb[0].mxu0
    %v1817 = vadd.f32 %v1685, %v1816
    %1818 = vmatprep.mubr.f32.mxu0 0.0
    %v1819 = vand.u32 %v51, 4294901760
    %v1820 = vsub.f32 %v51, %v1819
    %v1821 = vand.u32 %v1820, 4294901760
    %1822 = vmatmul.mubr.f32.gmra.mrb[0].mxu0 %v1821
    %v1823 = vpop.f32.mrb[0].mxu0
    %v1824 = vadd.f32 %v1691, %v1823
    %v1825 = vpop.f32.mrb[0].mxu0
    %v1826 = vadd.f32 %v1693, %v1825
    %1827 = vdwg.mxu0
    %v1828 = vand.u32 %v55, 4294901760
    %v1829 = vsub.f32 %v55, %v1828
    %v1830 = vand.u32 %v1829, 4294901760
    %1831 = vmatprep.subr.mxu0 %v1830
    %v1832 = vand.u32 %v54, 4294901760
    %v1833 = vsub.f32 %v54, %v1832
    %v1834 = vand.u32 %v1833, 4294901760
    %1835 = vmatpush1.msra.mxu0 %v1834
    %v1836 = vand.u32 %v59, 4294901760
    %v1837 = vsub.f32 %v59, %v1836
    %v1838 = vand.u32 %v1837, 4294901760
    %1839 = vmatprep.subr.mxu0 %v1838
    %v1840 = vand.u32 %v58, 4294901760
    %v1841 = vsub.f32 %v58, %v1840
    %v1842 = vand.u32 %v1841, 4294901760
    %1843 = vmatpush1.msra.mxu0 %v1842
    %v1844 = vand.u32 %v63, 4294901760
    %v1845 = vsub.f32 %v63, %v1844
    %v1846 = vand.u32 %v1845, 4294901760
    %1847 = vmatprep.subr.mxu0 %v1846
    %v1848 = vand.u32 %v62, 4294901760
    %v1849 = vsub.f32 %v62, %v1848
    %v1850 = vand.u32 %v1849, 4294901760
    %1851 = vmatpush1.msra.mxu0 %v1850
    %v1852 = vand.u32 %v67, 4294901760
    %v1853 = vsub.f32 %v67, %v1852
    %v1854 = vand.u32 %v1853, 4294901760
    %1855 = vmatprep.subr.mxu0 %v1854
    %v1856 = vand.u32 %v66, 4294901760
    %v1857 = vsub.f32 %v66, %v1856
    %v1858 = vand.u32 %v1857, 4294901760
    %1859 = vmatpush1.msra.mxu0 %v1858
    %v1860 = vand.u32 %v71, 4294901760
    %v1861 = vsub.f32 %v71, %v1860
    %v1862 = vand.u32 %v1861, 4294901760
    %1863 = vmatprep.subr.mxu0 %v1862
    %v1864 = vand.u32 %v70, 4294901760
    %v1865 = vsub.f32 %v70, %v1864
    %v1866 = vand.u32 %v1865, 4294901760
    %1867 = vmatpush1.msra.mxu0 %v1866
    %v1868 = vand.u32 %v75, 4294901760
    %v1869 = vsub.f32 %v75, %v1868
    %v1870 = vand.u32 %v1869, 4294901760
    %1871 = vmatprep.subr.mxu0 %v1870
    %v1872 = vand.u32 %v74, 4294901760
    %v1873 = vsub.f32 %v74, %v1872
    %v1874 = vand.u32 %v1873, 4294901760
    %1875 = vmatpush1.msra.mxu0 %v1874
    %v1876 = vand.u32 %v79, 4294901760
    %v1877 = vsub.f32 %v79, %v1876
    %v1878 = vand.u32 %v1877, 4294901760
    %1879 = vmatprep.subr.mxu0 %v1878
    %v1880 = vand.u32 %v78, 4294901760
    %v1881 = vsub.f32 %v78, %v1880
    %v1882 = vand.u32 %v1881, 4294901760
    %1883 = vmatpush1.msra.mxu0 %v1882
    %v1884 = vand.u32 %v83, 4294901760
    %v1885 = vsub.f32 %v83, %v1884
    %v1886 = vand.u32 %v1885, 4294901760
    %1887 = vmatprep.subr.mxu0 %v1886
    %v1888 = vand.u32 %v82, 4294901760
    %v1889 = vsub.f32 %v82, %v1888
    %v1890 = vand.u32 %v1889, 4294901760
    %1891 = vmatpush1.msra.mxu0 %v1890
    %v1892 = vand.u32 %v87, 4294901760
    %v1893 = vsub.f32 %v87, %v1892
    %v1894 = vand.u32 %v1893, 4294901760
    %1895 = vmatprep.subr.mxu0 %v1894
    %v1896 = vand.u32 %v86, 4294901760
    %v1897 = vsub.f32 %v86, %v1896
    %v1898 = vand.u32 %v1897, 4294901760
    %1899 = vmatpush1.msra.mxu0 %v1898
    %v1900 = vand.u32 %v91, 4294901760
    %v1901 = vsub.f32 %v91, %v1900
    %v1902 = vand.u32 %v1901, 4294901760
    %1903 = vmatprep.subr.mxu0 %v1902
    %v1904 = vand.u32 %v90, 4294901760
    %v1905 = vsub.f32 %v90, %v1904
    %v1906 = vand.u32 %v1905, 4294901760
    %1907 = vmatpush1.msra.mxu0 %v1906
    %v1908 = vand.u32 %v95, 4294901760
    %v1909 = vsub.f32 %v95, %v1908
    %v1910 = vand.u32 %v1909, 4294901760
    %1911 = vmatprep.subr.mxu0 %v1910
    %v1912 = vand.u32 %v94, 4294901760
    %v1913 = vsub.f32 %v94, %v1912
    %v1914 = vand.u32 %v1913, 4294901760
    %1915 = vmatpush1.msra.mxu0 %v1914
    %v1916 = vand.u32 %v99, 4294901760
    %v1917 = vsub.f32 %v99, %v1916
    %v1918 = vand.u32 %v1917, 4294901760
    %1919 = vmatprep.subr.mxu0 %v1918
    %v1920 = vand.u32 %v98, 4294901760
    %v1921 = vsub.f32 %v98, %v1920
    %v1922 = vand.u32 %v1921, 4294901760
    %1923 = vmatpush1.msra.mxu0 %v1922
    %v1924 = vand.u32 %v103, 4294901760
    %v1925 = vsub.f32 %v103, %v1924
    %v1926 = vand.u32 %v1925, 4294901760
    %1927 = vmatprep.subr.mxu0 %v1926
    %v1928 = vand.u32 %v102, 4294901760
    %v1929 = vsub.f32 %v102, %v1928
    %v1930 = vand.u32 %v1929, 4294901760
    %1931 = vmatpush1.msra.mxu0 %v1930
    %v1932 = vand.u32 %v107, 4294901760
    %v1933 = vsub.f32 %v107, %v1932
    %v1934 = vand.u32 %v1933, 4294901760
    %1935 = vmatprep.subr.mxu0 %v1934
    %v1936 = vand.u32 %v106, 4294901760
    %v1937 = vsub.f32 %v106, %v1936
    %v1938 = vand.u32 %v1937, 4294901760
    %1939 = vmatpush1.msra.mxu0 %v1938
    %v1940 = vand.u32 %v111, 4294901760
    %v1941 = vsub.f32 %v111, %v1940
    %v1942 = vand.u32 %v1941, 4294901760
    %1943 = vmatprep.subr.mxu0 %v1942
    %v1944 = vand.u32 %v110, 4294901760
    %v1945 = vsub.f32 %v110, %v1944
    %v1946 = vand.u32 %v1945, 4294901760
    %1947 = vmatpush1.msra.mxu0 %v1946
    %v1948 = vand.u32 %v115, 4294901760
    %v1949 = vsub.f32 %v115, %v1948
    %v1950 = vand.u32 %v1949, 4294901760
    %1951 = vmatprep.subr.mxu0 %v1950
    %v1952 = vand.u32 %v114, 4294901760
    %v1953 = vsub.f32 %v114, %v1952
    %v1954 = vand.u32 %v1953, 4294901760
    %1955 = vmatpush1.msra.mxu0 %v1954
    %1956 = vmatprep.subr.mxu0 0.0
    %1957 = vmatpush1.msra.mxu0 0.0
    %1958 = vmatprep.subr.mxu0 0.0
    %1959 = vmatpush1.msra.mxu0 0.0
    %1960 = vmatprep.subr.mxu0 0.0
    %1961 = vmatpush1.msra.mxu0 0.0
    %1962 = vmatprep.subr.mxu0 0.0
    %1963 = vmatpush1.msra.mxu0 0.0
    %1964 = vmatprep.subr.mxu0 0.0
    %1965 = vmatpush1.msra.mxu0 0.0
    %1966 = vmatprep.subr.mxu0 0.0
    %1967 = vmatpush1.msra.mxu0 0.0
    %1968 = vmatprep.subr.mxu0 0.0
    %1969 = vmatpush1.msra.mxu0 0.0
    %1970 = vmatprep.subr.mxu0 0.0
    %1971 = vmatpush1.msra.mxu0 0.0
    %1972 = vmatprep.subr.mxu0 0.0
    %1973 = vmatpush1.msra.mxu0 0.0
    %1974 = vmatprep.subr.mxu0 0.0
    %1975 = vmatpush1.msra.mxu0 0.0
    %1976 = vmatprep.subr.mxu0 0.0
    %1977 = vmatpush1.msra.mxu0 0.0
    %1978 = vmatprep.subr.mxu0 0.0
    %1979 = vmatpush1.msra.mxu0 0.0
    %1980 = vmatprep.subr.mxu0 0.0
    %1981 = vmatpush1.msra.mxu0 0.0
    %1982 = vmatprep.subr.mxu0 0.0
    %1983 = vmatpush1.msra.mxu0 0.0
    %1984 = vmatprep.subr.mxu0 0.0
    %1985 = vmatpush1.msra.mxu0 0.0
    %1986 = vmatprep.subr.mxu0 0.0
    %1987 = vmatpush1.msra.mxu0 0.0
    %1988 = vmatprep.mubr.f32.mxu0 0.0
    %v1989 = vand.u32 %v48, 4294901760
    %1990 = vmatmul.mubr.f32.gmra.mrb[0].mxu0 %v1989
    %v1991 = vpop.f32.mrb[0].mxu0
    %v1992 = vadd.f32 %v1797, %v1991
    %v1993 = vpop.f32.mrb[0].mxu0
    %v1994 = vadd.f32 %v1799, %v1993
    %1995 = vmatprep.mubr.f32.mxu0 0.0
    %v1996 = vand.u32 %v49, 4294901760
    %1997 = vmatmul.mubr.f32.gmra.mrb[0].mxu0 %v1996
    %v1998 = vpop.f32.mrb[0].mxu0
    %v1999 = vadd.f32 %v1806, %v1998
    %v2000 = vpop.f32.mrb[0].mxu0
    %v2001 = vadd.f32 %v1808, %v2000
    %2002 = vmatprep.mubr.f32.mxu0 0.0
    %v2003 = vand.u32 %v50, 4294901760
    %2004 = vmatmul.mubr.f32.gmra.mrb[0].mxu0 %v2003
    %v2005 = vpop.f32.mrb[0].mxu0
    %v2006 = vadd.f32 %v1815, %v2005
    %v2007 = vpop.f32.mrb[0].mxu0
    %v2008 = vadd.f32 %v1817, %v2007
    %2009 = vmatprep.mubr.f32.mxu0 0.0
    %v2010 = vand.u32 %v51, 4294901760
    %2011 = vmatmul.mubr.f32.gmra.mrb[0].mxu0 %v2010
    %v2012 = vpop.f32.mrb[0].mxu0
    %v2013 = vadd.f32 %v1824, %v2012
    %v2014 = vpop.f32.mrb[0].mxu0
    %v2015 = vadd.f32 %v1826, %v2014
    %2016 = vdwg.mxu0
    %v2017 = vand.u32 %v55, 4294901760
    %2018 = vmatprep.subr.mxu0 %v2017
    %v2019 = vand.u32 %v54, 4294901760
    %2020 = vmatpush1.msra.mxu0 %v2019
    %v2021 = vand.u32 %v59, 4294901760
    %2022 = vmatprep.subr.mxu0 %v2021
    %v2023 = vand.u32 %v58, 4294901760
    %2024 = vmatpush1.msra.mxu0 %v2023
    %v2025 = vand.u32 %v63, 4294901760
    %2026 = vmatprep.subr.mxu0 %v2025
    %v2027 = vand.u32 %v62, 4294901760
    %2028 = vmatpush1.msra.mxu0 %v2027
    %v2029 = vand.u32 %v67, 4294901760
    %2030 = vmatprep.subr.mxu0 %v2029
    %v2031 = vand.u32 %v66, 4294901760
    %2032 = vmatpush1.msra.mxu0 %v2031
    %v2033 = vand.u32 %v71, 4294901760
    %2034 = vmatprep.subr.mxu0 %v2033
    %v2035 = vand.u32 %v70, 4294901760
    %2036 = vmatpush1.msra.mxu0 %v2035
    %v2037 = vand.u32 %v75, 4294901760
    %2038 = vmatprep.subr.mxu0 %v2037
    %v2039 = vand.u32 %v74, 4294901760
    %2040 = vmatpush1.msra.mxu0 %v2039
    %v2041 = vand.u32 %v79, 4294901760
    %2042 = vmatprep.subr.mxu0 %v2041
    %v2043 = vand.u32 %v78, 4294901760
    %2044 = vmatpush1.msra.mxu0 %v2043
    %v2045 = vand.u32 %v83, 4294901760
    %2046 = vmatprep.subr.mxu0 %v2045
    %v2047 = vand.u32 %v82, 4294901760
    %2048 = vmatpush1.msra.mxu0 %v2047
    %v2049 = vand.u32 %v87, 4294901760
    %2050 = vmatprep.subr.mxu0 %v2049
    %v2051 = vand.u32 %v86, 4294901760
    %2052 = vmatpush1.msra.mxu0 %v2051
    %v2053 = vand.u32 %v91, 4294901760
    %2054 = vmatprep.subr.mxu0 %v2053
    %v2055 = vand.u32 %v90, 4294901760
    %2056 = vmatpush1.msra.mxu0 %v2055
    %v2057 = vand.u32 %v95, 4294901760
    %2058 = vmatprep.subr.mxu0 %v2057
    %v2059 = vand.u32 %v94, 4294901760
    %2060 = vmatpush1.msra.mxu0 %v2059
    %v2061 = vand.u32 %v99, 4294901760
    %2062 = vmatprep.subr.mxu0 %v2061
    %v2063 = vand.u32 %v98, 4294901760
    %2064 = vmatpush1.msra.mxu0 %v2063
    %v2065 = vand.u32 %v103, 4294901760
    %2066 = vmatprep.subr.mxu0 %v2065
    %v2067 = vand.u32 %v102, 4294901760
    %2068 = vmatpush1.msra.mxu0 %v2067
    %v2069 = vand.u32 %v107, 4294901760
    %2070 = vmatprep.subr.mxu0 %v2069
    %v2071 = vand.u32 %v106, 4294901760
    %2072 = vmatpush1.msra.mxu0 %v2071
    %v2073 = vand.u32 %v111, 4294901760
    %2074 = vmatprep.subr.mxu0 %v2073
    %v2075 = vand.u32 %v110, 4294901760
    %2076 = vmatpush1.msra.mxu0 %v2075
    %v2077 = vand.u32 %v115, 4294901760
    %2078 = vmatprep.subr.mxu0 %v2077
    %v2079 = vand.u32 %v114, 4294901760
    %2080 = vmatpush1.msra.mxu0 %v2079
    %2081 = vmatprep.subr.mxu0 0.0
    %2082 = vmatpush1.msra.mxu0 0.0
    %2083 = vmatprep.subr.mxu0 0.0
    %2084 = vmatpush1.msra.mxu0 0.0
    %2085 = vmatprep.subr.mxu0 0.0
    %2086 = vmatpush1.msra.mxu0 0.0
    %2087 = vmatprep.subr.mxu0 0.0
    %2088 = vmatpush1.msra.mxu0 0.0
    %2089 = vmatprep.subr.mxu0 0.0
    %2090 = vmatpush1.msra.mxu0 0.0
    %2091 = vmatprep.subr.mxu0 0.0
    %2092 = vmatpush1.msra.mxu0 0.0
    %2093 = vmatprep.subr.mxu0 0.0
    %2094 = vmatpush1.msra.mxu0 0.0
    %2095 = vmatprep.subr.mxu0 0.0
    %2096 = vmatpush1.msra.mxu0 0.0
    %2097 = vmatprep.subr.mxu0 0.0
    %2098 = vmatpush1.msra.mxu0 0.0
    %2099 = vmatprep.subr.mxu0 0.0
    %2100 = vmatpush1.msra.mxu0 0.0
    %2101 = vmatprep.subr.mxu0 0.0
    %2102 = vmatpush1.msra.mxu0 0.0
    %2103 = vmatprep.subr.mxu0 0.0
    %2104 = vmatpush1.msra.mxu0 0.0
    %2105 = vmatprep.subr.mxu0 0.0
    %2106 = vmatpush1.msra.mxu0 0.0
    %2107 = vmatprep.subr.mxu0 0.0
    %2108 = vmatpush1.msra.mxu0 0.0
    %2109 = vmatprep.subr.mxu0 0.0
    %2110 = vmatpush1.msra.mxu0 0.0
    %2111 = vmatprep.subr.mxu0 0.0
    %2112 = vmatpush1.msra.mxu0 0.0
    %2113 = vmatprep.mubr.f32.mxu0 0.0
    %v2114 = vand.u32 %v48, 4294901760
    %2115 = vmatmul.mubr.f32.gmra.mrb[0].mxu0 %v2114
    %v2116 = vpop.f32.mrb[0].mxu0
    %v2117 = vadd.f32 %v1992, %v2116
    %v2118 = vpop.f32.mrb[0].mxu0
    %v2119 = vadd.f32 %v1994, %v2118
    %2120 = vmatprep.mubr.f32.mxu0 0.0
    %v2121 = vand.u32 %v49, 4294901760
    %2122 = vmatmul.mubr.f32.gmra.mrb[0].mxu0 %v2121
    %v2123 = vpop.f32.mrb[0].mxu0
    %v2124 = vadd.f32 %v1999, %v2123
    %v2125 = vpop.f32.mrb[0].mxu0
    %v2126 = vadd.f32 %v2001, %v2125
    %2127 = vmatprep.mubr.f32.mxu0 0.0
    %v2128 = vand.u32 %v50, 4294901760
    %2129 = vmatmul.mubr.f32.gmra.mrb[0].mxu0 %v2128
    %v2130 = vpop.f32.mrb[0].mxu0
    %v2131 = vadd.f32 %v2006, %v2130
    %v2132 = vpop.f32.mrb[0].mxu0
    %v2133 = vadd.f32 %v2008, %v2132
    %2134 = vmatprep.mubr.f32.mxu0 0.0
    %v2135 = vand.u32 %v51, 4294901760
    %2136 = vmatmul.mubr.f32.gmra.mrb[0].mxu0 %v2135
    %v2137 = vpop.f32.mrb[0].mxu0
    %v2138 = vadd.f32 %v2013, %v2137
    %v2139 = vpop.f32.mrb[0].mxu0
    %v2140 = vadd.f32 %v2015, %v2139
    %2141 = vdwg.mxu0
    %v2142 = vxor.u32 %v1115, 2147483648
    %v2143 = vxor.u32 %v1117, 2147483648
    %v2144 = vxor.u32 %v2117, 2147483648
    %v2145 = vxor.u32 %v2119, 2147483648
    %v2146 = vxor.u32 %v1122, 2147483648
    %v2147 = vxor.u32 %v1124, 2147483648
    %v2148 = vxor.u32 %v2124, 2147483648
    %v2149 = vxor.u32 %v2126, 2147483648
    %v2150 = vxor.u32 %v1129, 2147483648
    %v2151 = vxor.u32 %v1131, 2147483648
    %v2152 = vxor.u32 %v2131, 2147483648
    %v2153 = vxor.u32 %v2133, 2147483648
    %v2154 = vxor.u32 %v1136, 2147483648
    %v2155 = vxor.u32 %v1138, 2147483648
    %v2156 = vxor.u32 %v2138, 2147483648
    %v2157 = vxor.u32 %v2140, 2147483648
    %v2158 = vmul.f32 %v2142, 1.442695
    %v2159 = vpow.pop %v2158
    %v2160 = vmul.f32 %v2143, 1.442695
    %v2161 = vpow.pop %v2160
    %v2162 = vmul.f32 %v2144, 1.442695
    %v2163 = vpow.pop %v2162
    %v2164 = vmul.f32 %v2145, 1.442695
    %v2165 = vpow.pop %v2164
    %v2166 = vmul.f32 %v2146, 1.442695
    %v2167 = vpow.pop %v2166
    %v2168 = vmul.f32 %v2147, 1.442695
    %v2169 = vpow.pop %v2168
    %v2170 = vmul.f32 %v2148, 1.442695
    %v2171 = vpow.pop %v2170
    %v2172 = vmul.f32 %v2149, 1.442695
    %v2173 = vpow.pop %v2172
    %v2174 = vmul.f32 %v2150, 1.442695
    %v2175 = vpow.pop %v2174
    %v2176 = vmul.f32 %v2151, 1.442695
    %v2177 = vpow.pop %v2176
    %v2178 = vmul.f32 %v2152, 1.442695
    %v2179 = vpow.pop %v2178
    %v2180 = vmul.f32 %v2153, 1.442695
    %v2181 = vpow.pop %v2180
    %v2182 = vmul.f32 %v2154, 1.442695
    %v2183 = vpow.pop %v2182
    %v2184 = vmul.f32 %v2155, 1.442695
    %v2185 = vpow.pop %v2184
    %v2186 = vmul.f32 %v2156, 1.442695
    %v2187 = vpow.pop %v2186
    %v2188 = vmul.f32 %v2157, 1.442695
    %v2189 = vpow.pop %v2188
    %v2190 = vadd.f32 %v2159, 1.0
    %v2191 = vadd.f32 %v2161, 1.0
    %v2192 = vadd.f32 %v2163, 1.0
    %v2193 = vadd.f32 %v2165, 1.0
    %v2194 = vadd.f32 %v2167, 1.0
    %v2195 = vadd.f32 %v2169, 1.0
    %v2196 = vadd.f32 %v2171, 1.0
    %v2197 = vadd.f32 %v2173, 1.0
    %v2198 = vadd.f32 %v2175, 1.0
    %v2199 = vadd.f32 %v2177, 1.0
    %v2200 = vadd.f32 %v2179, 1.0
    %v2201 = vadd.f32 %v2181, 1.0
    %v2202 = vadd.f32 %v2183, 1.0
    %v2203 = vadd.f32 %v2185, 1.0
    %v2204 = vadd.f32 %v2187, 1.0
    %v2205 = vadd.f32 %v2189, 1.0
    %v2206 = vrcp.pop %v2190
    %v2207 = vmul.f32 1.0, %v2206
    %v2208 = vrcp.pop %v2191
    %v2209 = vmul.f32 1.0, %v2208
    %v2210 = vrcp.pop %v2192
    %v2211 = vmul.f32 1.0, %v2210
    %v2212 = vrcp.pop %v2193
    %v2213 = vmul.f32 1.0, %v2212
    %v2214 = vrcp.pop %v2194
    %v2215 = vmul.f32 1.0, %v2214
    %v2216 = vrcp.pop %v2195
    %v2217 = vmul.f32 1.0, %v2216
    %v2218 = vrcp.pop %v2196
    %v2219 = vmul.f32 1.0, %v2218
    %v2220 = vrcp.pop %v2197
    %v2221 = vmul.f32 1.0, %v2220
    %v2222 = vrcp.pop %v2198
    %v2223 = vmul.f32 1.0, %v2222
    %v2224 = vrcp.pop %v2199
    %v2225 = vmul.f32 1.0, %v2224
    %v2226 = vrcp.pop %v2200
    %v2227 = vmul.f32 1.0, %v2226
    %v2228 = vrcp.pop %v2201
    %v2229 = vmul.f32 1.0, %v2228
    %v2230 = vrcp.pop %v2202
    %v2231 = vmul.f32 1.0, %v2230
    %v2232 = vrcp.pop %v2203
    %v2233 = vmul.f32 1.0, %v2232
    %v2234 = vrcp.pop %v2204
    %v2235 = vmul.f32 1.0, %v2234
    %v2236 = vrcp.pop %v2205
    %v2237 = vmul.f32 1.0, %v2236
    %v2238 = vmul.f32 %v1115, %v2207
    %v2239 = vmul.f32 %v1117, %v2209
    %v2240 = vmul.f32 %v2117, %v2211
    %v2241 = vmul.f32 %v2119, %v2213
    %v2242 = vmul.f32 %v1122, %v2215
    %v2243 = vmul.f32 %v1124, %v2217
    %v2244 = vmul.f32 %v2124, %v2219
    %v2245 = vmul.f32 %v2126, %v2221
    %v2246 = vmul.f32 %v1129, %v2223
    %v2247 = vmul.f32 %v1131, %v2225
    %v2248 = vmul.f32 %v2131, %v2227
    %v2249 = vmul.f32 %v2133, %v2229
    %v2250 = vmul.f32 %v1136, %v2231
    %v2251 = vmul.f32 %v1138, %v2233
    %v2252 = vmul.f32 %v2138, %v2235
    %v2253 = vmul.f32 %v2140, %v2237
    %2254 = vrot.lane.b32.xlu0 %v2238, 96
    %v2255 = vpop.permute.xlu0 %2254
    %2256 = vrot.lane.b32.xlu0 %v2242, 96
    %v2257 = vpop.permute.xlu0 %2256
    %2258 = vrot.lane.b32.xlu0 %v2246, 96
    %v2259 = vpop.permute.xlu0 %2258
    %2260 = vrot.lane.b32.xlu0 %v2250, 96
    %v2261 = vpop.permute.xlu0 %2260
    %2262 = vrot.lane.b32.xlu0 %v2239, 96
    %v2263 = vpop.permute.xlu0 %2262
    %2264 = vrot.lane.b32.xlu0 %v2243, 96
    %v2265 = vpop.permute.xlu0 %2264
    %2266 = vrot.lane.b32.xlu0 %v2247, 96
    %v2267 = vpop.permute.xlu0 %2266
    %2268 = vrot.lane.b32.xlu0 %v2251, 96
    %v2269 = vpop.permute.xlu0 %2268
    %2270 = vrot.lane.b32.xlu0 %v2240, 96
    %v2271 = vpop.permute.xlu0 %2270
    %2272 = vrot.lane.b32.xlu0 %v2244, 96
    %v2273 = vpop.permute.xlu0 %2272
    %2274 = vrot.lane.b32.xlu0 %v2248, 96
    %v2275 = vpop.permute.xlu0 %2274
    %2276 = vrot.lane.b32.xlu0 %v2252, 96
    %v2277 = vpop.permute.xlu0 %2276
    %2278 = vrot.lane.b32.xlu0 %v2241, 96
    %v2279 = vpop.permute.xlu0 %2278
    %2280 = vrot.lane.b32.xlu0 %v2245, 96
    %v2281 = vpop.permute.xlu0 %2280
    %2282 = vrot.lane.b32.xlu0 %v2249, 96
    %v2283 = vpop.permute.xlu0 %2282
    %2284 = vrot.lane.b32.xlu0 %v2253, 96
    %v2285 = vpop.permute.xlu0 %2284
    %v2286 = vlaneseq
    %v2287 = vand.u32 %v2286, 127
    %vm2288 = vcmp.lt.s32.totalorder %v2287, 96
    %v2289 = vsel %vm2288, %v2271, %v2279
    %v2290 = vsel %vm2288, %v2273, %v2281
    %v2291 = vsel %vm2288, %v2275, %v2283
    %v2292 = vsel %vm2288, %v2277, %v2285
    %v2293 = vsel %vm2288, %v2263, %v2271
    %v2294 = vsel %vm2288, %v2265, %v2273
    %v2295 = vsel %vm2288, %v2267, %v2275
    %v2296 = vsel %vm2288, %v2269, %v2277
    %v2297 = vsel %vm2288, %v2255, %v2263
    %v2298 = vsel %vm2288, %v2257, %v2265
    %v2299 = vsel %vm2288, %v2259, %v2267
    %v2300 = vsel %vm2288, %v2261, %v2269
    %v2301 = vsel %vm2288, %v2279, %v2255
    %v2302 = vsel %vm2288, %v2281, %v2257
    %v2303 = vsel %vm2288, %v2283, %v2259
    %v2304 = vsel %vm2288, %v2285, %v2261
    %2305 = vrot.lane.b32.xlu0 %v2238, 32
    %v2306 = vpop.permute.xlu0 %2305
    %2307 = vrot.lane.b32.xlu0 %v2242, 32
    %v2308 = vpop.permute.xlu0 %2307
    %2309 = vrot.lane.b32.xlu0 %v2246, 32
    %v2310 = vpop.permute.xlu0 %2309
    %2311 = vrot.lane.b32.xlu0 %v2250, 32
    %v2312 = vpop.permute.xlu0 %2311
    %2313 = vrot.lane.b32.xlu0 %v2239, 32
    %v2314 = vpop.permute.xlu0 %2313
    %2315 = vrot.lane.b32.xlu0 %v2243, 32
    %v2316 = vpop.permute.xlu0 %2315
    %2317 = vrot.lane.b32.xlu0 %v2247, 32
    %v2318 = vpop.permute.xlu0 %2317
    %2319 = vrot.lane.b32.xlu0 %v2251, 32
    %v2320 = vpop.permute.xlu0 %2319
    %2321 = vrot.lane.b32.xlu0 %v2240, 32
    %v2322 = vpop.permute.xlu0 %2321
    %2323 = vrot.lane.b32.xlu0 %v2244, 32
    %v2324 = vpop.permute.xlu0 %2323
    %2325 = vrot.lane.b32.xlu0 %v2248, 32
    %v2326 = vpop.permute.xlu0 %2325
    %2327 = vrot.lane.b32.xlu0 %v2252, 32
    %v2328 = vpop.permute.xlu0 %2327
    %2329 = vrot.lane.b32.xlu0 %v2241, 32
    %v2330 = vpop.permute.xlu0 %2329
    %2331 = vrot.lane.b32.xlu0 %v2245, 32
    %v2332 = vpop.permute.xlu0 %2331
    %2333 = vrot.lane.b32.xlu0 %v2249, 32
    %v2334 = vpop.permute.xlu0 %2333
    %2335 = vrot.lane.b32.xlu0 %v2253, 32
    %v2336 = vpop.permute.xlu0 %2335
    %vm2337 = vcmp.lt.s32.totalorder %v2287, 32
    %v2338 = vsel %vm2337, %v2322, %v2330
    %v2339 = vsel %vm2337, %v2324, %v2332
    %v2340 = vsel %vm2337, %v2326, %v2334
    %v2341 = vsel %vm2337, %v2328, %v2336
    %v2342 = vsel %vm2337, %v2314, %v2322
    %v2343 = vsel %vm2337, %v2316, %v2324
    %v2344 = vsel %vm2337, %v2318, %v2326
    %v2345 = vsel %vm2337, %v2320, %v2328
    %v2346 = vsel %vm2337, %v2306, %v2314
    %v2347 = vsel %vm2337, %v2308, %v2316
    %v2348 = vsel %vm2337, %v2310, %v2318
    %v2349 = vsel %vm2337, %v2312, %v2320
    %v2350 = vsel %vm2337, %v2330, %v2306
    %v2351 = vsel %vm2337, %v2332, %v2308
    %v2352 = vsel %vm2337, %v2334, %v2310
    %v2353 = vsel %vm2337, %v2336, %v2312
    %v2354 = vld [vmem:[#allocation2] ss:$8 sm:$0xf]
    %v2356 = vlaneseq
    %v2357 = vshrl.u32 %v2356, 7
    %v2358 = vsub.s32 0, %v2357
    %v2359 = vrot.slane %v2354, %v2358
    %v2360 = vlaneseq
    %v2361 = vshrl.u32 %v2360, 7
    %v2362 = vsub.s32 1, %v2361
    %v2363 = vrot.slane %v2354, %v2362
    %v2364 = vlaneseq
    %v2365 = vshrl.u32 %v2364, 7
    %v2366 = vsub.s32 2, %v2365
    %v2367 = vrot.slane %v2354, %v2366
    %v2368 = vlaneseq
    %v2369 = vshrl.u32 %v2368, 7
    %v2370 = vsub.s32 3, %v2369
    %v2371 = vrot.slane %v2354, %v2370
    %v2376 = vmul.f32 %v2350, %v2359
    %v2377 = vmul.f32 %v2346, %v2363
    %v2378 = vmul.f32 %v2342, %v2367
    %v2379 = vmul.f32 %v2338, %v2371
    %v2380 = vmul.f32 %v2351, %v2359
    %v2381 = vmul.f32 %v2347, %v2363
    %v2382 = vmul.f32 %v2343, %v2367
    %v2383 = vmul.f32 %v2339, %v2371
    %v2384 = vmul.f32 %v2352, %v2359
    %v2385 = vmul.f32 %v2348, %v2363
    %v2386 = vmul.f32 %v2344, %v2367
    %v2387 = vmul.f32 %v2340, %v2371
    %v2388 = vmul.f32 %v2353, %v2359
    %v2389 = vmul.f32 %v2349, %v2363
    %v2390 = vmul.f32 %v2345, %v2367
    %v2391 = vmul.f32 %v2341, %v2371
    %s2392 = scalar_lea.vmem [#allocation2], 1
    %v2393 = vld [vmem:[%s2392] ss:$8 sm:$0xf]
    %v2395 = vlaneseq
    %v2396 = vshrl.u32 %v2395, 7
    %v2397 = vsub.s32 0, %v2396
    %v2398 = vrot.slane %v2393, %v2397
    %v2399 = vlaneseq
    %v2400 = vshrl.u32 %v2399, 7
    %v2401 = vsub.s32 1, %v2400
    %v2402 = vrot.slane %v2393, %v2401
    %v2403 = vlaneseq
    %v2404 = vshrl.u32 %v2403, 7
    %v2405 = vsub.s32 2, %v2404
    %v2406 = vrot.slane %v2393, %v2405
    %v2407 = vlaneseq
    %v2408 = vshrl.u32 %v2407, 7
    %v2409 = vsub.s32 3, %v2408
    %v2410 = vrot.slane %v2393, %v2409
    %v2415 = vmul.f32 %v2238, %v2398
    %v2416 = vmul.f32 %v2239, %v2402
    %v2417 = vmul.f32 %v2240, %v2406
    %v2418 = vmul.f32 %v2241, %v2410
    %v2419 = vmul.f32 %v2242, %v2398
    %v2420 = vmul.f32 %v2243, %v2402
    %v2421 = vmul.f32 %v2244, %v2406
    %v2422 = vmul.f32 %v2245, %v2410
    %v2423 = vmul.f32 %v2246, %v2398
    %v2424 = vmul.f32 %v2247, %v2402
    %v2425 = vmul.f32 %v2248, %v2406
    %v2426 = vmul.f32 %v2249, %v2410
    %v2427 = vmul.f32 %v2250, %v2398
    %v2428 = vmul.f32 %v2251, %v2402
    %v2429 = vmul.f32 %v2252, %v2406
    %v2430 = vmul.f32 %v2253, %v2410
    %v2431 = vadd.f32 %v2376, %v2415
    %v2432 = vadd.f32 %v2377, %v2416
    %v2433 = vadd.f32 %v2378, %v2417
    %v2434 = vadd.f32 %v2379, %v2418
    %v2435 = vadd.f32 %v2380, %v2419
    %v2436 = vadd.f32 %v2381, %v2420
    %v2437 = vadd.f32 %v2382, %v2421
    %v2438 = vadd.f32 %v2383, %v2422
    %v2439 = vadd.f32 %v2384, %v2423
    %v2440 = vadd.f32 %v2385, %v2424
    %v2441 = vadd.f32 %v2386, %v2425
    %v2442 = vadd.f32 %v2387, %v2426
    %v2443 = vadd.f32 %v2388, %v2427
    %v2444 = vadd.f32 %v2389, %v2428
    %v2445 = vadd.f32 %v2390, %v2429
    %v2446 = vadd.f32 %v2391, %v2430
    %s2447 = scalar_lea.vmem [#allocation2], 2
    %v2448 = vld [vmem:[%s2447] ss:$8 sm:$0xf]
    %v2450 = vlaneseq
    %v2451 = vshrl.u32 %v2450, 7
    %v2452 = vsub.s32 0, %v2451
    %v2453 = vrot.slane %v2448, %v2452
    %v2454 = vlaneseq
    %v2455 = vshrl.u32 %v2454, 7
    %v2456 = vsub.s32 1, %v2455
    %v2457 = vrot.slane %v2448, %v2456
    %v2458 = vlaneseq
    %v2459 = vshrl.u32 %v2458, 7
    %v2460 = vsub.s32 2, %v2459
    %v2461 = vrot.slane %v2448, %v2460
    %v2462 = vlaneseq
    %v2463 = vshrl.u32 %v2462, 7
    %v2464 = vsub.s32 3, %v2463
    %v2465 = vrot.slane %v2448, %v2464
    %v2470 = vmul.f32 %v2297, %v2453
    %v2471 = vmul.f32 %v2293, %v2457
    %v2472 = vmul.f32 %v2289, %v2461
    %v2473 = vmul.f32 %v2301, %v2465
    %v2474 = vmul.f32 %v2298, %v2453
    %v2475 = vmul.f32 %v2294, %v2457
    %v2476 = vmul.f32 %v2290, %v2461
    %v2477 = vmul.f32 %v2302, %v2465
    %v2478 = vmul.f32 %v2299, %v2453
    %v2479 = vmul.f32 %v2295, %v2457
    %v2480 = vmul.f32 %v2291, %v2461
    %v2481 = vmul.f32 %v2303, %v2465
    %v2482 = vmul.f32 %v2300, %v2453
    %v2483 = vmul.f32 %v2296, %v2457
    %v2484 = vmul.f32 %v2292, %v2461
    %v2485 = vmul.f32 %v2304, %v2465
    %v2486 = vadd.f32 %v2431, %v2470
    %v2487 = vadd.f32 %v2432, %v2471
    %v2488 = vadd.f32 %v2433, %v2472
    %v2489 = vadd.f32 %v2434, %v2473
    %v2490 = vadd.f32 %v2435, %v2474
    %v2491 = vadd.f32 %v2436, %v2475
    %v2492 = vadd.f32 %v2437, %v2476
    %v2493 = vadd.f32 %v2438, %v2477
    %v2494 = vadd.f32 %v2439, %v2478
    %v2495 = vadd.f32 %v2440, %v2479
    %v2496 = vadd.f32 %v2441, %v2480
    %v2497 = vadd.f32 %v2442, %v2481
    %v2498 = vadd.f32 %v2443, %v2482
    %v2499 = vadd.f32 %v2444, %v2483
    %v2500 = vadd.f32 %v2445, %v2484
    %v2501 = vadd.f32 %v2446, %v2485
    %s2502 = scalar_lea.vmem [#allocation2], 3
    %v2503 = vld [vmem:[%s2502] ss:$8 sm:$0xf]
    %v2505 = vlaneseq
    %v2506 = vshrl.u32 %v2505, 7
    %v2507 = vsub.s32 0, %v2506
    %v2508 = vrot.slane %v2503, %v2507
    %v2509 = vlaneseq
    %v2510 = vshrl.u32 %v2509, 7
    %v2511 = vsub.s32 1, %v2510
    %v2512 = vrot.slane %v2503, %v2511
    %v2513 = vlaneseq
    %v2514 = vshrl.u32 %v2513, 7
    %v2515 = vsub.s32 2, %v2514
    %v2516 = vrot.slane %v2503, %v2515
    %v2517 = vlaneseq
    %v2518 = vshrl.u32 %v2517, 7
    %v2519 = vsub.s32 3, %v2518
    %v2520 = vrot.slane %v2503, %v2519
    %v2525 = vmul.f32 %v2350, %v2508
    %v2526 = vmul.f32 %v2346, %v2512
    %v2527 = vmul.f32 %v2342, %v2516
    %v2528 = vmul.f32 %v2338, %v2520
    %v2529 = vmul.f32 %v2351, %v2508
    %v2530 = vmul.f32 %v2347, %v2512
    %v2531 = vmul.f32 %v2343, %v2516
    %v2532 = vmul.f32 %v2339, %v2520
    %v2533 = vmul.f32 %v2352, %v2508
    %v2534 = vmul.f32 %v2348, %v2512
    %v2535 = vmul.f32 %v2344, %v2516
    %v2536 = vmul.f32 %v2340, %v2520
    %v2537 = vmul.f32 %v2353, %v2508
    %v2538 = vmul.f32 %v2349, %v2512
    %v2539 = vmul.f32 %v2345, %v2516
    %v2540 = vmul.f32 %v2341, %v2520
    %s2541 = scalar_lea.vmem [#allocation2], 4
    %v2542 = vld [vmem:[%s2541] ss:$8 sm:$0xf]
    %v2544 = vlaneseq
    %v2545 = vshrl.u32 %v2544, 7
    %v2546 = vsub.s32 0, %v2545
    %v2547 = vrot.slane %v2542, %v2546
    %v2548 = vlaneseq
    %v2549 = vshrl.u32 %v2548, 7
    %v2550 = vsub.s32 1, %v2549
    %v2551 = vrot.slane %v2542, %v2550
    %v2552 = vlaneseq
    %v2553 = vshrl.u32 %v2552, 7
    %v2554 = vsub.s32 2, %v2553
    %v2555 = vrot.slane %v2542, %v2554
    %v2556 = vlaneseq
    %v2557 = vshrl.u32 %v2556, 7
    %v2558 = vsub.s32 3, %v2557
    %v2559 = vrot.slane %v2542, %v2558
    %v2564 = vmul.f32 %v2238, %v2547
    %v2565 = vmul.f32 %v2239, %v2551
    %v2566 = vmul.f32 %v2240, %v2555
    %v2567 = vmul.f32 %v2241, %v2559
    %v2568 = vmul.f32 %v2242, %v2547
    %v2569 = vmul.f32 %v2243, %v2551
    %v2570 = vmul.f32 %v2244, %v2555
    %v2571 = vmul.f32 %v2245, %v2559
    %v2572 = vmul.f32 %v2246, %v2547
    %v2573 = vmul.f32 %v2247, %v2551
    %v2574 = vmul.f32 %v2248, %v2555
    %v2575 = vmul.f32 %v2249, %v2559
    %v2576 = vmul.f32 %v2250, %v2547
    %v2577 = vmul.f32 %v2251, %v2551
    %v2578 = vmul.f32 %v2252, %v2555
    %v2579 = vmul.f32 %v2253, %v2559
    %v2580 = vadd.f32 %v2525, %v2564
    %v2581 = vadd.f32 %v2526, %v2565
    %v2582 = vadd.f32 %v2527, %v2566
    %v2583 = vadd.f32 %v2528, %v2567
    %v2584 = vadd.f32 %v2529, %v2568
    %v2585 = vadd.f32 %v2530, %v2569
    %v2586 = vadd.f32 %v2531, %v2570
    %v2587 = vadd.f32 %v2532, %v2571
    %v2588 = vadd.f32 %v2533, %v2572
    %v2589 = vadd.f32 %v2534, %v2573
    %v2590 = vadd.f32 %v2535, %v2574
    %v2591 = vadd.f32 %v2536, %v2575
    %v2592 = vadd.f32 %v2537, %v2576
    %v2593 = vadd.f32 %v2538, %v2577
    %v2594 = vadd.f32 %v2539, %v2578
    %v2595 = vadd.f32 %v2540, %v2579
    %s2596 = scalar_lea.vmem [#allocation2], 5
    %v2597 = vld [vmem:[%s2596] ss:$8 sm:$0xf]
    %v2599 = vlaneseq
    %v2600 = vshrl.u32 %v2599, 7
    %v2601 = vsub.s32 0, %v2600
    %v2602 = vrot.slane %v2597, %v2601
    %v2603 = vlaneseq
    %v2604 = vshrl.u32 %v2603, 7
    %v2605 = vsub.s32 1, %v2604
    %v2606 = vrot.slane %v2597, %v2605
    %v2607 = vlaneseq
    %v2608 = vshrl.u32 %v2607, 7
    %v2609 = vsub.s32 2, %v2608
    %v2610 = vrot.slane %v2597, %v2609
    %v2611 = vlaneseq
    %v2612 = vshrl.u32 %v2611, 7
    %v2613 = vsub.s32 3, %v2612
    %v2614 = vrot.slane %v2597, %v2613
    %v2619 = vmul.f32 %v2297, %v2602
    %v2620 = vmul.f32 %v2293, %v2606
    %v2621 = vmul.f32 %v2289, %v2610
    %v2622 = vmul.f32 %v2301, %v2614
    %v2623 = vmul.f32 %v2298, %v2602
    %v2624 = vmul.f32 %v2294, %v2606
    %v2625 = vmul.f32 %v2290, %v2610
    %v2626 = vmul.f32 %v2302, %v2614
    %v2627 = vmul.f32 %v2299, %v2602
    %v2628 = vmul.f32 %v2295, %v2606
    %v2629 = vmul.f32 %v2291, %v2610
    %v2630 = vmul.f32 %v2303, %v2614
    %v2631 = vmul.f32 %v2300, %v2602
    %v2632 = vmul.f32 %v2296, %v2606
    %v2633 = vmul.f32 %v2292, %v2610
    %v2634 = vmul.f32 %v2304, %v2614
    %v2635 = vadd.f32 %v2580, %v2619
    %v2636 = vadd.f32 %v2581, %v2620
    %v2637 = vadd.f32 %v2582, %v2621
    %v2638 = vadd.f32 %v2583, %v2622
    %v2639 = vadd.f32 %v2584, %v2623
    %v2640 = vadd.f32 %v2585, %v2624
    %v2641 = vadd.f32 %v2586, %v2625
    %v2642 = vadd.f32 %v2587, %v2626
    %v2643 = vadd.f32 %v2588, %v2627
    %v2644 = vadd.f32 %v2589, %v2628
    %v2645 = vadd.f32 %v2590, %v2629
    %v2646 = vadd.f32 %v2591, %v2630
    %v2647 = vadd.f32 %v2592, %v2631
    %v2648 = vadd.f32 %v2593, %v2632
    %v2649 = vadd.f32 %v2594, %v2633
    %v2650 = vadd.f32 %v2595, %v2634
    %s2651 = scalar_lea.vmem [#allocation2], 6
    %v2652 = vld [vmem:[%s2651] ss:$8 sm:$0xf]
    %v2654 = vlaneseq
    %v2655 = vshrl.u32 %v2654, 7
    %v2656 = vsub.s32 0, %v2655
    %v2657 = vrot.slane %v2652, %v2656
    %v2658 = vlaneseq
    %v2659 = vshrl.u32 %v2658, 7
    %v2660 = vsub.s32 1, %v2659
    %v2661 = vrot.slane %v2652, %v2660
    %v2662 = vlaneseq
    %v2663 = vshrl.u32 %v2662, 7
    %v2664 = vsub.s32 2, %v2663
    %v2665 = vrot.slane %v2652, %v2664
    %v2666 = vlaneseq
    %v2667 = vshrl.u32 %v2666, 7
    %v2668 = vsub.s32 3, %v2667
    %v2669 = vrot.slane %v2652, %v2668
    %v2674 = vmul.f32 %v2350, %v2657
    %v2675 = vmul.f32 %v2346, %v2661
    %v2676 = vmul.f32 %v2342, %v2665
    %v2677 = vmul.f32 %v2338, %v2669
    %v2678 = vmul.f32 %v2351, %v2657
    %v2679 = vmul.f32 %v2347, %v2661
    %v2680 = vmul.f32 %v2343, %v2665
    %v2681 = vmul.f32 %v2339, %v2669
    %v2682 = vmul.f32 %v2352, %v2657
    %v2683 = vmul.f32 %v2348, %v2661
    %v2684 = vmul.f32 %v2344, %v2665
    %v2685 = vmul.f32 %v2340, %v2669
    %v2686 = vmul.f32 %v2353, %v2657
    %v2687 = vmul.f32 %v2349, %v2661
    %v2688 = vmul.f32 %v2345, %v2665
    %v2689 = vmul.f32 %v2341, %v2669
    %s2690 = scalar_lea.vmem [#allocation2], 7
    %v2691 = vld [vmem:[%s2690] ss:$8 sm:$0xf]
    %v2693 = vlaneseq
    %v2694 = vshrl.u32 %v2693, 7
    %v2695 = vsub.s32 0, %v2694
    %v2696 = vrot.slane %v2691, %v2695
    %v2697 = vlaneseq
    %v2698 = vshrl.u32 %v2697, 7
    %v2699 = vsub.s32 1, %v2698
    %v2700 = vrot.slane %v2691, %v2699
    %v2701 = vlaneseq
    %v2702 = vshrl.u32 %v2701, 7
    %v2703 = vsub.s32 2, %v2702
    %v2704 = vrot.slane %v2691, %v2703
    %v2705 = vlaneseq
    %v2706 = vshrl.u32 %v2705, 7
    %v2707 = vsub.s32 3, %v2706
    %v2708 = vrot.slane %v2691, %v2707
    %v2713 = vmul.f32 %v2238, %v2696
    %v2714 = vmul.f32 %v2239, %v2700
    %v2715 = vmul.f32 %v2240, %v2704
    %v2716 = vmul.f32 %v2241, %v2708
    %v2717 = vmul.f32 %v2242, %v2696
    %v2718 = vmul.f32 %v2243, %v2700
    %v2719 = vmul.f32 %v2244, %v2704
    %v2720 = vmul.f32 %v2245, %v2708
    %v2721 = vmul.f32 %v2246, %v2696
    %v2722 = vmul.f32 %v2247, %v2700
    %v2723 = vmul.f32 %v2248, %v2704
    %v2724 = vmul.f32 %v2249, %v2708
    %v2725 = vmul.f32 %v2250, %v2696
    %v2726 = vmul.f32 %v2251, %v2700
    %v2727 = vmul.f32 %v2252, %v2704
    %v2728 = vmul.f32 %v2253, %v2708
    %v2729 = vadd.f32 %v2674, %v2713
    %v2730 = vadd.f32 %v2675, %v2714
    %v2731 = vadd.f32 %v2676, %v2715
    %v2732 = vadd.f32 %v2677, %v2716
    %v2733 = vadd.f32 %v2678, %v2717
    %v2734 = vadd.f32 %v2679, %v2718
    %v2735 = vadd.f32 %v2680, %v2719
    %v2736 = vadd.f32 %v2681, %v2720
    %v2737 = vadd.f32 %v2682, %v2721
    %v2738 = vadd.f32 %v2683, %v2722
    %v2739 = vadd.f32 %v2684, %v2723
    %v2740 = vadd.f32 %v2685, %v2724
    %v2741 = vadd.f32 %v2686, %v2725
    %v2742 = vadd.f32 %v2687, %v2726
    %v2743 = vadd.f32 %v2688, %v2727
    %v2744 = vadd.f32 %v2689, %v2728
    %s2745 = scalar_lea.vmem [#allocation2], 32
    %v2746 = vld [vmem:[%s2745] ss:$8 sm:$0xf]
    %v2748 = vlaneseq
    %v2749 = vshrl.u32 %v2748, 7
    %v2750 = vsub.s32 0, %v2749
    %v2751 = vrot.slane %v2746, %v2750
    %v2752 = vlaneseq
    %v2753 = vshrl.u32 %v2752, 7
    %v2754 = vsub.s32 1, %v2753
    %v2755 = vrot.slane %v2746, %v2754
    %v2756 = vlaneseq
    %v2757 = vshrl.u32 %v2756, 7
    %v2758 = vsub.s32 2, %v2757
    %v2759 = vrot.slane %v2746, %v2758
    %v2760 = vlaneseq
    %v2761 = vshrl.u32 %v2760, 7
    %v2762 = vsub.s32 3, %v2761
    %v2763 = vrot.slane %v2746, %v2762
    %v2768 = vmul.f32 %v2297, %v2751
    %v2769 = vmul.f32 %v2293, %v2755
    %v2770 = vmul.f32 %v2289, %v2759
    %v2771 = vmul.f32 %v2301, %v2763
    %v2772 = vmul.f32 %v2298, %v2751
    %v2773 = vmul.f32 %v2294, %v2755
    %v2774 = vmul.f32 %v2290, %v2759
    %v2775 = vmul.f32 %v2302, %v2763
    %v2776 = vmul.f32 %v2299, %v2751
    %v2777 = vmul.f32 %v2295, %v2755
    %v2778 = vmul.f32 %v2291, %v2759
    %v2779 = vmul.f32 %v2303, %v2763
    %v2780 = vmul.f32 %v2300, %v2751
    %v2781 = vmul.f32 %v2296, %v2755
    %v2782 = vmul.f32 %v2292, %v2759
    %v2783 = vmul.f32 %v2304, %v2763
    %v2784 = vadd.f32 %v2729, %v2768
    %v2785 = vadd.f32 %v2730, %v2769
    %v2786 = vadd.f32 %v2731, %v2770
    %v2787 = vadd.f32 %v2732, %v2771
    %v2788 = vadd.f32 %v2733, %v2772
    %v2789 = vadd.f32 %v2734, %v2773
    %v2790 = vadd.f32 %v2735, %v2774
    %v2791 = vadd.f32 %v2736, %v2775
    %v2792 = vadd.f32 %v2737, %v2776
    %v2793 = vadd.f32 %v2738, %v2777
    %v2794 = vadd.f32 %v2739, %v2778
    %v2795 = vadd.f32 %v2740, %v2779
    %v2796 = vadd.f32 %v2741, %v2780
    %v2797 = vadd.f32 %v2742, %v2781
    %v2798 = vadd.f32 %v2743, %v2782
    %v2799 = vadd.f32 %v2744, %v2783
    %v2800 = vlaneseq
    %v2801 = vshrl.u32 %v2800, 7
    %v2802 = vadd.s32 %v2801, 8
    %v2803 = vadd.s32 %v2801, 16
    %v2804 = vadd.s32 %v2801, 24
    %v2805 = vand.u32 %v2801, 15
    %v2806 = vand.u32 %v2802, 15
    %v2807 = vand.u32 %v2803, 15
    %v2808 = vand.u32 %v2804, 15
    %v2809 = vrot.slane %v2784, 1
    %v2810 = vrot.slane %v2785, 1
    %v2811 = vrot.slane %v2786, 1
    %v2812 = vrot.slane %v2787, 1
    %v2813 = vrot.slane %v2788, 1
    %v2814 = vrot.slane %v2789, 1
    %v2815 = vrot.slane %v2790, 1
    %v2816 = vrot.slane %v2791, 1
    %v2817 = vrot.slane %v2792, 1
    %v2818 = vrot.slane %v2793, 1
    %v2819 = vrot.slane %v2794, 1
    %v2820 = vrot.slane %v2795, 1
    %v2821 = vrot.slane %v2796, 1
    %v2822 = vrot.slane %v2797, 1
    %v2823 = vrot.slane %v2798, 1
    %v2824 = vrot.slane %v2799, 1
    %vm2825 = vcmp.lt.s32.totalorder %v2801, 7
    %v2826 = vsel %vm2825, %v2817, %v2821
    %v2827 = vsel %vm2825, %v2818, %v2822
    %v2828 = vsel %vm2825, %v2819, %v2823
    %v2829 = vsel %vm2825, %v2820, %v2824
    %v2830 = vsel %vm2825, %v2813, %v2817
    %v2831 = vsel %vm2825, %v2814, %v2818
    %v2832 = vsel %vm2825, %v2815, %v2819
    %v2833 = vsel %vm2825, %v2816, %v2820
    %v2834 = vsel %vm2825, %v2809, %v2813
    %v2835 = vsel %vm2825, %v2810, %v2814
    %v2836 = vsel %vm2825, %v2811, %v2815
    %v2837 = vsel %vm2825, %v2812, %v2816
    %v2838 = vsel %vm2825, %v2821, %v2809
    %v2839 = vsel %vm2825, %v2822, %v2810
    %v2840 = vsel %vm2825, %v2823, %v2811
    %v2841 = vsel %vm2825, %v2824, %v2812
    %v2842 = vrot.slane %v2486, 7
    %v2843 = vrot.slane %v2487, 7
    %v2844 = vrot.slane %v2488, 7
    %v2845 = vrot.slane %v2489, 7
    %v2846 = vrot.slane %v2490, 7
    %v2847 = vrot.slane %v2491, 7
    %v2848 = vrot.slane %v2492, 7
    %v2849 = vrot.slane %v2493, 7
    %v2850 = vrot.slane %v2494, 7
    %v2851 = vrot.slane %v2495, 7
    %v2852 = vrot.slane %v2496, 7
    %v2853 = vrot.slane %v2497, 7
    %v2854 = vrot.slane %v2498, 7
    %v2855 = vrot.slane %v2499, 7
    %v2856 = vrot.slane %v2500, 7
    %v2857 = vrot.slane %v2501, 7
    %vm2858 = vcmp.lt.s32.totalorder %v2801, 1
    %v2859 = vsel %vm2858, %v2850, %v2854
    %v2860 = vsel %vm2858, %v2851, %v2855
    %v2861 = vsel %vm2858, %v2852, %v2856
    %v2862 = vsel %vm2858, %v2853, %v2857
    %v2863 = vsel %vm2858, %v2846, %v2850
    %v2864 = vsel %vm2858, %v2847, %v2851
    %v2865 = vsel %vm2858, %v2848, %v2852
    %v2866 = vsel %vm2858, %v2849, %v2853
    %v2867 = vsel %vm2858, %v2842, %v2846
    %v2868 = vsel %vm2858, %v2843, %v2847
    %v2869 = vsel %vm2858, %v2844, %v2848
    %v2870 = vsel %vm2858, %v2845, %v2849
    %v2871 = vsel %vm2858, %v2854, %v2842
    %v2872 = vsel %vm2858, %v2855, %v2843
    %v2873 = vsel %vm2858, %v2856, %v2844
    %v2874 = vsel %vm2858, %v2857, %v2845
    %vm2875 = vcmp.lt.s32.totalorder %v2805, 15
    %vm2876 = vcmp.lt.s32.totalorder %v2806, 15
    %vm2877 = vcmp.lt.s32.totalorder %v2807, 15
    %vm2878 = vcmp.lt.s32.totalorder %v2808, 15
    %v2879 = vsel %vm2875, 1, 0
    %v2880 = vsel %vm2876, 1, 0
    %v2881 = vsel %vm2877, 1, 0
    %v2882 = vsel %vm2878, 1, 0
    %vm2883 = vcmp.eq.s32.totalorder %v2879, 1
    %vm2884 = vcmp.eq.s32.totalorder %v2880, 1
    %vm2885 = vcmp.eq.s32.totalorder %v2881, 1
    %vm2886 = vcmp.eq.s32.totalorder %v2882, 1
    %v2887 = vsel %vm2883, %v2834, 0.0
    %v2888 = vsel %vm2883, %v2835, 0.0
    %v2889 = vsel %vm2883, %v2836, 0.0
    %v2890 = vsel %vm2883, %v2837, 0.0
    %v2891 = vsel %vm2884, %v2830, 0.0
    %v2892 = vsel %vm2884, %v2831, 0.0
    %v2893 = vsel %vm2884, %v2832, 0.0
    %v2894 = vsel %vm2884, %v2833, 0.0
    %v2895 = vsel %vm2885, %v2826, 0.0
    %v2896 = vsel %vm2885, %v2827, 0.0
    %v2897 = vsel %vm2885, %v2828, 0.0
    %v2898 = vsel %vm2885, %v2829, 0.0
    %v2899 = vsel %vm2886, %v2838, 0.0
    %v2900 = vsel %vm2886, %v2839, 0.0
    %v2901 = vsel %vm2886, %v2840, 0.0
    %v2902 = vsel %vm2886, %v2841, 0.0
    %v2903 = vadd.f32 %v2635, %v2887
    %v2904 = vadd.f32 %v2636, %v2888
    %v2905 = vadd.f32 %v2637, %v2889
    %v2906 = vadd.f32 %v2638, %v2890
    %v2907 = vadd.f32 %v2639, %v2891
    %v2908 = vadd.f32 %v2640, %v2892
    %v2909 = vadd.f32 %v2641, %v2893
    %v2910 = vadd.f32 %v2642, %v2894
    %v2911 = vadd.f32 %v2643, %v2895
    %v2912 = vadd.f32 %v2644, %v2896
    %v2913 = vadd.f32 %v2645, %v2897
    %v2914 = vadd.f32 %v2646, %v2898
    %v2915 = vadd.f32 %v2647, %v2899
    %v2916 = vadd.f32 %v2648, %v2900
    %v2917 = vadd.f32 %v2649, %v2901
    %v2918 = vadd.f32 %v2650, %v2902
    %vm2919 = vcmp.gt.s32.totalorder %v2805, 0
    %vm2920 = vcmp.gt.s32.totalorder %v2806, 0
    %vm2921 = vcmp.gt.s32.totalorder %v2807, 0
    %vm2922 = vcmp.gt.s32.totalorder %v2808, 0
    %v2923 = vsel %vm2919, 1, 0
    %v2924 = vsel %vm2920, 1, 0
    %v2925 = vsel %vm2921, 1, 0
    %v2926 = vsel %vm2922, 1, 0
    %vm2927 = vcmp.eq.s32.totalorder %v2923, 1
    %vm2928 = vcmp.eq.s32.totalorder %v2924, 1
    %vm2929 = vcmp.eq.s32.totalorder %v2925, 1
    %vm2930 = vcmp.eq.s32.totalorder %v2926, 1
    %v2931 = vsel %vm2927, %v2871, 0.0
    %v2932 = vsel %vm2927, %v2872, 0.0
    %v2933 = vsel %vm2927, %v2873, 0.0
    %v2934 = vsel %vm2927, %v2874, 0.0
    %v2935 = vsel %vm2928, %v2867, 0.0
    %v2936 = vsel %vm2928, %v2868, 0.0
    %v2937 = vsel %vm2928, %v2869, 0.0
    %v2938 = vsel %vm2928, %v2870, 0.0
    %v2939 = vsel %vm2929, %v2863, 0.0
    %v2940 = vsel %vm2929, %v2864, 0.0
    %v2941 = vsel %vm2929, %v2865, 0.0
    %v2942 = vsel %vm2929, %v2866, 0.0
    %v2943 = vsel %vm2930, %v2859, 0.0
    %v2944 = vsel %vm2930, %v2860, 0.0
    %v2945 = vsel %vm2930, %v2861, 0.0
    %v2946 = vsel %vm2930, %v2862, 0.0
    %v2947 = vadd.f32 %v2903, %v2931
    %v2948 = vadd.f32 %v2904, %v2932
    %v2949 = vadd.f32 %v2905, %v2933
    %v2950 = vadd.f32 %v2906, %v2934
    %v2951 = vadd.f32 %v2907, %v2935
    %v2952 = vadd.f32 %v2908, %v2936
    %v2953 = vadd.f32 %v2909, %v2937
    %v2954 = vadd.f32 %v2910, %v2938
    %v2955 = vadd.f32 %v2911, %v2939
    %v2956 = vadd.f32 %v2912, %v2940
    %v2957 = vadd.f32 %v2913, %v2941
    %v2958 = vadd.f32 %v2914, %v2942
    %v2959 = vadd.f32 %v2915, %v2943
    %v2960 = vadd.f32 %v2916, %v2944
    %v2961 = vadd.f32 %v2917, %v2945
    %v2962 = vadd.f32 %v2918, %v2946
    %s2963 = scalar_lea.vmem [#allocation4], 1
    %v2964 = vld [vmem:[%s2963] ss:$8 sm:$0xf]
    %v2966 = vlaneseq
    %v2967 = vshrl.u32 %v2966, 7
    %v2968 = vsub.s32 0, %v2967
    %v2969 = vrot.slane %v2964, %v2968
    %v2970 = vlaneseq
    %v2971 = vshrl.u32 %v2970, 7
    %v2972 = vsub.s32 1, %v2971
    %v2973 = vrot.slane %v2964, %v2972
    %v2974 = vlaneseq
    %v2975 = vshrl.u32 %v2974, 7
    %v2976 = vsub.s32 2, %v2975
    %v2977 = vrot.slane %v2964, %v2976
    %v2978 = vlaneseq
    %v2979 = vshrl.u32 %v2978, 7
    %v2980 = vsub.s32 3, %v2979
    %v2981 = vrot.slane %v2964, %v2980
    %v2986 = vadd.f32 %v2947, %v2969
    %v2987 = vadd.f32 %v2948, %v2973
    %v2988 = vadd.f32 %v2949, %v2977
    %v2989 = vadd.f32 %v2950, %v2981
    %v2990 = vadd.f32 %v2951, %v2969
    %v2991 = vadd.f32 %v2952, %v2973
    %v2992 = vadd.f32 %v2953, %v2977
    %v2993 = vadd.f32 %v2954, %v2981
    %v2994 = vadd.f32 %v2955, %v2969
    %v2995 = vadd.f32 %v2956, %v2973
    %v2996 = vadd.f32 %v2957, %v2977
    %v2997 = vadd.f32 %v2958, %v2981
    %v2998 = vadd.f32 %v2959, %v2969
    %v2999 = vadd.f32 %v2960, %v2973
    %v3000 = vadd.f32 %v2961, %v2977
    %v3001 = vadd.f32 %v2962, %v2981
    %v3002 = vxor.u32 %v2986, 2147483648
    %v3003 = vxor.u32 %v2987, 2147483648
    %v3004 = vxor.u32 %v2988, 2147483648
    %v3005 = vxor.u32 %v2989, 2147483648
    %v3006 = vxor.u32 %v2990, 2147483648
    %v3007 = vxor.u32 %v2991, 2147483648
    %v3008 = vxor.u32 %v2992, 2147483648
    %v3009 = vxor.u32 %v2993, 2147483648
    %v3010 = vxor.u32 %v2994, 2147483648
    %v3011 = vxor.u32 %v2995, 2147483648
    %v3012 = vxor.u32 %v2996, 2147483648
    %v3013 = vxor.u32 %v2997, 2147483648
    %v3014 = vxor.u32 %v2998, 2147483648
    %v3015 = vxor.u32 %v2999, 2147483648
    %v3016 = vxor.u32 %v3000, 2147483648
    %v3017 = vxor.u32 %v3001, 2147483648
    %v3018 = vmul.f32 %v3002, 1.442695
    %v3019 = vpow.pop %v3018
    %v3020 = vmul.f32 %v3003, 1.442695
    %v3021 = vpow.pop %v3020
    %v3022 = vmul.f32 %v3004, 1.442695
    %v3023 = vpow.pop %v3022
    %v3024 = vmul.f32 %v3005, 1.442695
    %v3025 = vpow.pop %v3024
    %v3026 = vmul.f32 %v3006, 1.442695
    %v3027 = vpow.pop %v3026
    %v3028 = vmul.f32 %v3007, 1.442695
    %v3029 = vpow.pop %v3028
    %v3030 = vmul.f32 %v3008, 1.442695
    %v3031 = vpow.pop %v3030
    %v3032 = vmul.f32 %v3009, 1.442695
    %v3033 = vpow.pop %v3032
    %v3034 = vmul.f32 %v3010, 1.442695
    %v3035 = vpow.pop %v3034
    %v3036 = vmul.f32 %v3011, 1.442695
    %v3037 = vpow.pop %v3036
    %v3038 = vmul.f32 %v3012, 1.442695
    %v3039 = vpow.pop %v3038
    %v3040 = vmul.f32 %v3013, 1.442695
    %v3041 = vpow.pop %v3040
    %v3042 = vmul.f32 %v3014, 1.442695
    %v3043 = vpow.pop %v3042
    %v3044 = vmul.f32 %v3015, 1.442695
    %v3045 = vpow.pop %v3044
    %v3046 = vmul.f32 %v3016, 1.442695
    %v3047 = vpow.pop %v3046
    %v3048 = vmul.f32 %v3017, 1.442695
    %v3049 = vpow.pop %v3048
    %v3050 = vadd.f32 %v3019, 1.0
    %v3051 = vadd.f32 %v3021, 1.0
    %v3052 = vadd.f32 %v3023, 1.0
    %v3053 = vadd.f32 %v3025, 1.0
    %v3054 = vadd.f32 %v3027, 1.0
    %v3055 = vadd.f32 %v3029, 1.0
    %v3056 = vadd.f32 %v3031, 1.0
    %v3057 = vadd.f32 %v3033, 1.0
    %v3058 = vadd.f32 %v3035, 1.0
    %v3059 = vadd.f32 %v3037, 1.0
    %v3060 = vadd.f32 %v3039, 1.0
    %v3061 = vadd.f32 %v3041, 1.0
    %v3062 = vadd.f32 %v3043, 1.0
    %v3063 = vadd.f32 %v3045, 1.0
    %v3064 = vadd.f32 %v3047, 1.0
    %v3065 = vadd.f32 %v3049, 1.0
    %v3066 = vrcp.pop %v3050
    %v3067 = vmul.f32 1.0, %v3066
    %v3068 = vrcp.pop %v3051
    %v3069 = vmul.f32 1.0, %v3068
    %v3070 = vrcp.pop %v3052
    %v3071 = vmul.f32 1.0, %v3070
    %v3072 = vrcp.pop %v3053
    %v3073 = vmul.f32 1.0, %v3072
    %v3074 = vrcp.pop %v3054
    %v3075 = vmul.f32 1.0, %v3074
    %v3076 = vrcp.pop %v3055
    %v3077 = vmul.f32 1.0, %v3076
    %v3078 = vrcp.pop %v3056
    %v3079 = vmul.f32 1.0, %v3078
    %v3080 = vrcp.pop %v3057
    %v3081 = vmul.f32 1.0, %v3080
    %v3082 = vrcp.pop %v3058
    %v3083 = vmul.f32 1.0, %v3082
    %v3084 = vrcp.pop %v3059
    %v3085 = vmul.f32 1.0, %v3084
    %v3086 = vrcp.pop %v3060
    %v3087 = vmul.f32 1.0, %v3086
    %v3088 = vrcp.pop %v3061
    %v3089 = vmul.f32 1.0, %v3088
    %v3090 = vrcp.pop %v3062
    %v3091 = vmul.f32 1.0, %v3090
    %v3092 = vrcp.pop %v3063
    %v3093 = vmul.f32 1.0, %v3092
    %v3094 = vrcp.pop %v3064
    %v3095 = vmul.f32 1.0, %v3094
    %v3096 = vrcp.pop %v3065
    %v3097 = vmul.f32 1.0, %v3096
    %v3098 = vmul.f32 %v2986, %v3067
    %v3099 = vmul.f32 %v2987, %v3069
    %v3100 = vmul.f32 %v2988, %v3071
    %v3101 = vmul.f32 %v2989, %v3073
    %v3102 = vmul.f32 %v2990, %v3075
    %v3103 = vmul.f32 %v2991, %v3077
    %v3104 = vmul.f32 %v2992, %v3079
    %v3105 = vmul.f32 %v2993, %v3081
    %v3106 = vmul.f32 %v2994, %v3083
    %v3107 = vmul.f32 %v2995, %v3085
    %v3108 = vmul.f32 %v2996, %v3087
    %v3109 = vmul.f32 %v2997, %v3089
    %v3110 = vmul.f32 %v2998, %v3091
    %v3111 = vmul.f32 %v2999, %v3093
    %v3112 = vmul.f32 %v3000, %v3095
    %v3113 = vmul.f32 %v3001, %v3097
    %v3114 = vadd.f32 %v3098, %v3102
    %v3115 = vrot.slane %v3114, 4
    %v3116 = vadd.f32 %v3114, %v3115
    %v3117 = vrot.slane %v3116, 2
    %v3118 = vadd.f32 %v3116, %v3117
    %v3119 = vrot.slane %v3118, 1
    %v3120 = vadd.f32 %v3118, %v3119
    %v3121 = vadd.f32 %v3099, %v3103
    %v3122 = vrot.slane %v3121, 4
    %v3123 = vadd.f32 %v3121, %v3122
    %v3124 = vrot.slane %v3123, 2
    %v3125 = vadd.f32 %v3123, %v3124
    %v3126 = vrot.slane %v3125, 1
    %v3127 = vadd.f32 %v3125, %v3126
    %v3128 = vadd.f32 %v3100, %v3104
    %v3129 = vrot.slane %v3128, 4
    %v3130 = vadd.f32 %v3128, %v3129
    %v3131 = vrot.slane %v3130, 2
    %v3132 = vadd.f32 %v3130, %v3131
    %v3133 = vrot.slane %v3132, 1
    %v3134 = vadd.f32 %v3132, %v3133
    %v3135 = vadd.f32 %v3101, %v3105
    %v3136 = vrot.slane %v3135, 4
    %v3137 = vadd.f32 %v3135, %v3136
    %v3138 = vrot.slane %v3137, 2
    %v3139 = vadd.f32 %v3137, %v3138
    %v3140 = vrot.slane %v3139, 1
    %v3141 = vadd.f32 %v3139, %v3140
    %v3142 = vadd.f32 %v3106, %v3110
    %v3143 = vrot.slane %v3142, 4
    %v3144 = vadd.f32 %v3142, %v3143
    %v3145 = vrot.slane %v3144, 2
    %v3146 = vadd.f32 %v3144, %v3145
    %v3147 = vrot.slane %v3146, 1
    %v3148 = vadd.f32 %v3146, %v3147
    %v3149 = vadd.f32 %v3107, %v3111
    %v3150 = vrot.slane %v3149, 4
    %v3151 = vadd.f32 %v3149, %v3150
    %v3152 = vrot.slane %v3151, 2
    %v3153 = vadd.f32 %v3151, %v3152
    %v3154 = vrot.slane %v3153, 1
    %v3155 = vadd.f32 %v3153, %v3154
    %v3156 = vadd.f32 %v3108, %v3112
    %v3157 = vrot.slane %v3156, 4
    %v3158 = vadd.f32 %v3156, %v3157
    %v3159 = vrot.slane %v3158, 2
    %v3160 = vadd.f32 %v3158, %v3159
    %v3161 = vrot.slane %v3160, 1
    %v3162 = vadd.f32 %v3160, %v3161
    %v3163 = vadd.f32 %v3109, %v3113
    %v3164 = vrot.slane %v3163, 4
    %v3165 = vadd.f32 %v3163, %v3164
    %v3166 = vrot.slane %v3165, 2
    %v3167 = vadd.f32 %v3165, %v3166
    %v3168 = vrot.slane %v3167, 1
    %v3169 = vadd.f32 %v3167, %v3168
    %vm3170 = vcmask 1040384
    %v3171 = vsel %vm3170, %v3120, %v3148
    %v3172 = vsel %vm3170, %v3127, %v3155
    %v3173 = vsel %vm3170, %v3134, %v3162
    %v3174 = vsel %vm3170, %v3141, %v3169
    %v3175 = vadd.f32 %v3171, %v3173
    %v3176 = vadd.f32 %v3172, %v3174
    %v3177 = vadd.f32 %v3175, %v3176
    %3178 = vrot.lane.b32.xlu0 %v3177, 64
    %v3179 = vpop.permute.xlu0 %3178
    %v3180 = vadd.f32 %v3177, %v3179
    %3181 = vrot.lane.b32.xlu0 %v3180, 32
    %v3182 = vpop.permute.xlu0 %3181
    %v3183 = vadd.f32 %v3180, %v3182
    %s3184 = scalar_lea.vmem [#allocation4], 3
    %v3185 = vld [vmem:[%s3184] ss:$8 sm:$0xf]
    %v3187 = vlaneseq
    %v3188 = vshrl.u32 %v3187, 7
    %v3189 = vsub.s32 0, %v3188
    %v3190 = vrot.slane %v3185, %v3189
    %v3191 = vlaneseq
    %v3192 = vshrl.u32 %v3191, 7
    %v3193 = vsub.s32 1, %v3192
    %v3194 = vrot.slane %v3185, %v3193
    %v3195 = vlaneseq
    %v3196 = vshrl.u32 %v3195, 7
    %v3197 = vsub.s32 2, %v3196
    %v3198 = vrot.slane %v3185, %v3197
    %v3199 = vlaneseq
    %v3200 = vshrl.u32 %v3199, 7
    %v3201 = vsub.s32 3, %v3200
    %v3202 = vrot.slane %v3185, %v3201
    %v3207 = vmul.f32 %v3183, %v3190
    %v3208 = vmul.f32 %v3183, %v3194
    %v3209 = vmul.f32 %v3183, %v3198
    %v3210 = vmul.f32 %v3183, %v3202
    %s3211 = scalar_lea.vmem [#allocation4], 5
    %v3212 = vld [vmem:[%s3211] ss:$8 sm:$0xf]
    %v3214 = vlaneseq
    %v3215 = vshrl.u32 %v3214, 7
    %v3216 = vsub.s32 0, %v3215
    %v3217 = vrot.slane %v3212, %v3216
    %v3218 = vlaneseq
    %v3219 = vshrl.u32 %v3218, 7
    %v3220 = vsub.s32 1, %v3219
    %v3221 = vrot.slane %v3212, %v3220
    %v3222 = vlaneseq
    %v3223 = vshrl.u32 %v3222, 7
    %v3224 = vsub.s32 2, %v3223
    %v3225 = vrot.slane %v3212, %v3224
    %v3226 = vlaneseq
    %v3227 = vshrl.u32 %v3226, 7
    %v3228 = vsub.s32 3, %v3227
    %v3229 = vrot.slane %v3212, %v3228
    %v3234 = vadd.f32 %v3207, %v3217
    %v3235 = vadd.f32 %v3208, %v3221
    %v3236 = vadd.f32 %v3209, %v3225
    %v3237 = vadd.f32 %v3210, %v3229
    %vm3238 = vcmask 1041408
    %v3239 = vsel %vm3238, %v3234, 0.0
    %v3240 = vsel %vm3238, %v3235, 0.0
    %v3241 = vadd.f32 %v3239, %v3240
    %v3242 = vsel %vm3238, %v3236, 0.0
    %v3243 = vadd.f32 %v3241, %v3242
    %v3244 = vsel %vm3238, %v3237, 0.0
    %v3245 = vadd.f32 %v3243, %v3244
    %3246 = vadd.xlane.f32.xlu0 %v3245
    %v3247 = vpop.xlane.xlu0 %3246
    %v3248 = vxor.u32 %v3247, 2147483648
    %v3249 = vmul.f32 %v3248, 1.442695
    %v3250 = vpow.pop %v3249
    %v3251 = vadd.f32 %v3250, 1.0
    %v3252 = vrcp.pop %v3251
    %v3253 = vmul.f32 1.0, %v3252
    %v3254 = vmul.f32 %v3247, %v3253
    %s3255 = scalar_lea.vmem [#allocation4], 4
    %v3256 = vld [vmem:[%s3255] ss:$8 sm:$0xf]
    %v3258 = vlaneseq
    %v3259 = vshrl.u32 %v3258, 7
    %v3260 = vsub.s32 0, %v3259
    %v3261 = vrot.slane %v3256, %v3260
    %v3262 = vlaneseq
    %v3263 = vshrl.u32 %v3262, 7
    %v3264 = vsub.s32 1, %v3263
    %v3265 = vrot.slane %v3256, %v3264
    %v3266 = vlaneseq
    %v3267 = vshrl.u32 %v3266, 7
    %v3268 = vsub.s32 2, %v3267
    %v3269 = vrot.slane %v3256, %v3268
    %v3270 = vlaneseq
    %v3271 = vshrl.u32 %v3270, 7
    %v3272 = vsub.s32 3, %v3271
    %v3273 = vrot.slane %v3256, %v3272
    %v3278 = vmul.f32 %v3183, %v3261
    %v3279 = vmul.f32 %v3183, %v3265
    %v3280 = vmul.f32 %v3183, %v3269
    %v3281 = vmul.f32 %v3183, %v3273
    %s3282 = scalar_lea.vmem [#allocation4], 6
    %v3283 = vld [vmem:[%s3282] ss:$8 sm:$0xf]
    %v3285 = vlaneseq
    %v3286 = vshrl.u32 %v3285, 7
    %v3287 = vsub.s32 0, %v3286
    %v3288 = vrot.slane %v3283, %v3287
    %v3289 = vlaneseq
    %v3290 = vshrl.u32 %v3289, 7
    %v3291 = vsub.s32 1, %v3290
    %v3292 = vrot.slane %v3283, %v3291
    %v3293 = vlaneseq
    %v3294 = vshrl.u32 %v3293, 7
    %v3295 = vsub.s32 2, %v3294
    %v3296 = vrot.slane %v3283, %v3295
    %v3297 = vlaneseq
    %v3298 = vshrl.u32 %v3297, 7
    %v3299 = vsub.s32 3, %v3298
    %v3300 = vrot.slane %v3283, %v3299
    %v3305 = vadd.f32 %v3278, %v3288
    %v3306 = vadd.f32 %v3279, %v3292
    %v3307 = vadd.f32 %v3280, %v3296
    %v3308 = vadd.f32 %v3281, %v3300
    %v3309 = vsel %vm3238, %v3305, 0.0
    %v3310 = vsel %vm3238, %v3306, 0.0
    %v3311 = vadd.f32 %v3309, %v3310
    %v3312 = vsel %vm3238, %v3307, 0.0
    %v3313 = vadd.f32 %v3311, %v3312
    %v3314 = vsel %vm3238, %v3308, 0.0
    %v3315 = vadd.f32 %v3313, %v3314
    %3316 = vadd.xlane.f32.xlu0 %v3315
    %v3317 = vpop.xlane.xlu0 %3316
    %v3318 = vxor.u32 %v3317, 2147483648
    %v3319 = vmul.f32 %v3318, 1.442695
    %v3320 = vpow.pop %v3319
    %v3321 = vadd.f32 %v3320, 1.0
    %v3322 = vrcp.pop %v3321
    %v3323 = vmul.f32 1.0, %v3322
    %v3324 = vmul.f32 %v3317, %v3323
    %s3325 = scalar_lea.vmem [#allocation4], 33
    %v3326 = vld [vmem:[%s3325] ss:$8 sm:$0xf]
    %s3327 = scalar_lea.vmem [#allocation4], 7
    %v3328 = vld [vmem:[%s3327] ss:$8 sm:$0xf]
    %v3330 = vlaneseq
    %v3331 = vshrl.u32 %v3330, 7
    %v3332 = vsub.s32 0, %v3331
    %v3333 = vrot.slane %v3328, %v3332
    %v3334 = vlaneseq
    %v3335 = vshrl.u32 %v3334, 7
    %v3336 = vsub.s32 1, %v3335
    %v3337 = vrot.slane %v3328, %v3336
    %v3338 = vlaneseq
    %v3339 = vshrl.u32 %v3338, 7
    %v3340 = vsub.s32 2, %v3339
    %v3341 = vrot.slane %v3328, %v3340
    %v3342 = vlaneseq
    %v3343 = vshrl.u32 %v3342, 7
    %v3344 = vsub.s32 3, %v3343
    %v3345 = vrot.slane %v3328, %v3344
    %v3350 = vmul.f32 %v3254, %v3333
    %v3351 = vmul.f32 %v3254, %v3337
    %v3352 = vmul.f32 %v3254, %v3341
    %v3353 = vmul.f32 %v3254, %v3345
    %v3355 = vlaneseq
    %v3356 = vshrl.u32 %v3355, 7
    %v3357 = vsub.s32 0, %v3356
    %v3358 = vrot.slane %v3326, %v3357
    %v3359 = vlaneseq
    %v3360 = vshrl.u32 %v3359, 7
    %v3361 = vsub.s32 1, %v3360
    %v3362 = vrot.slane %v3326, %v3361
    %v3363 = vlaneseq
    %v3364 = vshrl.u32 %v3363, 7
    %v3365 = vsub.s32 2, %v3364
    %v3366 = vrot.slane %v3326, %v3365
    %v3367 = vlaneseq
    %v3368 = vshrl.u32 %v3367, 7
    %v3369 = vsub.s32 3, %v3368
    %v3370 = vrot.slane %v3326, %v3369
    %v3375 = vadd.f32 %v3358, %v3350
    %v3376 = vadd.f32 %v3362, %v3351
    %v3377 = vadd.f32 %v3366, %v3352
    %v3378 = vadd.f32 %v3370, %v3353
    %s3379 = scalar_lea.vmem [#allocation4], 32
    %v3380 = vld [vmem:[%s3379] ss:$8 sm:$0xf]
    %v3382 = vlaneseq
    %v3383 = vshrl.u32 %v3382, 7
    %v3384 = vsub.s32 0, %v3383
    %v3385 = vrot.slane %v3380, %v3384
    %v3386 = vlaneseq
    %v3387 = vshrl.u32 %v3386, 7
    %v3388 = vsub.s32 1, %v3387
    %v3389 = vrot.slane %v3380, %v3388
    %v3390 = vlaneseq
    %v3391 = vshrl.u32 %v3390, 7
    %v3392 = vsub.s32 2, %v3391
    %v3393 = vrot.slane %v3380, %v3392
    %v3394 = vlaneseq
    %v3395 = vshrl.u32 %v3394, 7
    %v3396 = vsub.s32 3, %v3395
    %v3397 = vrot.slane %v3380, %v3396
    %v3402 = vmul.f32 %v3324, %v3385
    %v3403 = vmul.f32 %v3324, %v3389
    %v3404 = vmul.f32 %v3324, %v3393
    %v3405 = vmul.f32 %v3324, %v3397
    %v3406 = vadd.f32 %v3375, %v3402
    %v3407 = vadd.f32 %v3376, %v3403
    %v3408 = vadd.f32 %v3377, %v3404
    %v3409 = vadd.f32 %v3378, %v3405
    %v3410 = vxor.u32 %v3406, 2147483648
    %v3411 = vxor.u32 %v3407, 2147483648
    %v3412 = vxor.u32 %v3408, 2147483648
    %v3413 = vxor.u32 %v3409, 2147483648
    %v3414 = vmul.f32 %v3410, 1.442695
    %v3415 = vpow.pop %v3414
    %v3416 = vmul.f32 %v3411, 1.442695
    %v3417 = vpow.pop %v3416
    %v3418 = vmul.f32 %v3412, 1.442695
    %v3419 = vpow.pop %v3418
    %v3420 = vmul.f32 %v3413, 1.442695
    %v3421 = vpow.pop %v3420
    %v3422 = vadd.f32 %v3415, 1.0
    %v3423 = vadd.f32 %v3417, 1.0
    %v3424 = vadd.f32 %v3419, 1.0
    %v3425 = vadd.f32 %v3421, 1.0
    %v3426 = vrcp.pop %v3422
    %v3427 = vmul.f32 1.0, %v3426
    %v3428 = vrcp.pop %v3423
    %v3429 = vmul.f32 1.0, %v3428
    %v3430 = vrcp.pop %v3424
    %v3431 = vmul.f32 1.0, %v3430
    %v3432 = vrcp.pop %v3425
    %v3433 = vmul.f32 1.0, %v3432
    %v3434 = vlaneseq
    %v3435 = vshrl.u32 %v3434, 7
    %v3436 = vsub.s32 0, %v3435
    %v3437 = vrot.slane %v3427, %v3436
    %v3438 = vlaneseq
    %v3439 = vshrl.u32 %v3438, 7
    %v3440 = vsub.s32 0, %v3439
    %v3441 = vrot.slane %v3429, %v3440
    %v3442 = vlaneseq
    %v3443 = vshrl.u32 %v3442, 7
    %v3444 = vsub.s32 0, %v3443
    %v3445 = vrot.slane %v3431, %v3444
    %v3446 = vlaneseq
    %v3447 = vshrl.u32 %v3446, 7
    %v3448 = vsub.s32 0, %v3447
    %v3449 = vrot.slane %v3433, %v3448
    %v3450 = vlaneseq
    %v3451 = vshrl.u32 %v3450, 7
    %v3452 = vsub.s32 1, %v3451
    %v3453 = vrot.slane %v3427, %v3452
    %v3454 = vlaneseq
    %v3455 = vshrl.u32 %v3454, 7
    %v3456 = vsub.s32 1, %v3455
    %v3457 = vrot.slane %v3429, %v3456
    %v3458 = vlaneseq
    %v3459 = vshrl.u32 %v3458, 7
    %v3460 = vsub.s32 1, %v3459
    %v3461 = vrot.slane %v3431, %v3460
    %v3462 = vlaneseq
    %v3463 = vshrl.u32 %v3462, 7
    %v3464 = vsub.s32 1, %v3463
    %v3465 = vrot.slane %v3433, %v3464
    %v3466 = vmul.f32 %v3098, %v3437
    %v3467 = vmul.f32 %v3099, %v3441
    %v3468 = vmul.f32 %v3100, %v3445
    %v3469 = vmul.f32 %v3101, %v3449
    %v3470 = vmul.f32 %v3102, %v3437
    %v3471 = vmul.f32 %v3103, %v3441
    %v3472 = vmul.f32 %v3104, %v3445
    %v3473 = vmul.f32 %v3105, %v3449
    %v3474 = vmul.f32 %v3106, %v3453
    %v3475 = vmul.f32 %v3107, %v3457
    %v3476 = vmul.f32 %v3108, %v3461
    %v3477 = vmul.f32 %v3109, %v3465
    %v3478 = vmul.f32 %v3110, %v3453
    %v3479 = vmul.f32 %v3111, %v3457
    %v3480 = vmul.f32 %v3112, %v3461
    %v3481 = vmul.f32 %v3113, %v3465
    %v3482 = vld [vmem:[%s2] sm:$0xff]
    %v3483 = vld [vmem:[%s2 + $0x8] sm:$0xff]
    %v3484 = vld [vmem:[%s2 + $0x10] sm:$0xff]
    %v3485 = vld [vmem:[%s2 + $0x18] sm:$0xff]
    %v3486 = vld [vmem:[%s2 + $0x20] sm:$0xff]
    %v3487 = vld [vmem:[%s2 + $0x28] sm:$0xff]
    %v3488 = vld [vmem:[%s2 + $0x30] sm:$0xff]
    %v3489 = vld [vmem:[%s2 + $0x38] sm:$0xff]
    %v3490 = vld [vmem:[%s2 + $0x40] sm:$0xff]
    %v3491 = vld [vmem:[%s2 + $0x48] sm:$0xff]
    %v3492 = vld [vmem:[%s2 + $0x50] sm:$0xff]
    %v3493 = vld [vmem:[%s2 + $0x58] sm:$0xff]
    %v3494 = vld [vmem:[%s2 + $0x60] sm:$0xff]
    %v3495 = vld [vmem:[%s2 + $0x68] sm:$0xff]
    %v3496 = vld [vmem:[%s2 + $0x70] sm:$0xff]
    %v3497 = vld [vmem:[%s2 + $0x78] sm:$0xff]
    %v3498 = vld [vmem:[%s2 + $0x80] sm:$0xff]
    %v3499 = vld [vmem:[%s2 + $0x88] sm:$0xff]
    %v3500 = vld [vmem:[%s2 + $0x90] sm:$0xff]
    %v3501 = vld [vmem:[%s2 + $0x98] sm:$0xff]
    %v3502 = vld [vmem:[%s2 + $0xa0] sm:$0xff]
    %v3503 = vld [vmem:[%s2 + $0xa8] sm:$0xff]
    %v3504 = vld [vmem:[%s2 + $0xb0] sm:$0xff]
    %v3505 = vld [vmem:[%s2 + $0xb8] sm:$0xff]
    %v3506 = vld [vmem:[%s2 + $0xc0] sm:$0xff]
    %v3507 = vld [vmem:[%s2 + $0xc8] sm:$0xff]
    %v3508 = vld [vmem:[%s2 + $0xd0] sm:$0xff]
    %v3509 = vld [vmem:[%s2 + $0xd8] sm:$0xff]
    %v3510 = vld [vmem:[%s2 + $0xe0] sm:$0xff]
    %v3511 = vld [vmem:[%s2 + $0xe8] sm:$0xff]
    %v3512 = vld [vmem:[%s2 + $0xf0] sm:$0xff]
    %v3513 = vld [vmem:[%s2 + $0xf8] sm:$0xff]
    %v3514 = vld [vmem:[%s2 + $0x100] sm:$0xff]
    %v3515 = vld [vmem:[%s2 + $0x108] sm:$0xff]
    %v3516 = vld [vmem:[%s2 + $0x110] sm:$0xff]
    %v3517 = vld [vmem:[%s2 + $0x118] sm:$0xff]
    %v3518 = vld [vmem:[%s2 + $0x120] sm:$0xff]
    %v3519 = vld [vmem:[%s2 + $0x128] sm:$0xff]
    %v3520 = vld [vmem:[%s2 + $0x130] sm:$0xff]
    %v3521 = vld [vmem:[%s2 + $0x138] sm:$0xff]
    %v3522 = vld [vmem:[%s2 + $0x140] sm:$0xff]
    %v3523 = vld [vmem:[%s2 + $0x148] sm:$0xff]
    %v3524 = vld [vmem:[%s2 + $0x150] sm:$0xff]
    %v3525 = vld [vmem:[%s2 + $0x158] sm:$0xff]
    %v3526 = vld [vmem:[%s2 + $0x160] sm:$0xff]
    %v3527 = vld [vmem:[%s2 + $0x168] sm:$0xff]
    %v3528 = vld [vmem:[%s2 + $0x170] sm:$0xff]
    %v3529 = vld [vmem:[%s2 + $0x178] sm:$0xff]
    %v3530 = vld [vmem:[%s2 + $0x180] sm:$0xff]
    %v3531 = vld [vmem:[%s2 + $0x188] sm:$0xff]
    %v3532 = vld [vmem:[%s2 + $0x190] sm:$0xff]
    %v3533 = vld [vmem:[%s2 + $0x198] sm:$0xff]
    %v3534 = vld [vmem:[%s2 + $0x1a0] sm:$0xff]
    %v3535 = vld [vmem:[%s2 + $0x1a8] sm:$0xff]
    %v3536 = vld [vmem:[%s2 + $0x1b0] sm:$0xff]
    %v3537 = vld [vmem:[%s2 + $0x1b8] sm:$0xff]
    %v3538 = vld [vmem:[%s2 + $0x1c0] sm:$0xff]
    %v3539 = vld [vmem:[%s2 + $0x1c8] sm:$0xff]
    %v3540 = vld [vmem:[%s2 + $0x1d0] sm:$0xff]
    %v3541 = vld [vmem:[%s2 + $0x1d8] sm:$0xff]
    %v3542 = vld [vmem:[%s2 + $0x1e0] sm:$0xff]
    %v3543 = vld [vmem:[%s2 + $0x1e8] sm:$0xff]
    %v3544 = vld [vmem:[%s2 + $0x1f0] sm:$0xff]
    %v3545 = vld [vmem:[%s2 + $0x1f8] sm:$0xff]
    %v3546 = vld [vmem:[#allocation4 + $0x2] ss:$0 sm:$0xff]
    %3547 = vmatprep.subr.mxu0 0.0
    %v3548 = vand.u32 %v3482, 4294901760
    %3549 = vmatpush1.msra.mxu0 %v3548
    %3550 = vmatprep.subr.mxu0 0.0
    %v3551 = vand.u32 %v3483, 4294901760
    %3552 = vmatpush1.msra.mxu0 %v3551
    %3553 = vmatprep.subr.mxu0 0.0
    %v3554 = vand.u32 %v3484, 4294901760
    %3555 = vmatpush1.msra.mxu0 %v3554
    %3556 = vmatprep.subr.mxu0 0.0
    %v3557 = vand.u32 %v3485, 4294901760
    %3558 = vmatpush1.msra.mxu0 %v3557
    %3559 = vmatprep.subr.mxu0 0.0
    %v3560 = vand.u32 %v3486, 4294901760
    %3561 = vmatpush1.msra.mxu0 %v3560
    %3562 = vmatprep.subr.mxu0 0.0
    %v3563 = vand.u32 %v3487, 4294901760
    %3564 = vmatpush1.msra.mxu0 %v3563
    %3565 = vmatprep.subr.mxu0 0.0
    %v3566 = vand.u32 %v3488, 4294901760
    %3567 = vmatpush1.msra.mxu0 %v3566
    %3568 = vmatprep.subr.mxu0 0.0
    %v3569 = vand.u32 %v3489, 4294901760
    %3570 = vmatpush1.msra.mxu0 %v3569
    %3571 = vmatprep.subr.mxu0 0.0
    %v3572 = vand.u32 %v3490, 4294901760
    %3573 = vmatpush1.msra.mxu0 %v3572
    %3574 = vmatprep.subr.mxu0 0.0
    %v3575 = vand.u32 %v3491, 4294901760
    %3576 = vmatpush1.msra.mxu0 %v3575
    %3577 = vmatprep.subr.mxu0 0.0
    %v3578 = vand.u32 %v3492, 4294901760
    %3579 = vmatpush1.msra.mxu0 %v3578
    %3580 = vmatprep.subr.mxu0 0.0
    %v3581 = vand.u32 %v3493, 4294901760
    %3582 = vmatpush1.msra.mxu0 %v3581
    %3583 = vmatprep.subr.mxu0 0.0
    %v3584 = vand.u32 %v3494, 4294901760
    %3585 = vmatpush1.msra.mxu0 %v3584
    %3586 = vmatprep.subr.mxu0 0.0
    %v3587 = vand.u32 %v3495, 4294901760
    %3588 = vmatpush1.msra.mxu0 %v3587
    %3589 = vmatprep.subr.mxu0 0.0
    %v3590 = vand.u32 %v3496, 4294901760
    %3591 = vmatpush1.msra.mxu0 %v3590
    %3592 = vmatprep.subr.mxu0 0.0
    %v3593 = vand.u32 %v3497, 4294901760
    %3594 = vmatpush1.msra.mxu0 %v3593
    %3595 = vmatprep.subr.mxu0 0.0
    %v3596 = vand.u32 %v3498, 4294901760
    %3597 = vmatpush1.msra.mxu0 %v3596
    %3598 = vmatprep.subr.mxu0 0.0
    %v3599 = vand.u32 %v3499, 4294901760
    %3600 = vmatpush1.msra.mxu0 %v3599
    %3601 = vmatprep.subr.mxu0 0.0
    %v3602 = vand.u32 %v3500, 4294901760
    %3603 = vmatpush1.msra.mxu0 %v3602
    %3604 = vmatprep.subr.mxu0 0.0
    %v3605 = vand.u32 %v3501, 4294901760
    %3606 = vmatpush1.msra.mxu0 %v3605
    %3607 = vmatprep.subr.mxu0 0.0
    %v3608 = vand.u32 %v3502, 4294901760
    %3609 = vmatpush1.msra.mxu0 %v3608
    %3610 = vmatprep.subr.mxu0 0.0
    %v3611 = vand.u32 %v3503, 4294901760
    %3612 = vmatpush1.msra.mxu0 %v3611
    %3613 = vmatprep.subr.mxu0 0.0
    %v3614 = vand.u32 %v3504, 4294901760
    %3615 = vmatpush1.msra.mxu0 %v3614
    %3616 = vmatprep.subr.mxu0 0.0
    %v3617 = vand.u32 %v3505, 4294901760
    %3618 = vmatpush1.msra.mxu0 %v3617
    %3619 = vmatprep.subr.mxu0 0.0
    %v3620 = vand.u32 %v3506, 4294901760
    %3621 = vmatpush1.msra.mxu0 %v3620
    %3622 = vmatprep.subr.mxu0 0.0
    %v3623 = vand.u32 %v3507, 4294901760
    %3624 = vmatpush1.msra.mxu0 %v3623
    %3625 = vmatprep.subr.mxu0 0.0
    %v3626 = vand.u32 %v3508, 4294901760
    %3627 = vmatpush1.msra.mxu0 %v3626
    %3628 = vmatprep.subr.mxu0 0.0
    %v3629 = vand.u32 %v3509, 4294901760
    %3630 = vmatpush1.msra.mxu0 %v3629
    %3631 = vmatprep.subr.mxu0 0.0
    %v3632 = vand.u32 %v3510, 4294901760
    %3633 = vmatpush1.msra.mxu0 %v3632
    %3634 = vmatprep.subr.mxu0 0.0
    %v3635 = vand.u32 %v3511, 4294901760
    %3636 = vmatpush1.msra.mxu0 %v3635
    %3637 = vmatprep.subr.mxu0 0.0
    %v3638 = vand.u32 %v3512, 4294901760
    %3639 = vmatpush1.msra.mxu0 %v3638
    %3640 = vmatprep.subr.mxu0 0.0
    %v3641 = vand.u32 %v3513, 4294901760
    %3642 = vmatpush1.msra.mxu0 %v3641
    %v3643 = vand.u32 %v3467, 4294901760
    %v3644 = vsub.f32 %v3467, %v3643
    %v3645 = vand.u32 %v3644, 4294901760
    %v3646 = vsub.f32 %v3644, %v3645
    %v3647 = vand.u32 %v3646, 4294901760
    %3648 = vmatprep.mubr.f32.mxu0 %v3647
    %v3649 = vand.u32 %v3466, 4294901760
    %v3650 = vsub.f32 %v3466, %v3649
    %v3651 = vand.u32 %v3650, 4294901760
    %v3652 = vsub.f32 %v3650, %v3651
    %v3653 = vand.u32 %v3652, 4294901760
    %3654 = vmatmul.mubr.f32.gmra.mrb[0].mxu0 %v3653
    %v3655 = vpop.f32.mrb[0].mxu0
    %v3656 = vadd.f32 %v3546, %v3655
    %v3657 = vpop.f32.mrb[0].mxu0
    %v3658 = vand.u32 %v3471, 4294901760
    %v3659 = vsub.f32 %v3471, %v3658
    %v3660 = vand.u32 %v3659, 4294901760
    %v3661 = vsub.f32 %v3659, %v3660
    %v3662 = vand.u32 %v3661, 4294901760
    %3663 = vmatprep.mubr.f32.mxu0 %v3662
    %v3664 = vand.u32 %v3470, 4294901760
    %v3665 = vsub.f32 %v3470, %v3664
    %v3666 = vand.u32 %v3665, 4294901760
    %v3667 = vsub.f32 %v3665, %v3666
    %v3668 = vand.u32 %v3667, 4294901760
    %3669 = vmatmul.mubr.f32.gmra.mrb[0].mxu0 %v3668
    %v3670 = vpop.f32.mrb[0].mxu0
    %v3671 = vadd.f32 %v3546, %v3670
    %v3672 = vpop.f32.mrb[0].mxu0
    %v3673 = vand.u32 %v3475, 4294901760
    %v3674 = vsub.f32 %v3475, %v3673
    %v3675 = vand.u32 %v3674, 4294901760
    %v3676 = vsub.f32 %v3674, %v3675
    %v3677 = vand.u32 %v3676, 4294901760
    %3678 = vmatprep.mubr.f32.mxu0 %v3677
    %v3679 = vand.u32 %v3474, 4294901760
    %v3680 = vsub.f32 %v3474, %v3679
    %v3681 = vand.u32 %v3680, 4294901760
    %v3682 = vsub.f32 %v3680, %v3681
    %v3683 = vand.u32 %v3682, 4294901760
    %3684 = vmatmul.mubr.f32.gmra.mrb[0].mxu0 %v3683
    %v3685 = vpop.f32.mrb[0].mxu0
    %v3686 = vadd.f32 %v3546, %v3685
    %v3687 = vpop.f32.mrb[0].mxu0
    %v3688 = vand.u32 %v3479, 4294901760
    %v3689 = vsub.f32 %v3479, %v3688
    %v3690 = vand.u32 %v3689, 4294901760
    %v3691 = vsub.f32 %v3689, %v3690
    %v3692 = vand.u32 %v3691, 4294901760
    %3693 = vmatprep.mubr.f32.mxu0 %v3692
    %v3694 = vand.u32 %v3478, 4294901760
    %v3695 = vsub.f32 %v3478, %v3694
    %v3696 = vand.u32 %v3695, 4294901760
    %v3697 = vsub.f32 %v3695, %v3696
    %v3698 = vand.u32 %v3697, 4294901760
    %3699 = vmatmul.mubr.f32.gmra.mrb[0].mxu0 %v3698
    %v3700 = vpop.f32.mrb[0].mxu0
    %v3701 = vadd.f32 %v3546, %v3700
    %v3702 = vpop.f32.mrb[0].mxu0
    %3703 = vdwg.mxu0
    %3704 = vmatprep.subr.mxu0 0.0
    %v3705 = vand.u32 %v3482, 4294901760
    %v3706 = vsub.f32 %v3482, %v3705
    %v3707 = vand.u32 %v3706, 4294901760
    %v3708 = vsub.f32 %v3706, %v3707
    %v3709 = vand.u32 %v3708, 4294901760
    %3710 = vmatpush1.msra.mxu0 %v3709
    %3711 = vmatprep.subr.mxu0 0.0
    %v3712 = vand.u32 %v3483, 4294901760
    %v3713 = vsub.f32 %v3483, %v3712
    %v3714 = vand.u32 %v3713, 4294901760
    %v3715 = vsub.f32 %v3713, %v3714
    %v3716 = vand.u32 %v3715, 4294901760
    %3717 = vmatpush1.msra.mxu0 %v3716
    %3718 = vmatprep.subr.mxu0 0.0
    %v3719 = vand.u32 %v3484, 4294901760
    %v3720 = vsub.f32 %v3484, %v3719
    %v3721 = vand.u32 %v3720, 4294901760
    %v3722 = vsub.f32 %v3720, %v3721
    %v3723 = vand.u32 %v3722, 4294901760
    %3724 = vmatpush1.msra.mxu0 %v3723
    %3725 = vmatprep.subr.mxu0 0.0
    %v3726 = vand.u32 %v3485, 4294901760
    %v3727 = vsub.f32 %v3485, %v3726
    %v3728 = vand.u32 %v3727, 4294901760
    %v3729 = vsub.f32 %v3727, %v3728
    %v3730 = vand.u32 %v3729, 4294901760
    %3731 = vmatpush1.msra.mxu0 %v3730
    %3732 = vmatprep.subr.mxu0 0.0
    %v3733 = vand.u32 %v3486, 4294901760
    %v3734 = vsub.f32 %v3486, %v3733
    %v3735 = vand.u32 %v3734, 4294901760
    %v3736 = vsub.f32 %v3734, %v3735
    %v3737 = vand.u32 %v3736, 4294901760
    %3738 = vmatpush1.msra.mxu0 %v3737
    %3739 = vmatprep.subr.mxu0 0.0
    %v3740 = vand.u32 %v3487, 4294901760
    %v3741 = vsub.f32 %v3487, %v3740
    %v3742 = vand.u32 %v3741, 4294901760
    %v3743 = vsub.f32 %v3741, %v3742
    %v3744 = vand.u32 %v3743, 4294901760
    %3745 = vmatpush1.msra.mxu0 %v3744
    %3746 = vmatprep.subr.mxu0 0.0
    %v3747 = vand.u32 %v3488, 4294901760
    %v3748 = vsub.f32 %v3488, %v3747
    %v3749 = vand.u32 %v3748, 4294901760
    %v3750 = vsub.f32 %v3748, %v3749
    %v3751 = vand.u32 %v3750, 4294901760
    %3752 = vmatpush1.msra.mxu0 %v3751
    %3753 = vmatprep.subr.mxu0 0.0
    %v3754 = vand.u32 %v3489, 4294901760
    %v3755 = vsub.f32 %v3489, %v3754
    %v3756 = vand.u32 %v3755, 4294901760
    %v3757 = vsub.f32 %v3755, %v3756
    %v3758 = vand.u32 %v3757, 4294901760
    %3759 = vmatpush1.msra.mxu0 %v3758
    %3760 = vmatprep.subr.mxu0 0.0
    %v3761 = vand.u32 %v3490, 4294901760
    %v3762 = vsub.f32 %v3490, %v3761
    %v3763 = vand.u32 %v3762, 4294901760
    %v3764 = vsub.f32 %v3762, %v3763
    %v3765 = vand.u32 %v3764, 4294901760
    %3766 = vmatpush1.msra.mxu0 %v3765
    %3767 = vmatprep.subr.mxu0 0.0
    %v3768 = vand.u32 %v3491, 4294901760
    %v3769 = vsub.f32 %v3491, %v3768
    %v3770 = vand.u32 %v3769, 4294901760
    %v3771 = vsub.f32 %v3769, %v3770
    %v3772 = vand.u32 %v3771, 4294901760
    %3773 = vmatpush1.msra.mxu0 %v3772
    %3774 = vmatprep.subr.mxu0 0.0
    %v3775 = vand.u32 %v3492, 4294901760
    %v3776 = vsub.f32 %v3492, %v3775
    %v3777 = vand.u32 %v3776, 4294901760
    %v3778 = vsub.f32 %v3776, %v3777
    %v3779 = vand.u32 %v3778, 4294901760
    %3780 = vmatpush1.msra.mxu0 %v3779
    %3781 = vmatprep.subr.mxu0 0.0
    %v3782 = vand.u32 %v3493, 4294901760
    %v3783 = vsub.f32 %v3493, %v3782
    %v3784 = vand.u32 %v3783, 4294901760
    %v3785 = vsub.f32 %v3783, %v3784
    %v3786 = vand.u32 %v3785, 4294901760
    %3787 = vmatpush1.msra.mxu0 %v3786
    %3788 = vmatprep.subr.mxu0 0.0
    %v3789 = vand.u32 %v3494, 4294901760
    %v3790 = vsub.f32 %v3494, %v3789
    %v3791 = vand.u32 %v3790, 4294901760
    %v3792 = vsub.f32 %v3790, %v3791
    %v3793 = vand.u32 %v3792, 4294901760
    %3794 = vmatpush1.msra.mxu0 %v3793
    %3795 = vmatprep.subr.mxu0 0.0
    %v3796 = vand.u32 %v3495, 4294901760
    %v3797 = vsub.f32 %v3495, %v3796
    %v3798 = vand.u32 %v3797, 4294901760
    %v3799 = vsub.f32 %v3797, %v3798
    %v3800 = vand.u32 %v3799, 4294901760
    %3801 = vmatpush1.msra.mxu0 %v3800
    %3802 = vmatprep.subr.mxu0 0.0
    %v3803 = vand.u32 %v3496, 4294901760
    %v3804 = vsub.f32 %v3496, %v3803
    %v3805 = vand.u32 %v3804, 4294901760
    %v3806 = vsub.f32 %v3804, %v3805
    %v3807 = vand.u32 %v3806, 4294901760
    %3808 = vmatpush1.msra.mxu0 %v3807
    %3809 = vmatprep.subr.mxu0 0.0
    %v3810 = vand.u32 %v3497, 4294901760
    %v3811 = vsub.f32 %v3497, %v3810
    %v3812 = vand.u32 %v3811, 4294901760
    %v3813 = vsub.f32 %v3811, %v3812
    %v3814 = vand.u32 %v3813, 4294901760
    %3815 = vmatpush1.msra.mxu0 %v3814
    %3816 = vmatprep.subr.mxu0 0.0
    %v3817 = vand.u32 %v3498, 4294901760
    %v3818 = vsub.f32 %v3498, %v3817
    %v3819 = vand.u32 %v3818, 4294901760
    %v3820 = vsub.f32 %v3818, %v3819
    %v3821 = vand.u32 %v3820, 4294901760
    %3822 = vmatpush1.msra.mxu0 %v3821
    %3823 = vmatprep.subr.mxu0 0.0
    %v3824 = vand.u32 %v3499, 4294901760
    %v3825 = vsub.f32 %v3499, %v3824
    %v3826 = vand.u32 %v3825, 4294901760
    %v3827 = vsub.f32 %v3825, %v3826
    %v3828 = vand.u32 %v3827, 4294901760
    %3829 = vmatpush1.msra.mxu0 %v3828
    %3830 = vmatprep.subr.mxu0 0.0
    %v3831 = vand.u32 %v3500, 4294901760
    %v3832 = vsub.f32 %v3500, %v3831
    %v3833 = vand.u32 %v3832, 4294901760
    %v3834 = vsub.f32 %v3832, %v3833
    %v3835 = vand.u32 %v3834, 4294901760
    %3836 = vmatpush1.msra.mxu0 %v3835
    %3837 = vmatprep.subr.mxu0 0.0
    %v3838 = vand.u32 %v3501, 4294901760
    %v3839 = vsub.f32 %v3501, %v3838
    %v3840 = vand.u32 %v3839, 4294901760
    %v3841 = vsub.f32 %v3839, %v3840
    %v3842 = vand.u32 %v3841, 4294901760
    %3843 = vmatpush1.msra.mxu0 %v3842
    %3844 = vmatprep.subr.mxu0 0.0
    %v3845 = vand.u32 %v3502, 4294901760
    %v3846 = vsub.f32 %v3502, %v3845
    %v3847 = vand.u32 %v3846, 4294901760
    %v3848 = vsub.f32 %v3846, %v3847
    %v3849 = vand.u32 %v3848, 4294901760
    %3850 = vmatpush1.msra.mxu0 %v3849
    %3851 = vmatprep.subr.mxu0 0.0
    %v3852 = vand.u32 %v3503, 4294901760
    %v3853 = vsub.f32 %v3503, %v3852
    %v3854 = vand.u32 %v3853, 4294901760
    %v3855 = vsub.f32 %v3853, %v3854
    %v3856 = vand.u32 %v3855, 4294901760
    %3857 = vmatpush1.msra.mxu0 %v3856
    %3858 = vmatprep.subr.mxu0 0.0
    %v3859 = vand.u32 %v3504, 4294901760
    %v3860 = vsub.f32 %v3504, %v3859
    %v3861 = vand.u32 %v3860, 4294901760
    %v3862 = vsub.f32 %v3860, %v3861
    %v3863 = vand.u32 %v3862, 4294901760
    %3864 = vmatpush1.msra.mxu0 %v3863
    %3865 = vmatprep.subr.mxu0 0.0
    %v3866 = vand.u32 %v3505, 4294901760
    %v3867 = vsub.f32 %v3505, %v3866
    %v3868 = vand.u32 %v3867, 4294901760
    %v3869 = vsub.f32 %v3867, %v3868
    %v3870 = vand.u32 %v3869, 4294901760
    %3871 = vmatpush1.msra.mxu0 %v3870
    %3872 = vmatprep.subr.mxu0 0.0
    %v3873 = vand.u32 %v3506, 4294901760
    %v3874 = vsub.f32 %v3506, %v3873
    %v3875 = vand.u32 %v3874, 4294901760
    %v3876 = vsub.f32 %v3874, %v3875
    %v3877 = vand.u32 %v3876, 4294901760
    %3878 = vmatpush1.msra.mxu0 %v3877
    %3879 = vmatprep.subr.mxu0 0.0
    %v3880 = vand.u32 %v3507, 4294901760
    %v3881 = vsub.f32 %v3507, %v3880
    %v3882 = vand.u32 %v3881, 4294901760
    %v3883 = vsub.f32 %v3881, %v3882
    %v3884 = vand.u32 %v3883, 4294901760
    %3885 = vmatpush1.msra.mxu0 %v3884
    %3886 = vmatprep.subr.mxu0 0.0
    %v3887 = vand.u32 %v3508, 4294901760
    %v3888 = vsub.f32 %v3508, %v3887
    %v3889 = vand.u32 %v3888, 4294901760
    %v3890 = vsub.f32 %v3888, %v3889
    %v3891 = vand.u32 %v3890, 4294901760
    %3892 = vmatpush1.msra.mxu0 %v3891
    %3893 = vmatprep.subr.mxu0 0.0
    %v3894 = vand.u32 %v3509, 4294901760
    %v3895 = vsub.f32 %v3509, %v3894
    %v3896 = vand.u32 %v3895, 4294901760
    %v3897 = vsub.f32 %v3895, %v3896
    %v3898 = vand.u32 %v3897, 4294901760
    %3899 = vmatpush1.msra.mxu0 %v3898
    %3900 = vmatprep.subr.mxu0 0.0
    %v3901 = vand.u32 %v3510, 4294901760
    %v3902 = vsub.f32 %v3510, %v3901
    %v3903 = vand.u32 %v3902, 4294901760
    %v3904 = vsub.f32 %v3902, %v3903
    %v3905 = vand.u32 %v3904, 4294901760
    %3906 = vmatpush1.msra.mxu0 %v3905
    %3907 = vmatprep.subr.mxu0 0.0
    %v3908 = vand.u32 %v3511, 4294901760
    %v3909 = vsub.f32 %v3511, %v3908
    %v3910 = vand.u32 %v3909, 4294901760
    %v3911 = vsub.f32 %v3909, %v3910
    %v3912 = vand.u32 %v3911, 4294901760
    %3913 = vmatpush1.msra.mxu0 %v3912
    %3914 = vmatprep.subr.mxu0 0.0
    %v3915 = vand.u32 %v3512, 4294901760
    %v3916 = vsub.f32 %v3512, %v3915
    %v3917 = vand.u32 %v3916, 4294901760
    %v3918 = vsub.f32 %v3916, %v3917
    %v3919 = vand.u32 %v3918, 4294901760
    %3920 = vmatpush1.msra.mxu0 %v3919
    %3921 = vmatprep.subr.mxu0 0.0
    %v3922 = vand.u32 %v3513, 4294901760
    %v3923 = vsub.f32 %v3513, %v3922
    %v3924 = vand.u32 %v3923, 4294901760
    %v3925 = vsub.f32 %v3923, %v3924
    %v3926 = vand.u32 %v3925, 4294901760
    %3927 = vmatpush1.msra.mxu0 %v3926
    %v3928 = vand.u32 %v3467, 4294901760
    %3929 = vmatprep.mubr.f32.mxu0 %v3928
    %v3930 = vand.u32 %v3466, 4294901760
    %3931 = vmatmul.mubr.f32.gmra.mrb[0].mxu0 %v3930
    %v3932 = vpop.f32.mrb[0].mxu0
    %v3933 = vadd.f32 %v3656, %v3932
    %v3934 = vpop.f32.mrb[0].mxu0
    %v3935 = vand.u32 %v3471, 4294901760
    %3936 = vmatprep.mubr.f32.mxu0 %v3935
    %v3937 = vand.u32 %v3470, 4294901760
    %3938 = vmatmul.mubr.f32.gmra.mrb[0].mxu0 %v3937
    %v3939 = vpop.f32.mrb[0].mxu0
    %v3940 = vadd.f32 %v3671, %v3939
    %v3941 = vpop.f32.mrb[0].mxu0
    %v3942 = vand.u32 %v3475, 4294901760
    %3943 = vmatprep.mubr.f32.mxu0 %v3942
    %v3944 = vand.u32 %v3474, 4294901760
    %3945 = vmatmul.mubr.f32.gmra.mrb[0].mxu0 %v3944
    %v3946 = vpop.f32.mrb[0].mxu0
    %v3947 = vadd.f32 %v3686, %v3946
    %v3948 = vpop.f32.mrb[0].mxu0
    %v3949 = vand.u32 %v3479, 4294901760
    %3950 = vmatprep.mubr.f32.mxu0 %v3949
    %v3951 = vand.u32 %v3478, 4294901760
    %3952 = vmatmul.mubr.f32.gmra.mrb[0].mxu0 %v3951
    %v3953 = vpop.f32.mrb[0].mxu0
    %v3954 = vadd.f32 %v3701, %v3953
    %v3955 = vpop.f32.mrb[0].mxu0
    %3956 = vdwg.mxu0
    %3957 = vmatprep.subr.mxu0 0.0
    %v3958 = vand.u32 %v3482, 4294901760
    %v3959 = vsub.f32 %v3482, %v3958
    %3960 = vmatpush1.msra.mxu0 %v3959
    %3961 = vmatprep.subr.mxu0 0.0
    %v3962 = vand.u32 %v3483, 4294901760
    %v3963 = vsub.f32 %v3483, %v3962
    %3964 = vmatpush1.msra.mxu0 %v3963
    %3965 = vmatprep.subr.mxu0 0.0
    %v3966 = vand.u32 %v3484, 4294901760
    %v3967 = vsub.f32 %v3484, %v3966
    %3968 = vmatpush1.msra.mxu0 %v3967
    %3969 = vmatprep.subr.mxu0 0.0
    %v3970 = vand.u32 %v3485, 4294901760
    %v3971 = vsub.f32 %v3485, %v3970
    %3972 = vmatpush1.msra.mxu0 %v3971
    %3973 = vmatprep.subr.mxu0 0.0
    %v3974 = vand.u32 %v3486, 4294901760
    %v3975 = vsub.f32 %v3486, %v3974
    %3976 = vmatpush1.msra.mxu0 %v3975
    %3977 = vmatprep.subr.mxu0 0.0
    %v3978 = vand.u32 %v3487, 4294901760
    %v3979 = vsub.f32 %v3487, %v3978
    %3980 = vmatpush1.msra.mxu0 %v3979
    %3981 = vmatprep.subr.mxu0 0.0
    %v3982 = vand.u32 %v3488, 4294901760
    %v3983 = vsub.f32 %v3488, %v3982
    %3984 = vmatpush1.msra.mxu0 %v3983
    %3985 = vmatprep.subr.mxu0 0.0
    %v3986 = vand.u32 %v3489, 4294901760
    %v3987 = vsub.f32 %v3489, %v3986
    %3988 = vmatpush1.msra.mxu0 %v3987
    %3989 = vmatprep.subr.mxu0 0.0
    %v3990 = vand.u32 %v3490, 4294901760
    %v3991 = vsub.f32 %v3490, %v3990
    %3992 = vmatpush1.msra.mxu0 %v3991
    %3993 = vmatprep.subr.mxu0 0.0
    %v3994 = vand.u32 %v3491, 4294901760
    %v3995 = vsub.f32 %v3491, %v3994
    %3996 = vmatpush1.msra.mxu0 %v3995
    %3997 = vmatprep.subr.mxu0 0.0
    %v3998 = vand.u32 %v3492, 4294901760
    %v3999 = vsub.f32 %v3492, %v3998
    %4000 = vmatpush1.msra.mxu0 %v3999
    %4001 = vmatprep.subr.mxu0 0.0
    %v4002 = vand.u32 %v3493, 4294901760
    %v4003 = vsub.f32 %v3493, %v4002
    %4004 = vmatpush1.msra.mxu0 %v4003
    %4005 = vmatprep.subr.mxu0 0.0
    %v4006 = vand.u32 %v3494, 4294901760
    %v4007 = vsub.f32 %v3494, %v4006
    %4008 = vmatpush1.msra.mxu0 %v4007
    %4009 = vmatprep.subr.mxu0 0.0
    %v4010 = vand.u32 %v3495, 4294901760
    %v4011 = vsub.f32 %v3495, %v4010
    %4012 = vmatpush1.msra.mxu0 %v4011
    %4013 = vmatprep.subr.mxu0 0.0
    %v4014 = vand.u32 %v3496, 4294901760
    %v4015 = vsub.f32 %v3496, %v4014
    %4016 = vmatpush1.msra.mxu0 %v4015
    %4017 = vmatprep.subr.mxu0 0.0
    %v4018 = vand.u32 %v3497, 4294901760
    %v4019 = vsub.f32 %v3497, %v4018
    %4020 = vmatpush1.msra.mxu0 %v4019
    %4021 = vmatprep.subr.mxu0 0.0
    %v4022 = vand.u32 %v3498, 4294901760
    %v4023 = vsub.f32 %v3498, %v4022
    %4024 = vmatpush1.msra.mxu0 %v4023
    %4025 = vmatprep.subr.mxu0 0.0
    %v4026 = vand.u32 %v3499, 4294901760
    %v4027 = vsub.f32 %v3499, %v4026
    %4028 = vmatpush1.msra.mxu0 %v4027
    %4029 = vmatprep.subr.mxu0 0.0
    %v4030 = vand.u32 %v3500, 4294901760
    %v4031 = vsub.f32 %v3500, %v4030
    %4032 = vmatpush1.msra.mxu0 %v4031
    %4033 = vmatprep.subr.mxu0 0.0
    %v4034 = vand.u32 %v3501, 4294901760
    %v4035 = vsub.f32 %v3501, %v4034
    %4036 = vmatpush1.msra.mxu0 %v4035
    %4037 = vmatprep.subr.mxu0 0.0
    %v4038 = vand.u32 %v3502, 4294901760
    %v4039 = vsub.f32 %v3502, %v4038
    %4040 = vmatpush1.msra.mxu0 %v4039
    %4041 = vmatprep.subr.mxu0 0.0
    %v4042 = vand.u32 %v3503, 4294901760
    %v4043 = vsub.f32 %v3503, %v4042
    %4044 = vmatpush1.msra.mxu0 %v4043
    %4045 = vmatprep.subr.mxu0 0.0
    %v4046 = vand.u32 %v3504, 4294901760
    %v4047 = vsub.f32 %v3504, %v4046
    %4048 = vmatpush1.msra.mxu0 %v4047
    %4049 = vmatprep.subr.mxu0 0.0
    %v4050 = vand.u32 %v3505, 4294901760
    %v4051 = vsub.f32 %v3505, %v4050
    %4052 = vmatpush1.msra.mxu0 %v4051
    %4053 = vmatprep.subr.mxu0 0.0
    %v4054 = vand.u32 %v3506, 4294901760
    %v4055 = vsub.f32 %v3506, %v4054
    %4056 = vmatpush1.msra.mxu0 %v4055
    %4057 = vmatprep.subr.mxu0 0.0
    %v4058 = vand.u32 %v3507, 4294901760
    %v4059 = vsub.f32 %v3507, %v4058
    %4060 = vmatpush1.msra.mxu0 %v4059
    %4061 = vmatprep.subr.mxu0 0.0
    %v4062 = vand.u32 %v3508, 4294901760
    %v4063 = vsub.f32 %v3508, %v4062
    %4064 = vmatpush1.msra.mxu0 %v4063
    %4065 = vmatprep.subr.mxu0 0.0
    %v4066 = vand.u32 %v3509, 4294901760
    %v4067 = vsub.f32 %v3509, %v4066
    %4068 = vmatpush1.msra.mxu0 %v4067
    %4069 = vmatprep.subr.mxu0 0.0
    %v4070 = vand.u32 %v3510, 4294901760
    %v4071 = vsub.f32 %v3510, %v4070
    %4072 = vmatpush1.msra.mxu0 %v4071
    %4073 = vmatprep.subr.mxu0 0.0
    %v4074 = vand.u32 %v3511, 4294901760
    %v4075 = vsub.f32 %v3511, %v4074
    %4076 = vmatpush1.msra.mxu0 %v4075
    %4077 = vmatprep.subr.mxu0 0.0
    %v4078 = vand.u32 %v3512, 4294901760
    %v4079 = vsub.f32 %v3512, %v4078
    %4080 = vmatpush1.msra.mxu0 %v4079
    %4081 = vmatprep.subr.mxu0 0.0
    %v4082 = vand.u32 %v3513, 4294901760
    %v4083 = vsub.f32 %v3513, %v4082
    %4084 = vmatpush1.msra.mxu0 %v4083
    %v4085 = vand.u32 %v3467, 4294901760
    %v4086 = vsub.f32 %v3467, %v4085
    %4087 = vmatprep.mubr.f32.mxu0 %v4086
    %v4088 = vand.u32 %v3466, 4294901760
    %v4089 = vsub.f32 %v3466, %v4088
    %4090 = vmatmul.mubr.f32.gmra.mrb[0].mxu0 %v4089
    %v4091 = vpop.f32.mrb[0].mxu0
    %v4092 = vadd.f32 %v3933, %v4091
    %v4093 = vpop.f32.mrb[0].mxu0
    %v4094 = vand.u32 %v3471, 4294901760
    %v4095 = vsub.f32 %v3471, %v4094
    %4096 = vmatprep.mubr.f32.mxu0 %v4095
    %v4097 = vand.u32 %v3470, 4294901760
    %v4098 = vsub.f32 %v3470, %v4097
    %4099 = vmatmul.mubr.f32.gmra.mrb[0].mxu0 %v4098
    %v4100 = vpop.f32.mrb[0].mxu0
    %v4101 = vadd.f32 %v3940, %v4100
    %v4102 = vpop.f32.mrb[0].mxu0
    %v4103 = vand.u32 %v3475, 4294901760
    %v4104 = vsub.f32 %v3475, %v4103
    %4105 = vmatprep.mubr.f32.mxu0 %v4104
    %v4106 = vand.u32 %v3474, 4294901760
    %v4107 = vsub.f32 %v3474, %v4106
    %4108 = vmatmul.mubr.f32.gmra.mrb[0].mxu0 %v4107
    %v4109 = vpop.f32.mrb[0].mxu0
    %v4110 = vadd.f32 %v3947, %v4109
    %v4111 = vpop.f32.mrb[0].mxu0
    %v4112 = vand.u32 %v3479, 4294901760
    %v4113 = vsub.f32 %v3479, %v4112
    %4114 = vmatprep.mubr.f32.mxu0 %v4113
    %v4115 = vand.u32 %v3478, 4294901760
    %v4116 = vsub.f32 %v3478, %v4115
    %4117 = vmatmul.mubr.f32.gmra.mrb[0].mxu0 %v4116
    %v4118 = vpop.f32.mrb[0].mxu0
    %v4119 = vadd.f32 %v3954, %v4118
    %v4120 = vpop.f32.mrb[0].mxu0
    %4121 = vdwg.mxu0
    %4122 = vmatprep.subr.mxu0 0.0
    %v4123 = vand.u32 %v3482, 4294901760
    %4124 = vmatpush1.msra.mxu0 %v4123
    %4125 = vmatprep.subr.mxu0 0.0
    %v4126 = vand.u32 %v3483, 4294901760
    %4127 = vmatpush1.msra.mxu0 %v4126
    %4128 = vmatprep.subr.mxu0 0.0
    %v4129 = vand.u32 %v3484, 4294901760
    %4130 = vmatpush1.msra.mxu0 %v4129
    %4131 = vmatprep.subr.mxu0 0.0
    %v4132 = vand.u32 %v3485, 4294901760
    %4133 = vmatpush1.msra.mxu0 %v4132
    %4134 = vmatprep.subr.mxu0 0.0
    %v4135 = vand.u32 %v3486, 4294901760
    %4136 = vmatpush1.msra.mxu0 %v4135
    %4137 = vmatprep.subr.mxu0 0.0
    %v4138 = vand.u32 %v3487, 4294901760
    %4139 = vmatpush1.msra.mxu0 %v4138
    %4140 = vmatprep.subr.mxu0 0.0
    %v4141 = vand.u32 %v3488, 4294901760
    %4142 = vmatpush1.msra.mxu0 %v4141
    %4143 = vmatprep.subr.mxu0 0.0
    %v4144 = vand.u32 %v3489, 4294901760
    %4145 = vmatpush1.msra.mxu0 %v4144
    %4146 = vmatprep.subr.mxu0 0.0
    %v4147 = vand.u32 %v3490, 4294901760
    %4148 = vmatpush1.msra.mxu0 %v4147
    %4149 = vmatprep.subr.mxu0 0.0
    %v4150 = vand.u32 %v3491, 4294901760
    %4151 = vmatpush1.msra.mxu0 %v4150
    %4152 = vmatprep.subr.mxu0 0.0
    %v4153 = vand.u32 %v3492, 4294901760
    %4154 = vmatpush1.msra.mxu0 %v4153
    %4155 = vmatprep.subr.mxu0 0.0
    %v4156 = vand.u32 %v3493, 4294901760
    %4157 = vmatpush1.msra.mxu0 %v4156
    %4158 = vmatprep.subr.mxu0 0.0
    %v4159 = vand.u32 %v3494, 4294901760
    %4160 = vmatpush1.msra.mxu0 %v4159
    %4161 = vmatprep.subr.mxu0 0.0
    %v4162 = vand.u32 %v3495, 4294901760
    %4163 = vmatpush1.msra.mxu0 %v4162
    %4164 = vmatprep.subr.mxu0 0.0
    %v4165 = vand.u32 %v3496, 4294901760
    %4166 = vmatpush1.msra.mxu0 %v4165
    %4167 = vmatprep.subr.mxu0 0.0
    %v4168 = vand.u32 %v3497, 4294901760
    %4169 = vmatpush1.msra.mxu0 %v4168
    %4170 = vmatprep.subr.mxu0 0.0
    %v4171 = vand.u32 %v3498, 4294901760
    %4172 = vmatpush1.msra.mxu0 %v4171
    %4173 = vmatprep.subr.mxu0 0.0
    %v4174 = vand.u32 %v3499, 4294901760
    %4175 = vmatpush1.msra.mxu0 %v4174
    %4176 = vmatprep.subr.mxu0 0.0
    %v4177 = vand.u32 %v3500, 4294901760
    %4178 = vmatpush1.msra.mxu0 %v4177
    %4179 = vmatprep.subr.mxu0 0.0
    %v4180 = vand.u32 %v3501, 4294901760
    %4181 = vmatpush1.msra.mxu0 %v4180
    %4182 = vmatprep.subr.mxu0 0.0
    %v4183 = vand.u32 %v3502, 4294901760
    %4184 = vmatpush1.msra.mxu0 %v4183
    %4185 = vmatprep.subr.mxu0 0.0
    %v4186 = vand.u32 %v3503, 4294901760
    %4187 = vmatpush1.msra.mxu0 %v4186
    %4188 = vmatprep.subr.mxu0 0.0
    %v4189 = vand.u32 %v3504, 4294901760
    %4190 = vmatpush1.msra.mxu0 %v4189
    %4191 = vmatprep.subr.mxu0 0.0
    %v4192 = vand.u32 %v3505, 4294901760
    %4193 = vmatpush1.msra.mxu0 %v4192
    %4194 = vmatprep.subr.mxu0 0.0
    %v4195 = vand.u32 %v3506, 4294901760
    %4196 = vmatpush1.msra.mxu0 %v4195
    %4197 = vmatprep.subr.mxu0 0.0
    %v4198 = vand.u32 %v3507, 4294901760
    %4199 = vmatpush1.msra.mxu0 %v4198
    %4200 = vmatprep.subr.mxu0 0.0
    %v4201 = vand.u32 %v3508, 4294901760
    %4202 = vmatpush1.msra.mxu0 %v4201
    %4203 = vmatprep.subr.mxu0 0.0
    %v4204 = vand.u32 %v3509, 4294901760
    %4205 = vmatpush1.msra.mxu0 %v4204
    %4206 = vmatprep.subr.mxu0 0.0
    %v4207 = vand.u32 %v3510, 4294901760
    %4208 = vmatpush1.msra.mxu0 %v4207
    %4209 = vmatprep.subr.mxu0 0.0
    %v4210 = vand.u32 %v3511, 4294901760
    %4211 = vmatpush1.msra.mxu0 %v4210
    %4212 = vmatprep.subr.mxu0 0.0
    %v4213 = vand.u32 %v3512, 4294901760
    %4214 = vmatpush1.msra.mxu0 %v4213
    %4215 = vmatprep.subr.mxu0 0.0
    %v4216 = vand.u32 %v3513, 4294901760
    %4217 = vmatpush1.msra.mxu0 %v4216
    %v4218 = vand.u32 %v3467, 4294901760
    %v4219 = vsub.f32 %v3467, %v4218
    %v4220 = vand.u32 %v4219, 4294901760
    %4221 = vmatprep.mubr.f32.mxu0 %v4220
    %v4222 = vand.u32 %v3466, 4294901760
    %v4223 = vsub.f32 %v3466, %v4222
    %v4224 = vand.u32 %v4223, 4294901760
    %4225 = vmatmul.mubr.f32.gmra.mrb[0].mxu0 %v4224
    %v4226 = vpop.f32.mrb[0].mxu0
    %v4227 = vadd.f32 %v4092, %v4226
    %v4228 = vpop.f32.mrb[0].mxu0
    %v4229 = vand.u32 %v3471, 4294901760
    %v4230 = vsub.f32 %v3471, %v4229
    %v4231 = vand.u32 %v4230, 4294901760
    %4232 = vmatprep.mubr.f32.mxu0 %v4231
    %v4233 = vand.u32 %v3470, 4294901760
    %v4234 = vsub.f32 %v3470, %v4233
    %v4235 = vand.u32 %v4234, 4294901760
    %4236 = vmatmul.mubr.f32.gmra.mrb[0].mxu0 %v4235
    %v4237 = vpop.f32.mrb[0].mxu0
    %v4238 = vadd.f32 %v4101, %v4237
    %v4239 = vpop.f32.mrb[0].mxu0
    %v4240 = vand.u32 %v3475, 4294901760
    %v4241 = vsub.f32 %v3475, %v4240
    %v4242 = vand.u32 %v4241, 4294901760
    %4243 = vmatprep.mubr.f32.mxu0 %v4242
    %v4244 = vand.u32 %v3474, 4294901760
    %v4245 = vsub.f32 %v3474, %v4244
    %v4246 = vand.u32 %v4245, 4294901760
    %4247 = vmatmul.mubr.f32.gmra.mrb[0].mxu0 %v4246
    %v4248 = vpop.f32.mrb[0].mxu0
    %v4249 = vadd.f32 %v4110, %v4248
    %v4250 = vpop.f32.mrb[0].mxu0
    %v4251 = vand.u32 %v3479, 4294901760
    %v4252 = vsub.f32 %v3479, %v4251
    %v4253 = vand.u32 %v4252, 4294901760
    %4254 = vmatprep.mubr.f32.mxu0 %v4253
    %v4255 = vand.u32 %v3478, 4294901760
    %v4256 = vsub.f32 %v3478, %v4255
    %v4257 = vand.u32 %v4256, 4294901760
    %4258 = vmatmul.mubr.f32.gmra.mrb[0].mxu0 %v4257
    %v4259 = vpop.f32.mrb[0].mxu0
    %v4260 = vadd.f32 %v4119, %v4259
    %v4261 = vpop.f32.mrb[0].mxu0
    %4262 = vdwg.mxu0
    %4263 = vmatprep.subr.mxu0 0.0
    %v4264 = vand.u32 %v3482, 4294901760
    %v4265 = vsub.f32 %v3482, %v4264
    %v4266 = vand.u32 %v4265, 4294901760
    %4267 = vmatpush1.msra.mxu0 %v4266
    %4268 = vmatprep.subr.mxu0 0.0
    %v4269 = vand.u32 %v3483, 4294901760
    %v4270 = vsub.f32 %v3483, %v4269
    %v4271 = vand.u32 %v4270, 4294901760
    %4272 = vmatpush1.msra.mxu0 %v4271
    %4273 = vmatprep.subr.mxu0 0.0
    %v4274 = vand.u32 %v3484, 4294901760
    %v4275 = vsub.f32 %v3484, %v4274
    %v4276 = vand.u32 %v4275, 4294901760
    %4277 = vmatpush1.msra.mxu0 %v4276
    %4278 = vmatprep.subr.mxu0 0.0
    %v4279 = vand.u32 %v3485, 4294901760
    %v4280 = vsub.f32 %v3485, %v4279
    %v4281 = vand.u32 %v4280, 4294901760
    %4282 = vmatpush1.msra.mxu0 %v4281
    %4283 = vmatprep.subr.mxu0 0.0
    %v4284 = vand.u32 %v3486, 4294901760
    %v4285 = vsub.f32 %v3486, %v4284
    %v4286 = vand.u32 %v4285, 4294901760
    %4287 = vmatpush1.msra.mxu0 %v4286
    %4288 = vmatprep.subr.mxu0 0.0
    %v4289 = vand.u32 %v3487, 4294901760
    %v4290 = vsub.f32 %v3487, %v4289
    %v4291 = vand.u32 %v4290, 4294901760
    %4292 = vmatpush1.msra.mxu0 %v4291
    %4293 = vmatprep.subr.mxu0 0.0
    %v4294 = vand.u32 %v3488, 4294901760
    %v4295 = vsub.f32 %v3488, %v4294
    %v4296 = vand.u32 %v4295, 4294901760
    %4297 = vmatpush1.msra.mxu0 %v4296
    %4298 = vmatprep.subr.mxu0 0.0
    %v4299 = vand.u32 %v3489, 4294901760
    %v4300 = vsub.f32 %v3489, %v4299
    %v4301 = vand.u32 %v4300, 4294901760
    %4302 = vmatpush1.msra.mxu0 %v4301
    %4303 = vmatprep.subr.mxu0 0.0
    %v4304 = vand.u32 %v3490, 4294901760
    %v4305 = vsub.f32 %v3490, %v4304
    %v4306 = vand.u32 %v4305, 4294901760
    %4307 = vmatpush1.msra.mxu0 %v4306
    %4308 = vmatprep.subr.mxu0 0.0
    %v4309 = vand.u32 %v3491, 4294901760
    %v4310 = vsub.f32 %v3491, %v4309
    %v4311 = vand.u32 %v4310, 4294901760
    %4312 = vmatpush1.msra.mxu0 %v4311
    %4313 = vmatprep.subr.mxu0 0.0
    %v4314 = vand.u32 %v3492, 4294901760
    %v4315 = vsub.f32 %v3492, %v4314
    %v4316 = vand.u32 %v4315, 4294901760
    %4317 = vmatpush1.msra.mxu0 %v4316
    %4318 = vmatprep.subr.mxu0 0.0
    %v4319 = vand.u32 %v3493, 4294901760
    %v4320 = vsub.f32 %v3493, %v4319
    %v4321 = vand.u32 %v4320, 4294901760
    %4322 = vmatpush1.msra.mxu0 %v4321
    %4323 = vmatprep.subr.mxu0 0.0
    %v4324 = vand.u32 %v3494, 4294901760
    %v4325 = vsub.f32 %v3494, %v4324
    %v4326 = vand.u32 %v4325, 4294901760
    %4327 = vmatpush1.msra.mxu0 %v4326
    %4328 = vmatprep.subr.mxu0 0.0
    %v4329 = vand.u32 %v3495, 4294901760
    %v4330 = vsub.f32 %v3495, %v4329
    %v4331 = vand.u32 %v4330, 4294901760
    %4332 = vmatpush1.msra.mxu0 %v4331
    %4333 = vmatprep.subr.mxu0 0.0
    %v4334 = vand.u32 %v3496, 4294901760
    %v4335 = vsub.f32 %v3496, %v4334
    %v4336 = vand.u32 %v4335, 4294901760
    %4337 = vmatpush1.msra.mxu0 %v4336
    %4338 = vmatprep.subr.mxu0 0.0
    %v4339 = vand.u32 %v3497, 4294901760
    %v4340 = vsub.f32 %v3497, %v4339
    %v4341 = vand.u32 %v4340, 4294901760
    %4342 = vmatpush1.msra.mxu0 %v4341
    %4343 = vmatprep.subr.mxu0 0.0
    %v4344 = vand.u32 %v3498, 4294901760
    %v4345 = vsub.f32 %v3498, %v4344
    %v4346 = vand.u32 %v4345, 4294901760
    %4347 = vmatpush1.msra.mxu0 %v4346
    %4348 = vmatprep.subr.mxu0 0.0
    %v4349 = vand.u32 %v3499, 4294901760
    %v4350 = vsub.f32 %v3499, %v4349
    %v4351 = vand.u32 %v4350, 4294901760
    %4352 = vmatpush1.msra.mxu0 %v4351
    %4353 = vmatprep.subr.mxu0 0.0
    %v4354 = vand.u32 %v3500, 4294901760
    %v4355 = vsub.f32 %v3500, %v4354
    %v4356 = vand.u32 %v4355, 4294901760
    %4357 = vmatpush1.msra.mxu0 %v4356
    %4358 = vmatprep.subr.mxu0 0.0
    %v4359 = vand.u32 %v3501, 4294901760
    %v4360 = vsub.f32 %v3501, %v4359
    %v4361 = vand.u32 %v4360, 4294901760
    %4362 = vmatpush1.msra.mxu0 %v4361
    %4363 = vmatprep.subr.mxu0 0.0
    %v4364 = vand.u32 %v3502, 4294901760
    %v4365 = vsub.f32 %v3502, %v4364
    %v4366 = vand.u32 %v4365, 4294901760
    %4367 = vmatpush1.msra.mxu0 %v4366
    %4368 = vmatprep.subr.mxu0 0.0
    %v4369 = vand.u32 %v3503, 4294901760
    %v4370 = vsub.f32 %v3503, %v4369
    %v4371 = vand.u32 %v4370, 4294901760
    %4372 = vmatpush1.msra.mxu0 %v4371
    %4373 = vmatprep.subr.mxu0 0.0
    %v4374 = vand.u32 %v3504, 4294901760
    %v4375 = vsub.f32 %v3504, %v4374
    %v4376 = vand.u32 %v4375, 4294901760
    %4377 = vmatpush1.msra.mxu0 %v4376
    %4378 = vmatprep.subr.mxu0 0.0
    %v4379 = vand.u32 %v3505, 4294901760
    %v4380 = vsub.f32 %v3505, %v4379
    %v4381 = vand.u32 %v4380, 4294901760
    %4382 = vmatpush1.msra.mxu0 %v4381
    %4383 = vmatprep.subr.mxu0 0.0
    %v4384 = vand.u32 %v3506, 4294901760
    %v4385 = vsub.f32 %v3506, %v4384
    %v4386 = vand.u32 %v4385, 4294901760
    %4387 = vmatpush1.msra.mxu0 %v4386
    %4388 = vmatprep.subr.mxu0 0.0
    %v4389 = vand.u32 %v3507, 4294901760
    %v4390 = vsub.f32 %v3507, %v4389
    %v4391 = vand.u32 %v4390, 4294901760
    %4392 = vmatpush1.msra.mxu0 %v4391
    %4393 = vmatprep.subr.mxu0 0.0
    %v4394 = vand.u32 %v3508, 4294901760
    %v4395 = vsub.f32 %v3508, %v4394
    %v4396 = vand.u32 %v4395, 4294901760
    %4397 = vmatpush1.msra.mxu0 %v4396
    %4398 = vmatprep.subr.mxu0 0.0
    %v4399 = vand.u32 %v3509, 4294901760
    %v4400 = vsub.f32 %v3509, %v4399
    %v4401 = vand.u32 %v4400, 4294901760
    %4402 = vmatpush1.msra.mxu0 %v4401
    %4403 = vmatprep.subr.mxu0 0.0
    %v4404 = vand.u32 %v3510, 4294901760
    %v4405 = vsub.f32 %v3510, %v4404
    %v4406 = vand.u32 %v4405, 4294901760
    %4407 = vmatpush1.msra.mxu0 %v4406
    %4408 = vmatprep.subr.mxu0 0.0
    %v4409 = vand.u32 %v3511, 4294901760
    %v4410 = vsub.f32 %v3511, %v4409
    %v4411 = vand.u32 %v4410, 4294901760
    %4412 = vmatpush1.msra.mxu0 %v4411
    %4413 = vmatprep.subr.mxu0 0.0
    %v4414 = vand.u32 %v3512, 4294901760
    %v4415 = vsub.f32 %v3512, %v4414
    %v4416 = vand.u32 %v4415, 4294901760
    %4417 = vmatpush1.msra.mxu0 %v4416
    %4418 = vmatprep.subr.mxu0 0.0
    %v4419 = vand.u32 %v3513, 4294901760
    %v4420 = vsub.f32 %v3513, %v4419
    %v4421 = vand.u32 %v4420, 4294901760
    %4422 = vmatpush1.msra.mxu0 %v4421
    %v4423 = vand.u32 %v3467, 4294901760
    %4424 = vmatprep.mubr.f32.mxu0 %v4423
    %v4425 = vand.u32 %v3466, 4294901760
    %4426 = vmatmul.mubr.f32.gmra.mrb[0].mxu0 %v4425
    %v4427 = vpop.f32.mrb[0].mxu0
    %v4428 = vadd.f32 %v4227, %v4427
    %v4429 = vpop.f32.mrb[0].mxu0
    %v4430 = vand.u32 %v3471, 4294901760
    %4431 = vmatprep.mubr.f32.mxu0 %v4430
    %v4432 = vand.u32 %v3470, 4294901760
    %4433 = vmatmul.mubr.f32.gmra.mrb[0].mxu0 %v4432
    %v4434 = vpop.f32.mrb[0].mxu0
    %v4435 = vadd.f32 %v4238, %v4434
    %v4436 = vpop.f32.mrb[0].mxu0
    %v4437 = vand.u32 %v3475, 4294901760
    %4438 = vmatprep.mubr.f32.mxu0 %v4437
    %v4439 = vand.u32 %v3474, 4294901760
    %4440 = vmatmul.mubr.f32.gmra.mrb[0].mxu0 %v4439
    %v4441 = vpop.f32.mrb[0].mxu0
    %v4442 = vadd.f32 %v4249, %v4441
    %v4443 = vpop.f32.mrb[0].mxu0
    %v4444 = vand.u32 %v3479, 4294901760
    %4445 = vmatprep.mubr.f32.mxu0 %v4444
    %v4446 = vand.u32 %v3478, 4294901760
    %4447 = vmatmul.mubr.f32.gmra.mrb[0].mxu0 %v4446
    %v4448 = vpop.f32.mrb[0].mxu0
    %v4449 = vadd.f32 %v4260, %v4448
    %v4450 = vpop.f32.mrb[0].mxu0
    %4451 = vdwg.mxu0
    %4452 = vmatprep.subr.mxu0 0.0
    %v4453 = vand.u32 %v3482, 4294901760
    %4454 = vmatpush1.msra.mxu0 %v4453
    %4455 = vmatprep.subr.mxu0 0.0
    %v4456 = vand.u32 %v3483, 4294901760
    %4457 = vmatpush1.msra.mxu0 %v4456
    %4458 = vmatprep.subr.mxu0 0.0
    %v4459 = vand.u32 %v3484, 4294901760
    %4460 = vmatpush1.msra.mxu0 %v4459
    %4461 = vmatprep.subr.mxu0 0.0
    %v4462 = vand.u32 %v3485, 4294901760
    %4463 = vmatpush1.msra.mxu0 %v4462
    %4464 = vmatprep.subr.mxu0 0.0
    %v4465 = vand.u32 %v3486, 4294901760
    %4466 = vmatpush1.msra.mxu0 %v4465
    %4467 = vmatprep.subr.mxu0 0.0
    %v4468 = vand.u32 %v3487, 4294901760
    %4469 = vmatpush1.msra.mxu0 %v4468
    %4470 = vmatprep.subr.mxu0 0.0
    %v4471 = vand.u32 %v3488, 4294901760
    %4472 = vmatpush1.msra.mxu0 %v4471
    %4473 = vmatprep.subr.mxu0 0.0
    %v4474 = vand.u32 %v3489, 4294901760
    %4475 = vmatpush1.msra.mxu0 %v4474
    %4476 = vmatprep.subr.mxu0 0.0
    %v4477 = vand.u32 %v3490, 4294901760
    %4478 = vmatpush1.msra.mxu0 %v4477
    %4479 = vmatprep.subr.mxu0 0.0
    %v4480 = vand.u32 %v3491, 4294901760
    %4481 = vmatpush1.msra.mxu0 %v4480
    %4482 = vmatprep.subr.mxu0 0.0
    %v4483 = vand.u32 %v3492, 4294901760
    %4484 = vmatpush1.msra.mxu0 %v4483
    %4485 = vmatprep.subr.mxu0 0.0
    %v4486 = vand.u32 %v3493, 4294901760
    %4487 = vmatpush1.msra.mxu0 %v4486
    %4488 = vmatprep.subr.mxu0 0.0
    %v4489 = vand.u32 %v3494, 4294901760
    %4490 = vmatpush1.msra.mxu0 %v4489
    %4491 = vmatprep.subr.mxu0 0.0
    %v4492 = vand.u32 %v3495, 4294901760
    %4493 = vmatpush1.msra.mxu0 %v4492
    %4494 = vmatprep.subr.mxu0 0.0
    %v4495 = vand.u32 %v3496, 4294901760
    %4496 = vmatpush1.msra.mxu0 %v4495
    %4497 = vmatprep.subr.mxu0 0.0
    %v4498 = vand.u32 %v3497, 4294901760
    %4499 = vmatpush1.msra.mxu0 %v4498
    %4500 = vmatprep.subr.mxu0 0.0
    %v4501 = vand.u32 %v3498, 4294901760
    %4502 = vmatpush1.msra.mxu0 %v4501
    %4503 = vmatprep.subr.mxu0 0.0
    %v4504 = vand.u32 %v3499, 4294901760
    %4505 = vmatpush1.msra.mxu0 %v4504
    %4506 = vmatprep.subr.mxu0 0.0
    %v4507 = vand.u32 %v3500, 4294901760
    %4508 = vmatpush1.msra.mxu0 %v4507
    %4509 = vmatprep.subr.mxu0 0.0
    %v4510 = vand.u32 %v3501, 4294901760
    %4511 = vmatpush1.msra.mxu0 %v4510
    %4512 = vmatprep.subr.mxu0 0.0
    %v4513 = vand.u32 %v3502, 4294901760
    %4514 = vmatpush1.msra.mxu0 %v4513
    %4515 = vmatprep.subr.mxu0 0.0
    %v4516 = vand.u32 %v3503, 4294901760
    %4517 = vmatpush1.msra.mxu0 %v4516
    %4518 = vmatprep.subr.mxu0 0.0
    %v4519 = vand.u32 %v3504, 4294901760
    %4520 = vmatpush1.msra.mxu0 %v4519
    %4521 = vmatprep.subr.mxu0 0.0
    %v4522 = vand.u32 %v3505, 4294901760
    %4523 = vmatpush1.msra.mxu0 %v4522
    %4524 = vmatprep.subr.mxu0 0.0
    %v4525 = vand.u32 %v3506, 4294901760
    %4526 = vmatpush1.msra.mxu0 %v4525
    %4527 = vmatprep.subr.mxu0 0.0
    %v4528 = vand.u32 %v3507, 4294901760
    %4529 = vmatpush1.msra.mxu0 %v4528
    %4530 = vmatprep.subr.mxu0 0.0
    %v4531 = vand.u32 %v3508, 4294901760
    %4532 = vmatpush1.msra.mxu0 %v4531
    %4533 = vmatprep.subr.mxu0 0.0
    %v4534 = vand.u32 %v3509, 4294901760
    %4535 = vmatpush1.msra.mxu0 %v4534
    %4536 = vmatprep.subr.mxu0 0.0
    %v4537 = vand.u32 %v3510, 4294901760
    %4538 = vmatpush1.msra.mxu0 %v4537
    %4539 = vmatprep.subr.mxu0 0.0
    %v4540 = vand.u32 %v3511, 4294901760
    %4541 = vmatpush1.msra.mxu0 %v4540
    %4542 = vmatprep.subr.mxu0 0.0
    %v4543 = vand.u32 %v3512, 4294901760
    %4544 = vmatpush1.msra.mxu0 %v4543
    %4545 = vmatprep.subr.mxu0 0.0
    %v4546 = vand.u32 %v3513, 4294901760
    %4547 = vmatpush1.msra.mxu0 %v4546
    %v4548 = vand.u32 %v3467, 4294901760
    %4549 = vmatprep.mubr.f32.mxu0 %v4548
    %v4550 = vand.u32 %v3466, 4294901760
    %4551 = vmatmul.mubr.f32.gmra.mrb[0].mxu0 %v4550
    %v4552 = vpop.f32.mrb[0].mxu0
    %v4553 = vadd.f32 %v4428, %v4552
    %v4554 = vpop.f32.mrb[0].mxu0
    %v4555 = vand.u32 %v3471, 4294901760
    %4556 = vmatprep.mubr.f32.mxu0 %v4555
    %v4557 = vand.u32 %v3470, 4294901760
    %4558 = vmatmul.mubr.f32.gmra.mrb[0].mxu0 %v4557
    %v4559 = vpop.f32.mrb[0].mxu0
    %v4560 = vadd.f32 %v4435, %v4559
    %v4561 = vpop.f32.mrb[0].mxu0
    %v4562 = vand.u32 %v3475, 4294901760
    %4563 = vmatprep.mubr.f32.mxu0 %v4562
    %v4564 = vand.u32 %v3474, 4294901760
    %4565 = vmatmul.mubr.f32.gmra.mrb[0].mxu0 %v4564
    %v4566 = vpop.f32.mrb[0].mxu0
    %v4567 = vadd.f32 %v4442, %v4566
    %v4568 = vpop.f32.mrb[0].mxu0
    %v4569 = vand.u32 %v3479, 4294901760
    %4570 = vmatprep.mubr.f32.mxu0 %v4569
    %v4571 = vand.u32 %v3478, 4294901760
    %4572 = vmatmul.mubr.f32.gmra.mrb[0].mxu0 %v4571
    %v4573 = vpop.f32.mrb[0].mxu0
    %v4574 = vadd.f32 %v4449, %v4573
    %v4575 = vpop.f32.mrb[0].mxu0
    %4576 = vdwg.mxu0
    %4577 = vmatprep.subr.mxu0 0.0
    %v4578 = vand.u32 %v3514, 4294901760
    %4579 = vmatpush1.msra.mxu0 %v4578
    %4580 = vmatprep.subr.mxu0 0.0
    %v4581 = vand.u32 %v3515, 4294901760
    %4582 = vmatpush1.msra.mxu0 %v4581
    %4583 = vmatprep.subr.mxu0 0.0
    %v4584 = vand.u32 %v3516, 4294901760
    %4585 = vmatpush1.msra.mxu0 %v4584
    %4586 = vmatprep.subr.mxu0 0.0
    %v4587 = vand.u32 %v3517, 4294901760
    %4588 = vmatpush1.msra.mxu0 %v4587
    %4589 = vmatprep.subr.mxu0 0.0
    %v4590 = vand.u32 %v3518, 4294901760
    %4591 = vmatpush1.msra.mxu0 %v4590
    %4592 = vmatprep.subr.mxu0 0.0
    %v4593 = vand.u32 %v3519, 4294901760
    %4594 = vmatpush1.msra.mxu0 %v4593
    %4595 = vmatprep.subr.mxu0 0.0
    %v4596 = vand.u32 %v3520, 4294901760
    %4597 = vmatpush1.msra.mxu0 %v4596
    %4598 = vmatprep.subr.mxu0 0.0
    %v4599 = vand.u32 %v3521, 4294901760
    %4600 = vmatpush1.msra.mxu0 %v4599
    %4601 = vmatprep.subr.mxu0 0.0
    %v4602 = vand.u32 %v3522, 4294901760
    %4603 = vmatpush1.msra.mxu0 %v4602
    %4604 = vmatprep.subr.mxu0 0.0
    %v4605 = vand.u32 %v3523, 4294901760
    %4606 = vmatpush1.msra.mxu0 %v4605
    %4607 = vmatprep.subr.mxu0 0.0
    %v4608 = vand.u32 %v3524, 4294901760
    %4609 = vmatpush1.msra.mxu0 %v4608
    %4610 = vmatprep.subr.mxu0 0.0
    %v4611 = vand.u32 %v3525, 4294901760
    %4612 = vmatpush1.msra.mxu0 %v4611
    %4613 = vmatprep.subr.mxu0 0.0
    %v4614 = vand.u32 %v3526, 4294901760
    %4615 = vmatpush1.msra.mxu0 %v4614
    %4616 = vmatprep.subr.mxu0 0.0
    %v4617 = vand.u32 %v3527, 4294901760
    %4618 = vmatpush1.msra.mxu0 %v4617
    %4619 = vmatprep.subr.mxu0 0.0
    %v4620 = vand.u32 %v3528, 4294901760
    %4621 = vmatpush1.msra.mxu0 %v4620
    %4622 = vmatprep.subr.mxu0 0.0
    %v4623 = vand.u32 %v3529, 4294901760
    %4624 = vmatpush1.msra.mxu0 %v4623
    %4625 = vmatprep.subr.mxu0 0.0
    %v4626 = vand.u32 %v3530, 4294901760
    %4627 = vmatpush1.msra.mxu0 %v4626
    %4628 = vmatprep.subr.mxu0 0.0
    %v4629 = vand.u32 %v3531, 4294901760
    %4630 = vmatpush1.msra.mxu0 %v4629
    %4631 = vmatprep.subr.mxu0 0.0
    %v4632 = vand.u32 %v3532, 4294901760
    %4633 = vmatpush1.msra.mxu0 %v4632
    %4634 = vmatprep.subr.mxu0 0.0
    %v4635 = vand.u32 %v3533, 4294901760
    %4636 = vmatpush1.msra.mxu0 %v4635
    %4637 = vmatprep.subr.mxu0 0.0
    %v4638 = vand.u32 %v3534, 4294901760
    %4639 = vmatpush1.msra.mxu0 %v4638
    %4640 = vmatprep.subr.mxu0 0.0
    %v4641 = vand.u32 %v3535, 4294901760
    %4642 = vmatpush1.msra.mxu0 %v4641
    %4643 = vmatprep.subr.mxu0 0.0
    %v4644 = vand.u32 %v3536, 4294901760
    %4645 = vmatpush1.msra.mxu0 %v4644
    %4646 = vmatprep.subr.mxu0 0.0
    %v4647 = vand.u32 %v3537, 4294901760
    %4648 = vmatpush1.msra.mxu0 %v4647
    %4649 = vmatprep.subr.mxu0 0.0
    %v4650 = vand.u32 %v3538, 4294901760
    %4651 = vmatpush1.msra.mxu0 %v4650
    %4652 = vmatprep.subr.mxu0 0.0
    %v4653 = vand.u32 %v3539, 4294901760
    %4654 = vmatpush1.msra.mxu0 %v4653
    %4655 = vmatprep.subr.mxu0 0.0
    %v4656 = vand.u32 %v3540, 4294901760
    %4657 = vmatpush1.msra.mxu0 %v4656
    %4658 = vmatprep.subr.mxu0 0.0
    %v4659 = vand.u32 %v3541, 4294901760
    %4660 = vmatpush1.msra.mxu0 %v4659
    %4661 = vmatprep.subr.mxu0 0.0
    %v4662 = vand.u32 %v3542, 4294901760
    %4663 = vmatpush1.msra.mxu0 %v4662
    %4664 = vmatprep.subr.mxu0 0.0
    %v4665 = vand.u32 %v3543, 4294901760
    %4666 = vmatpush1.msra.mxu0 %v4665
    %4667 = vmatprep.subr.mxu0 0.0
    %v4668 = vand.u32 %v3544, 4294901760
    %4669 = vmatpush1.msra.mxu0 %v4668
    %4670 = vmatprep.subr.mxu0 0.0
    %v4671 = vand.u32 %v3545, 4294901760
    %4672 = vmatpush1.msra.mxu0 %v4671
    %v4673 = vand.u32 %v3469, 4294901760
    %v4674 = vsub.f32 %v3469, %v4673
    %v4675 = vand.u32 %v4674, 4294901760
    %v4676 = vsub.f32 %v4674, %v4675
    %v4677 = vand.u32 %v4676, 4294901760
    %4678 = vmatprep.mubr.f32.mxu0 %v4677
    %v4679 = vand.u32 %v3468, 4294901760
    %v4680 = vsub.f32 %v3468, %v4679
    %v4681 = vand.u32 %v4680, 4294901760
    %v4682 = vsub.f32 %v4680, %v4681
    %v4683 = vand.u32 %v4682, 4294901760
    %4684 = vmatmul.mubr.f32.gmra.mrb[0].mxu0 %v4683
    %v4685 = vpop.f32.mrb[0].mxu0
    %v4686 = vadd.f32 %v4553, %v4685
    %v4687 = vpop.f32.mrb[0].mxu0
    %v4688 = vand.u32 %v3473, 4294901760
    %v4689 = vsub.f32 %v3473, %v4688
    %v4690 = vand.u32 %v4689, 4294901760
    %v4691 = vsub.f32 %v4689, %v4690
    %v4692 = vand.u32 %v4691, 4294901760
    %4693 = vmatprep.mubr.f32.mxu0 %v4692
    %v4694 = vand.u32 %v3472, 4294901760
    %v4695 = vsub.f32 %v3472, %v4694
    %v4696 = vand.u32 %v4695, 4294901760
    %v4697 = vsub.f32 %v4695, %v4696
    %v4698 = vand.u32 %v4697, 4294901760
    %4699 = vmatmul.mubr.f32.gmra.mrb[0].mxu0 %v4698
    %v4700 = vpop.f32.mrb[0].mxu0
    %v4701 = vadd.f32 %v4560, %v4700
    %v4702 = vpop.f32.mrb[0].mxu0
    %v4703 = vand.u32 %v3477, 4294901760
    %v4704 = vsub.f32 %v3477, %v4703
    %v4705 = vand.u32 %v4704, 4294901760
    %v4706 = vsub.f32 %v4704, %v4705
    %v4707 = vand.u32 %v4706, 4294901760
    %4708 = vmatprep.mubr.f32.mxu0 %v4707
    %v4709 = vand.u32 %v3476, 4294901760
    %v4710 = vsub.f32 %v3476, %v4709
    %v4711 = vand.u32 %v4710, 4294901760
    %v4712 = vsub.f32 %v4710, %v4711
    %v4713 = vand.u32 %v4712, 4294901760
    %4714 = vmatmul.mubr.f32.gmra.mrb[0].mxu0 %v4713
    %v4715 = vpop.f32.mrb[0].mxu0
    %v4716 = vadd.f32 %v4567, %v4715
    %v4717 = vpop.f32.mrb[0].mxu0
    %v4718 = vand.u32 %v3481, 4294901760
    %v4719 = vsub.f32 %v3481, %v4718
    %v4720 = vand.u32 %v4719, 4294901760
    %v4721 = vsub.f32 %v4719, %v4720
    %v4722 = vand.u32 %v4721, 4294901760
    %4723 = vmatprep.mubr.f32.mxu0 %v4722
    %v4724 = vand.u32 %v3480, 4294901760
    %v4725 = vsub.f32 %v3480, %v4724
    %v4726 = vand.u32 %v4725, 4294901760
    %v4727 = vsub.f32 %v4725, %v4726
    %v4728 = vand.u32 %v4727, 4294901760
    %4729 = vmatmul.mubr.f32.gmra.mrb[0].mxu0 %v4728
    %v4730 = vpop.f32.mrb[0].mxu0
    %v4731 = vadd.f32 %v4574, %v4730
    %v4732 = vpop.f32.mrb[0].mxu0
    %4733 = vdwg.mxu0
    %4734 = vmatprep.subr.mxu0 0.0
    %v4735 = vand.u32 %v3514, 4294901760
    %v4736 = vsub.f32 %v3514, %v4735
    %v4737 = vand.u32 %v4736, 4294901760
    %v4738 = vsub.f32 %v4736, %v4737
    %v4739 = vand.u32 %v4738, 4294901760
    %4740 = vmatpush1.msra.mxu0 %v4739
    %4741 = vmatprep.subr.mxu0 0.0
    %v4742 = vand.u32 %v3515, 4294901760
    %v4743 = vsub.f32 %v3515, %v4742
    %v4744 = vand.u32 %v4743, 4294901760
    %v4745 = vsub.f32 %v4743, %v4744
    %v4746 = vand.u32 %v4745, 4294901760
    %4747 = vmatpush1.msra.mxu0 %v4746
    %4748 = vmatprep.subr.mxu0 0.0
    %v4749 = vand.u32 %v3516, 4294901760
    %v4750 = vsub.f32 %v3516, %v4749
    %v4751 = vand.u32 %v4750, 4294901760
    %v4752 = vsub.f32 %v4750, %v4751
    %v4753 = vand.u32 %v4752, 4294901760
    %4754 = vmatpush1.msra.mxu0 %v4753
    %4755 = vmatprep.subr.mxu0 0.0
    %v4756 = vand.u32 %v3517, 4294901760
    %v4757 = vsub.f32 %v3517, %v4756
    %v4758 = vand.u32 %v4757, 4294901760
    %v4759 = vsub.f32 %v4757, %v4758
    %v4760 = vand.u32 %v4759, 4294901760
    %4761 = vmatpush1.msra.mxu0 %v4760
    %4762 = vmatprep.subr.mxu0 0.0
    %v4763 = vand.u32 %v3518, 4294901760
    %v4764 = vsub.f32 %v3518, %v4763
    %v4765 = vand.u32 %v4764, 4294901760
    %v4766 = vsub.f32 %v4764, %v4765
    %v4767 = vand.u32 %v4766, 4294901760
    %4768 = vmatpush1.msra.mxu0 %v4767
    %4769 = vmatprep.subr.mxu0 0.0
    %v4770 = vand.u32 %v3519, 4294901760
    %v4771 = vsub.f32 %v3519, %v4770
    %v4772 = vand.u32 %v4771, 4294901760
    %v4773 = vsub.f32 %v4771, %v4772
    %v4774 = vand.u32 %v4773, 4294901760
    %4775 = vmatpush1.msra.mxu0 %v4774
    %4776 = vmatprep.subr.mxu0 0.0
    %v4777 = vand.u32 %v3520, 4294901760
    %v4778 = vsub.f32 %v3520, %v4777
    %v4779 = vand.u32 %v4778, 4294901760
    %v4780 = vsub.f32 %v4778, %v4779
    %v4781 = vand.u32 %v4780, 4294901760
    %4782 = vmatpush1.msra.mxu0 %v4781
    %4783 = vmatprep.subr.mxu0 0.0
    %v4784 = vand.u32 %v3521, 4294901760
    %v4785 = vsub.f32 %v3521, %v4784
    %v4786 = vand.u32 %v4785, 4294901760
    %v4787 = vsub.f32 %v4785, %v4786
    %v4788 = vand.u32 %v4787, 4294901760
    %4789 = vmatpush1.msra.mxu0 %v4788
    %4790 = vmatprep.subr.mxu0 0.0
    %v4791 = vand.u32 %v3522, 4294901760
    %v4792 = vsub.f32 %v3522, %v4791
    %v4793 = vand.u32 %v4792, 4294901760
    %v4794 = vsub.f32 %v4792, %v4793
    %v4795 = vand.u32 %v4794, 4294901760
    %4796 = vmatpush1.msra.mxu0 %v4795
    %4797 = vmatprep.subr.mxu0 0.0
    %v4798 = vand.u32 %v3523, 4294901760
    %v4799 = vsub.f32 %v3523, %v4798
    %v4800 = vand.u32 %v4799, 4294901760
    %v4801 = vsub.f32 %v4799, %v4800
    %v4802 = vand.u32 %v4801, 4294901760
    %4803 = vmatpush1.msra.mxu0 %v4802
    %4804 = vmatprep.subr.mxu0 0.0
    %v4805 = vand.u32 %v3524, 4294901760
    %v4806 = vsub.f32 %v3524, %v4805
    %v4807 = vand.u32 %v4806, 4294901760
    %v4808 = vsub.f32 %v4806, %v4807
    %v4809 = vand.u32 %v4808, 4294901760
    %4810 = vmatpush1.msra.mxu0 %v4809
    %4811 = vmatprep.subr.mxu0 0.0
    %v4812 = vand.u32 %v3525, 4294901760
    %v4813 = vsub.f32 %v3525, %v4812
    %v4814 = vand.u32 %v4813, 4294901760
    %v4815 = vsub.f32 %v4813, %v4814
    %v4816 = vand.u32 %v4815, 4294901760
    %4817 = vmatpush1.msra.mxu0 %v4816
    %4818 = vmatprep.subr.mxu0 0.0
    %v4819 = vand.u32 %v3526, 4294901760
    %v4820 = vsub.f32 %v3526, %v4819
    %v4821 = vand.u32 %v4820, 4294901760
    %v4822 = vsub.f32 %v4820, %v4821
    %v4823 = vand.u32 %v4822, 4294901760
    %4824 = vmatpush1.msra.mxu0 %v4823
    %4825 = vmatprep.subr.mxu0 0.0
    %v4826 = vand.u32 %v3527, 4294901760
    %v4827 = vsub.f32 %v3527, %v4826
    %v4828 = vand.u32 %v4827, 4294901760
    %v4829 = vsub.f32 %v4827, %v4828
    %v4830 = vand.u32 %v4829, 4294901760
    %4831 = vmatpush1.msra.mxu0 %v4830
    %4832 = vmatprep.subr.mxu0 0.0
    %v4833 = vand.u32 %v3528, 4294901760
    %v4834 = vsub.f32 %v3528, %v4833
    %v4835 = vand.u32 %v4834, 4294901760
    %v4836 = vsub.f32 %v4834, %v4835
    %v4837 = vand.u32 %v4836, 4294901760
    %4838 = vmatpush1.msra.mxu0 %v4837
    %4839 = vmatprep.subr.mxu0 0.0
    %v4840 = vand.u32 %v3529, 4294901760
    %v4841 = vsub.f32 %v3529, %v4840
    %v4842 = vand.u32 %v4841, 4294901760
    %v4843 = vsub.f32 %v4841, %v4842
    %v4844 = vand.u32 %v4843, 4294901760
    %4845 = vmatpush1.msra.mxu0 %v4844
    %4846 = vmatprep.subr.mxu0 0.0
    %v4847 = vand.u32 %v3530, 4294901760
    %v4848 = vsub.f32 %v3530, %v4847
    %v4849 = vand.u32 %v4848, 4294901760
    %v4850 = vsub.f32 %v4848, %v4849
    %v4851 = vand.u32 %v4850, 4294901760
    %4852 = vmatpush1.msra.mxu0 %v4851
    %4853 = vmatprep.subr.mxu0 0.0
    %v4854 = vand.u32 %v3531, 4294901760
    %v4855 = vsub.f32 %v3531, %v4854
    %v4856 = vand.u32 %v4855, 4294901760
    %v4857 = vsub.f32 %v4855, %v4856
    %v4858 = vand.u32 %v4857, 4294901760
    %4859 = vmatpush1.msra.mxu0 %v4858
    %4860 = vmatprep.subr.mxu0 0.0
    %v4861 = vand.u32 %v3532, 4294901760
    %v4862 = vsub.f32 %v3532, %v4861
    %v4863 = vand.u32 %v4862, 4294901760
    %v4864 = vsub.f32 %v4862, %v4863
    %v4865 = vand.u32 %v4864, 4294901760
    %4866 = vmatpush1.msra.mxu0 %v4865
    %4867 = vmatprep.subr.mxu0 0.0
    %v4868 = vand.u32 %v3533, 4294901760
    %v4869 = vsub.f32 %v3533, %v4868
    %v4870 = vand.u32 %v4869, 4294901760
    %v4871 = vsub.f32 %v4869, %v4870
    %v4872 = vand.u32 %v4871, 4294901760
    %4873 = vmatpush1.msra.mxu0 %v4872
    %4874 = vmatprep.subr.mxu0 0.0
    %v4875 = vand.u32 %v3534, 4294901760
    %v4876 = vsub.f32 %v3534, %v4875
    %v4877 = vand.u32 %v4876, 4294901760
    %v4878 = vsub.f32 %v4876, %v4877
    %v4879 = vand.u32 %v4878, 4294901760
    %4880 = vmatpush1.msra.mxu0 %v4879
    %4881 = vmatprep.subr.mxu0 0.0
    %v4882 = vand.u32 %v3535, 4294901760
    %v4883 = vsub.f32 %v3535, %v4882
    %v4884 = vand.u32 %v4883, 4294901760
    %v4885 = vsub.f32 %v4883, %v4884
    %v4886 = vand.u32 %v4885, 4294901760
    %4887 = vmatpush1.msra.mxu0 %v4886
    %4888 = vmatprep.subr.mxu0 0.0
    %v4889 = vand.u32 %v3536, 4294901760
    %v4890 = vsub.f32 %v3536, %v4889
    %v4891 = vand.u32 %v4890, 4294901760
    %v4892 = vsub.f32 %v4890, %v4891
    %v4893 = vand.u32 %v4892, 4294901760
    %4894 = vmatpush1.msra.mxu0 %v4893
    %4895 = vmatprep.subr.mxu0 0.0
    %v4896 = vand.u32 %v3537, 4294901760
    %v4897 = vsub.f32 %v3537, %v4896
    %v4898 = vand.u32 %v4897, 4294901760
    %v4899 = vsub.f32 %v4897, %v4898
    %v4900 = vand.u32 %v4899, 4294901760
    %4901 = vmatpush1.msra.mxu0 %v4900
    %4902 = vmatprep.subr.mxu0 0.0
    %v4903 = vand.u32 %v3538, 4294901760
    %v4904 = vsub.f32 %v3538, %v4903
    %v4905 = vand.u32 %v4904, 4294901760
    %v4906 = vsub.f32 %v4904, %v4905
    %v4907 = vand.u32 %v4906, 4294901760
    %4908 = vmatpush1.msra.mxu0 %v4907
    %4909 = vmatprep.subr.mxu0 0.0
    %v4910 = vand.u32 %v3539, 4294901760
    %v4911 = vsub.f32 %v3539, %v4910
    %v4912 = vand.u32 %v4911, 4294901760
    %v4913 = vsub.f32 %v4911, %v4912
    %v4914 = vand.u32 %v4913, 4294901760
    %4915 = vmatpush1.msra.mxu0 %v4914
    %4916 = vmatprep.subr.mxu0 0.0
    %v4917 = vand.u32 %v3540, 4294901760
    %v4918 = vsub.f32 %v3540, %v4917
    %v4919 = vand.u32 %v4918, 4294901760
    %v4920 = vsub.f32 %v4918, %v4919
    %v4921 = vand.u32 %v4920, 4294901760
    %4922 = vmatpush1.msra.mxu0 %v4921
    %4923 = vmatprep.subr.mxu0 0.0
    %v4924 = vand.u32 %v3541, 4294901760
    %v4925 = vsub.f32 %v3541, %v4924
    %v4926 = vand.u32 %v4925, 4294901760
    %v4927 = vsub.f32 %v4925, %v4926
    %v4928 = vand.u32 %v4927, 4294901760
    %4929 = vmatpush1.msra.mxu0 %v4928
    %4930 = vmatprep.subr.mxu0 0.0
    %v4931 = vand.u32 %v3542, 4294901760
    %v4932 = vsub.f32 %v3542, %v4931
    %v4933 = vand.u32 %v4932, 4294901760
    %v4934 = vsub.f32 %v4932, %v4933
    %v4935 = vand.u32 %v4934, 4294901760
    %4936 = vmatpush1.msra.mxu0 %v4935
    %4937 = vmatprep.subr.mxu0 0.0
    %v4938 = vand.u32 %v3543, 4294901760
    %v4939 = vsub.f32 %v3543, %v4938
    %v4940 = vand.u32 %v4939, 4294901760
    %v4941 = vsub.f32 %v4939, %v4940
    %v4942 = vand.u32 %v4941, 4294901760
    %4943 = vmatpush1.msra.mxu0 %v4942
    %4944 = vmatprep.subr.mxu0 0.0
    %v4945 = vand.u32 %v3544, 4294901760
    %v4946 = vsub.f32 %v3544, %v4945
    %v4947 = vand.u32 %v4946, 4294901760
    %v4948 = vsub.f32 %v4946, %v4947
    %v4949 = vand.u32 %v4948, 4294901760
    %4950 = vmatpush1.msra.mxu0 %v4949
    %4951 = vmatprep.subr.mxu0 0.0
    %v4952 = vand.u32 %v3545, 4294901760
    %v4953 = vsub.f32 %v3545, %v4952
    %v4954 = vand.u32 %v4953, 4294901760
    %v4955 = vsub.f32 %v4953, %v4954
    %v4956 = vand.u32 %v4955, 4294901760
    %4957 = vmatpush1.msra.mxu0 %v4956
    %v4958 = vand.u32 %v3469, 4294901760
    %4959 = vmatprep.mubr.f32.mxu0 %v4958
    %v4960 = vand.u32 %v3468, 4294901760
    %4961 = vmatmul.mubr.f32.gmra.mrb[0].mxu0 %v4960
    %v4962 = vpop.f32.mrb[0].mxu0
    %v4963 = vadd.f32 %v4686, %v4962
    %v4964 = vpop.f32.mrb[0].mxu0
    %v4965 = vand.u32 %v3473, 4294901760
    %4966 = vmatprep.mubr.f32.mxu0 %v4965
    %v4967 = vand.u32 %v3472, 4294901760
    %4968 = vmatmul.mubr.f32.gmra.mrb[0].mxu0 %v4967
    %v4969 = vpop.f32.mrb[0].mxu0
    %v4970 = vadd.f32 %v4701, %v4969
    %v4971 = vpop.f32.mrb[0].mxu0
    %v4972 = vand.u32 %v3477, 4294901760
    %4973 = vmatprep.mubr.f32.mxu0 %v4972
    %v4974 = vand.u32 %v3476, 4294901760
    %4975 = vmatmul.mubr.f32.gmra.mrb[0].mxu0 %v4974
    %v4976 = vpop.f32.mrb[0].mxu0
    %v4977 = vadd.f32 %v4716, %v4976
    %v4978 = vpop.f32.mrb[0].mxu0
    %v4979 = vand.u32 %v3481, 4294901760
    %4980 = vmatprep.mubr.f32.mxu0 %v4979
    %v4981 = vand.u32 %v3480, 4294901760
    %4982 = vmatmul.mubr.f32.gmra.mrb[0].mxu0 %v4981
    %v4983 = vpop.f32.mrb[0].mxu0
    %v4984 = vadd.f32 %v4731, %v4983
    %v4985 = vpop.f32.mrb[0].mxu0
    %4986 = vdwg.mxu0
    %4987 = vmatprep.subr.mxu0 0.0
    %v4988 = vand.u32 %v3514, 4294901760
    %v4989 = vsub.f32 %v3514, %v4988
    %4990 = vmatpush1.msra.mxu0 %v4989
    %4991 = vmatprep.subr.mxu0 0.0
    %v4992 = vand.u32 %v3515, 4294901760
    %v4993 = vsub.f32 %v3515, %v4992
    %4994 = vmatpush1.msra.mxu0 %v4993
    %4995 = vmatprep.subr.mxu0 0.0
    %v4996 = vand.u32 %v3516, 4294901760
    %v4997 = vsub.f32 %v3516, %v4996
    %4998 = vmatpush1.msra.mxu0 %v4997
    %4999 = vmatprep.subr.mxu0 0.0
    %v5000 = vand.u32 %v3517, 4294901760
    %v5001 = vsub.f32 %v3517, %v5000
    %5002 = vmatpush1.msra.mxu0 %v5001
    %5003 = vmatprep.subr.mxu0 0.0
    %v5004 = vand.u32 %v3518, 4294901760
    %v5005 = vsub.f32 %v3518, %v5004
    %5006 = vmatpush1.msra.mxu0 %v5005
    %5007 = vmatprep.subr.mxu0 0.0
    %v5008 = vand.u32 %v3519, 4294901760
    %v5009 = vsub.f32 %v3519, %v5008
    %5010 = vmatpush1.msra.mxu0 %v5009
    %5011 = vmatprep.subr.mxu0 0.0
    %v5012 = vand.u32 %v3520, 4294901760
    %v5013 = vsub.f32 %v3520, %v5012
    %5014 = vmatpush1.msra.mxu0 %v5013
    %5015 = vmatprep.subr.mxu0 0.0
    %v5016 = vand.u32 %v3521, 4294901760
    %v5017 = vsub.f32 %v3521, %v5016
    %5018 = vmatpush1.msra.mxu0 %v5017
    %5019 = vmatprep.subr.mxu0 0.0
    %v5020 = vand.u32 %v3522, 4294901760
    %v5021 = vsub.f32 %v3522, %v5020
    %5022 = vmatpush1.msra.mxu0 %v5021
    %5023 = vmatprep.subr.mxu0 0.0
    %v5024 = vand.u32 %v3523, 4294901760
    %v5025 = vsub.f32 %v3523, %v5024
    %5026 = vmatpush1.msra.mxu0 %v5025
    %5027 = vmatprep.subr.mxu0 0.0
    %v5028 = vand.u32 %v3524, 4294901760
    %v5029 = vsub.f32 %v3524, %v5028
    %5030 = vmatpush1.msra.mxu0 %v5029
    %5031 = vmatprep.subr.mxu0 0.0
    %v5032 = vand.u32 %v3525, 4294901760
    %v5033 = vsub.f32 %v3525, %v5032
    %5034 = vmatpush1.msra.mxu0 %v5033
    %5035 = vmatprep.subr.mxu0 0.0
    %v5036 = vand.u32 %v3526, 4294901760
    %v5037 = vsub.f32 %v3526, %v5036
    %5038 = vmatpush1.msra.mxu0 %v5037
    %5039 = vmatprep.subr.mxu0 0.0
    %v5040 = vand.u32 %v3527, 4294901760
    %v5041 = vsub.f32 %v3527, %v5040
    %5042 = vmatpush1.msra.mxu0 %v5041
    %5043 = vmatprep.subr.mxu0 0.0
    %v5044 = vand.u32 %v3528, 4294901760
    %v5045 = vsub.f32 %v3528, %v5044
    %5046 = vmatpush1.msra.mxu0 %v5045
    %5047 = vmatprep.subr.mxu0 0.0
    %v5048 = vand.u32 %v3529, 4294901760
    %v5049 = vsub.f32 %v3529, %v5048
    %5050 = vmatpush1.msra.mxu0 %v5049
    %5051 = vmatprep.subr.mxu0 0.0
    %v5052 = vand.u32 %v3530, 4294901760
    %v5053 = vsub.f32 %v3530, %v5052
    %5054 = vmatpush1.msra.mxu0 %v5053
    %5055 = vmatprep.subr.mxu0 0.0
    %v5056 = vand.u32 %v3531, 4294901760
    %v5057 = vsub.f32 %v3531, %v5056
    %5058 = vmatpush1.msra.mxu0 %v5057
    %5059 = vmatprep.subr.mxu0 0.0
    %v5060 = vand.u32 %v3532, 4294901760
    %v5061 = vsub.f32 %v3532, %v5060
    %5062 = vmatpush1.msra.mxu0 %v5061
    %5063 = vmatprep.subr.mxu0 0.0
    %v5064 = vand.u32 %v3533, 4294901760
    %v5065 = vsub.f32 %v3533, %v5064
    %5066 = vmatpush1.msra.mxu0 %v5065
    %5067 = vmatprep.subr.mxu0 0.0
    %v5068 = vand.u32 %v3534, 4294901760
    %v5069 = vsub.f32 %v3534, %v5068
    %5070 = vmatpush1.msra.mxu0 %v5069
    %5071 = vmatprep.subr.mxu0 0.0
    %v5072 = vand.u32 %v3535, 4294901760
    %v5073 = vsub.f32 %v3535, %v5072
    %5074 = vmatpush1.msra.mxu0 %v5073
    %5075 = vmatprep.subr.mxu0 0.0
    %v5076 = vand.u32 %v3536, 4294901760
    %v5077 = vsub.f32 %v3536, %v5076
    %5078 = vmatpush1.msra.mxu0 %v5077
    %5079 = vmatprep.subr.mxu0 0.0
    %v5080 = vand.u32 %v3537, 4294901760
    %v5081 = vsub.f32 %v3537, %v5080
    %5082 = vmatpush1.msra.mxu0 %v5081
    %5083 = vmatprep.subr.mxu0 0.0
    %v5084 = vand.u32 %v3538, 4294901760
    %v5085 = vsub.f32 %v3538, %v5084
    %5086 = vmatpush1.msra.mxu0 %v5085
    %5087 = vmatprep.subr.mxu0 0.0
    %v5088 = vand.u32 %v3539, 4294901760
    %v5089 = vsub.f32 %v3539, %v5088
    %5090 = vmatpush1.msra.mxu0 %v5089
    %5091 = vmatprep.subr.mxu0 0.0
    %v5092 = vand.u32 %v3540, 4294901760
    %v5093 = vsub.f32 %v3540, %v5092
    %5094 = vmatpush1.msra.mxu0 %v5093
    %5095 = vmatprep.subr.mxu0 0.0
    %v5096 = vand.u32 %v3541, 4294901760
    %v5097 = vsub.f32 %v3541, %v5096
    %5098 = vmatpush1.msra.mxu0 %v5097
    %5099 = vmatprep.subr.mxu0 0.0
    %v5100 = vand.u32 %v3542, 4294901760
    %v5101 = vsub.f32 %v3542, %v5100
    %5102 = vmatpush1.msra.mxu0 %v5101
    %5103 = vmatprep.subr.mxu0 0.0
    %v5104 = vand.u32 %v3543, 4294901760
    %v5105 = vsub.f32 %v3543, %v5104
    %5106 = vmatpush1.msra.mxu0 %v5105
    %5107 = vmatprep.subr.mxu0 0.0
    %v5108 = vand.u32 %v3544, 4294901760
    %v5109 = vsub.f32 %v3544, %v5108
    %5110 = vmatpush1.msra.mxu0 %v5109
    %5111 = vmatprep.subr.mxu0 0.0
    %v5112 = vand.u32 %v3545, 4294901760
    %v5113 = vsub.f32 %v3545, %v5112
    %5114 = vmatpush1.msra.mxu0 %v5113
    %v5115 = vand.u32 %v3469, 4294901760
    %v5116 = vsub.f32 %v3469, %v5115
    %5117 = vmatprep.mubr.f32.mxu0 %v5116
    %v5118 = vand.u32 %v3468, 4294901760
    %v5119 = vsub.f32 %v3468, %v5118
    %5120 = vmatmul.mubr.f32.gmra.mrb[0].mxu0 %v5119
    %v5121 = vpop.f32.mrb[0].mxu0
    %v5122 = vadd.f32 %v4963, %v5121
    %v5123 = vpop.f32.mrb[0].mxu0
    %v5124 = vand.u32 %v3473, 4294901760
    %v5125 = vsub.f32 %v3473, %v5124
    %5126 = vmatprep.mubr.f32.mxu0 %v5125
    %v5127 = vand.u32 %v3472, 4294901760
    %v5128 = vsub.f32 %v3472, %v5127
    %5129 = vmatmul.mubr.f32.gmra.mrb[0].mxu0 %v5128
    %v5130 = vpop.f32.mrb[0].mxu0
    %v5131 = vadd.f32 %v4970, %v5130
    %v5132 = vpop.f32.mrb[0].mxu0
    %v5133 = vand.u32 %v3477, 4294901760
    %v5134 = vsub.f32 %v3477, %v5133
    %5135 = vmatprep.mubr.f32.mxu0 %v5134
    %v5136 = vand.u32 %v3476, 4294901760
    %v5137 = vsub.f32 %v3476, %v5136
    %5138 = vmatmul.mubr.f32.gmra.mrb[0].mxu0 %v5137
    %v5139 = vpop.f32.mrb[0].mxu0
    %v5140 = vadd.f32 %v4977, %v5139
    %v5141 = vpop.f32.mrb[0].mxu0
    %v5142 = vand.u32 %v3481, 4294901760
    %v5143 = vsub.f32 %v3481, %v5142
    %5144 = vmatprep.mubr.f32.mxu0 %v5143
    %v5145 = vand.u32 %v3480, 4294901760
    %v5146 = vsub.f32 %v3480, %v5145
    %5147 = vmatmul.mubr.f32.gmra.mrb[0].mxu0 %v5146
    %v5148 = vpop.f32.mrb[0].mxu0
    %v5149 = vadd.f32 %v4984, %v5148
    %v5150 = vpop.f32.mrb[0].mxu0
    %5151 = vdwg.mxu0
    %5152 = vmatprep.subr.mxu0 0.0
    %v5153 = vand.u32 %v3514, 4294901760
    %5154 = vmatpush1.msra.mxu0 %v5153
    %5155 = vmatprep.subr.mxu0 0.0
    %v5156 = vand.u32 %v3515, 4294901760
    %5157 = vmatpush1.msra.mxu0 %v5156
    %5158 = vmatprep.subr.mxu0 0.0
    %v5159 = vand.u32 %v3516, 4294901760
    %5160 = vmatpush1.msra.mxu0 %v5159
    %5161 = vmatprep.subr.mxu0 0.0
    %v5162 = vand.u32 %v3517, 4294901760
    %5163 = vmatpush1.msra.mxu0 %v5162
    %5164 = vmatprep.subr.mxu0 0.0
    %v5165 = vand.u32 %v3518, 4294901760
    %5166 = vmatpush1.msra.mxu0 %v5165
    %5167 = vmatprep.subr.mxu0 0.0
    %v5168 = vand.u32 %v3519, 4294901760
    %5169 = vmatpush1.msra.mxu0 %v5168
    %5170 = vmatprep.subr.mxu0 0.0
    %v5171 = vand.u32 %v3520, 4294901760
    %5172 = vmatpush1.msra.mxu0 %v5171
    %5173 = vmatprep.subr.mxu0 0.0
    %v5174 = vand.u32 %v3521, 4294901760
    %5175 = vmatpush1.msra.mxu0 %v5174
    %5176 = vmatprep.subr.mxu0 0.0
    %v5177 = vand.u32 %v3522, 4294901760
    %5178 = vmatpush1.msra.mxu0 %v5177
    %5179 = vmatprep.subr.mxu0 0.0
    %v5180 = vand.u32 %v3523, 4294901760
    %5181 = vmatpush1.msra.mxu0 %v5180
    %5182 = vmatprep.subr.mxu0 0.0
    %v5183 = vand.u32 %v3524, 4294901760
    %5184 = vmatpush1.msra.mxu0 %v5183
    %5185 = vmatprep.subr.mxu0 0.0
    %v5186 = vand.u32 %v3525, 4294901760
    %5187 = vmatpush1.msra.mxu0 %v5186
    %5188 = vmatprep.subr.mxu0 0.0
    %v5189 = vand.u32 %v3526, 4294901760
    %5190 = vmatpush1.msra.mxu0 %v5189
    %5191 = vmatprep.subr.mxu0 0.0
    %v5192 = vand.u32 %v3527, 4294901760
    %5193 = vmatpush1.msra.mxu0 %v5192
    %5194 = vmatprep.subr.mxu0 0.0
    %v5195 = vand.u32 %v3528, 4294901760
    %5196 = vmatpush1.msra.mxu0 %v5195
    %5197 = vmatprep.subr.mxu0 0.0
    %v5198 = vand.u32 %v3529, 4294901760
    %5199 = vmatpush1.msra.mxu0 %v5198
    %5200 = vmatprep.subr.mxu0 0.0
    %v5201 = vand.u32 %v3530, 4294901760
    %5202 = vmatpush1.msra.mxu0 %v5201
    %5203 = vmatprep.subr.mxu0 0.0
    %v5204 = vand.u32 %v3531, 4294901760
    %5205 = vmatpush1.msra.mxu0 %v5204
    %5206 = vmatprep.subr.mxu0 0.0
    %v5207 = vand.u32 %v3532, 4294901760
    %5208 = vmatpush1.msra.mxu0 %v5207
    %5209 = vmatprep.subr.mxu0 0.0
    %v5210 = vand.u32 %v3533, 4294901760
    %5211 = vmatpush1.msra.mxu0 %v5210
    %5212 = vmatprep.subr.mxu0 0.0
    %v5213 = vand.u32 %v3534, 4294901760
    %5214 = vmatpush1.msra.mxu0 %v5213
    %5215 = vmatprep.subr.mxu0 0.0
    %v5216 = vand.u32 %v3535, 4294901760
    %5217 = vmatpush1.msra.mxu0 %v5216
    %5218 = vmatprep.subr.mxu0 0.0
    %v5219 = vand.u32 %v3536, 4294901760
    %5220 = vmatpush1.msra.mxu0 %v5219
    %5221 = vmatprep.subr.mxu0 0.0
    %v5222 = vand.u32 %v3537, 4294901760
    %5223 = vmatpush1.msra.mxu0 %v5222
    %5224 = vmatprep.subr.mxu0 0.0
    %v5225 = vand.u32 %v3538, 4294901760
    %5226 = vmatpush1.msra.mxu0 %v5225
    %5227 = vmatprep.subr.mxu0 0.0
    %v5228 = vand.u32 %v3539, 4294901760
    %5229 = vmatpush1.msra.mxu0 %v5228
    %5230 = vmatprep.subr.mxu0 0.0
    %v5231 = vand.u32 %v3540, 4294901760
    %5232 = vmatpush1.msra.mxu0 %v5231
    %5233 = vmatprep.subr.mxu0 0.0
    %v5234 = vand.u32 %v3541, 4294901760
    %5235 = vmatpush1.msra.mxu0 %v5234
    %5236 = vmatprep.subr.mxu0 0.0
    %v5237 = vand.u32 %v3542, 4294901760
    %5238 = vmatpush1.msra.mxu0 %v5237
    %5239 = vmatprep.subr.mxu0 0.0
    %v5240 = vand.u32 %v3543, 4294901760
    %5241 = vmatpush1.msra.mxu0 %v5240
    %5242 = vmatprep.subr.mxu0 0.0
    %v5243 = vand.u32 %v3544, 4294901760
    %5244 = vmatpush1.msra.mxu0 %v5243
    %5245 = vmatprep.subr.mxu0 0.0
    %v5246 = vand.u32 %v3545, 4294901760
    %5247 = vmatpush1.msra.mxu0 %v5246
    %v5248 = vand.u32 %v3469, 4294901760
    %v5249 = vsub.f32 %v3469, %v5248
    %v5250 = vand.u32 %v5249, 4294901760
    %5251 = vmatprep.mubr.f32.mxu0 %v5250
    %v5252 = vand.u32 %v3468, 4294901760
    %v5253 = vsub.f32 %v3468, %v5252
    %v5254 = vand.u32 %v5253, 4294901760
    %5255 = vmatmul.mubr.f32.gmra.mrb[0].mxu0 %v5254
    %v5256 = vpop.f32.mrb[0].mxu0
    %v5257 = vadd.f32 %v5122, %v5256
    %v5258 = vpop.f32.mrb[0].mxu0
    %v5259 = vand.u32 %v3473, 4294901760
    %v5260 = vsub.f32 %v3473, %v5259
    %v5261 = vand.u32 %v5260, 4294901760
    %5262 = vmatprep.mubr.f32.mxu0 %v5261
    %v5263 = vand.u32 %v3472, 4294901760
    %v5264 = vsub.f32 %v3472, %v5263
    %v5265 = vand.u32 %v5264, 4294901760
    %5266 = vmatmul.mubr.f32.gmra.mrb[0].mxu0 %v5265
    %v5267 = vpop.f32.mrb[0].mxu0
    %v5268 = vadd.f32 %v5131, %v5267
    %v5269 = vpop.f32.mrb[0].mxu0
    %v5270 = vand.u32 %v3477, 4294901760
    %v5271 = vsub.f32 %v3477, %v5270
    %v5272 = vand.u32 %v5271, 4294901760
    %5273 = vmatprep.mubr.f32.mxu0 %v5272
    %v5274 = vand.u32 %v3476, 4294901760
    %v5275 = vsub.f32 %v3476, %v5274
    %v5276 = vand.u32 %v5275, 4294901760
    %5277 = vmatmul.mubr.f32.gmra.mrb[0].mxu0 %v5276
    %v5278 = vpop.f32.mrb[0].mxu0
    %v5279 = vadd.f32 %v5140, %v5278
    %v5280 = vpop.f32.mrb[0].mxu0
    %v5281 = vand.u32 %v3481, 4294901760
    %v5282 = vsub.f32 %v3481, %v5281
    %v5283 = vand.u32 %v5282, 4294901760
    %5284 = vmatprep.mubr.f32.mxu0 %v5283
    %v5285 = vand.u32 %v3480, 4294901760
    %v5286 = vsub.f32 %v3480, %v5285
    %v5287 = vand.u32 %v5286, 4294901760
    %5288 = vmatmul.mubr.f32.gmra.mrb[0].mxu0 %v5287
    %v5289 = vpop.f32.mrb[0].mxu0
    %v5290 = vadd.f32 %v5149, %v5289
    %v5291 = vpop.f32.mrb[0].mxu0
    %5292 = vdwg.mxu0
    %5293 = vmatprep.subr.mxu0 0.0
    %v5294 = vand.u32 %v3514, 4294901760
    %v5295 = vsub.f32 %v3514, %v5294
    %v5296 = vand.u32 %v5295, 4294901760
    %5297 = vmatpush1.msra.mxu0 %v5296
    %5298 = vmatprep.subr.mxu0 0.0
    %v5299 = vand.u32 %v3515, 4294901760
    %v5300 = vsub.f32 %v3515, %v5299
    %v5301 = vand.u32 %v5300, 4294901760
    %5302 = vmatpush1.msra.mxu0 %v5301
    %5303 = vmatprep.subr.mxu0 0.0
    %v5304 = vand.u32 %v3516, 4294901760
    %v5305 = vsub.f32 %v3516, %v5304
    %v5306 = vand.u32 %v5305, 4294901760
    %5307 = vmatpush1.msra.mxu0 %v5306
    %5308 = vmatprep.subr.mxu0 0.0
    %v5309 = vand.u32 %v3517, 4294901760
    %v5310 = vsub.f32 %v3517, %v5309
    %v5311 = vand.u32 %v5310, 4294901760
    %5312 = vmatpush1.msra.mxu0 %v5311
    %5313 = vmatprep.subr.mxu0 0.0
    %v5314 = vand.u32 %v3518, 4294901760
    %v5315 = vsub.f32 %v3518, %v5314
    %v5316 = vand.u32 %v5315, 4294901760
    %5317 = vmatpush1.msra.mxu0 %v5316
    %5318 = vmatprep.subr.mxu0 0.0
    %v5319 = vand.u32 %v3519, 4294901760
    %v5320 = vsub.f32 %v3519, %v5319
    %v5321 = vand.u32 %v5320, 4294901760
    %5322 = vmatpush1.msra.mxu0 %v5321
    %5323 = vmatprep.subr.mxu0 0.0
    %v5324 = vand.u32 %v3520, 4294901760
    %v5325 = vsub.f32 %v3520, %v5324
    %v5326 = vand.u32 %v5325, 4294901760
    %5327 = vmatpush1.msra.mxu0 %v5326
    %5328 = vmatprep.subr.mxu0 0.0
    %v5329 = vand.u32 %v3521, 4294901760
    %v5330 = vsub.f32 %v3521, %v5329
    %v5331 = vand.u32 %v5330, 4294901760
    %5332 = vmatpush1.msra.mxu0 %v5331
    %5333 = vmatprep.subr.mxu0 0.0
    %v5334 = vand.u32 %v3522, 4294901760
    %v5335 = vsub.f32 %v3522, %v5334
    %v5336 = vand.u32 %v5335, 4294901760
    %5337 = vmatpush1.msra.mxu0 %v5336
    %5338 = vmatprep.subr.mxu0 0.0
    %v5339 = vand.u32 %v3523, 4294901760
    %v5340 = vsub.f32 %v3523, %v5339
    %v5341 = vand.u32 %v5340, 4294901760
    %5342 = vmatpush1.msra.mxu0 %v5341
    %5343 = vmatprep.subr.mxu0 0.0
    %v5344 = vand.u32 %v3524, 4294901760
    %v5345 = vsub.f32 %v3524, %v5344
    %v5346 = vand.u32 %v5345, 4294901760
    %5347 = vmatpush1.msra.mxu0 %v5346
    %5348 = vmatprep.subr.mxu0 0.0
    %v5349 = vand.u32 %v3525, 4294901760
    %v5350 = vsub.f32 %v3525, %v5349
    %v5351 = vand.u32 %v5350, 4294901760
    %5352 = vmatpush1.msra.mxu0 %v5351
    %5353 = vmatprep.subr.mxu0 0.0
    %v5354 = vand.u32 %v3526, 4294901760
    %v5355 = vsub.f32 %v3526, %v5354
    %v5356 = vand.u32 %v5355, 4294901760
    %5357 = vmatpush1.msra.mxu0 %v5356
    %5358 = vmatprep.subr.mxu0 0.0
    %v5359 = vand.u32 %v3527, 4294901760
    %v5360 = vsub.f32 %v3527, %v5359
    %v5361 = vand.u32 %v5360, 4294901760
    %5362 = vmatpush1.msra.mxu0 %v5361
    %5363 = vmatprep.subr.mxu0 0.0
    %v5364 = vand.u32 %v3528, 4294901760
    %v5365 = vsub.f32 %v3528, %v5364
    %v5366 = vand.u32 %v5365, 4294901760
    %5367 = vmatpush1.msra.mxu0 %v5366
    %5368 = vmatprep.subr.mxu0 0.0
    %v5369 = vand.u32 %v3529, 4294901760
    %v5370 = vsub.f32 %v3529, %v5369
    %v5371 = vand.u32 %v5370, 4294901760
    %5372 = vmatpush1.msra.mxu0 %v5371
    %5373 = vmatprep.subr.mxu0 0.0
    %v5374 = vand.u32 %v3530, 4294901760
    %v5375 = vsub.f32 %v3530, %v5374
    %v5376 = vand.u32 %v5375, 4294901760
    %5377 = vmatpush1.msra.mxu0 %v5376
    %5378 = vmatprep.subr.mxu0 0.0
    %v5379 = vand.u32 %v3531, 4294901760
    %v5380 = vsub.f32 %v3531, %v5379
    %v5381 = vand.u32 %v5380, 4294901760
    %5382 = vmatpush1.msra.mxu0 %v5381
    %5383 = vmatprep.subr.mxu0 0.0
    %v5384 = vand.u32 %v3532, 4294901760
    %v5385 = vsub.f32 %v3532, %v5384
    %v5386 = vand.u32 %v5385, 4294901760
    %5387 = vmatpush1.msra.mxu0 %v5386
    %5388 = vmatprep.subr.mxu0 0.0
    %v5389 = vand.u32 %v3533, 4294901760
    %v5390 = vsub.f32 %v3533, %v5389
    %v5391 = vand.u32 %v5390, 4294901760
    %5392 = vmatpush1.msra.mxu0 %v5391
    %5393 = vmatprep.subr.mxu0 0.0
    %v5394 = vand.u32 %v3534, 4294901760
    %v5395 = vsub.f32 %v3534, %v5394
    %v5396 = vand.u32 %v5395, 4294901760
    %5397 = vmatpush1.msra.mxu0 %v5396
    %5398 = vmatprep.subr.mxu0 0.0
    %v5399 = vand.u32 %v3535, 4294901760
    %v5400 = vsub.f32 %v3535, %v5399
    %v5401 = vand.u32 %v5400, 4294901760
    %5402 = vmatpush1.msra.mxu0 %v5401
    %5403 = vmatprep.subr.mxu0 0.0
    %v5404 = vand.u32 %v3536, 4294901760
    %v5405 = vsub.f32 %v3536, %v5404
    %v5406 = vand.u32 %v5405, 4294901760
    %5407 = vmatpush1.msra.mxu0 %v5406
    %5408 = vmatprep.subr.mxu0 0.0
    %v5409 = vand.u32 %v3537, 4294901760
    %v5410 = vsub.f32 %v3537, %v5409
    %v5411 = vand.u32 %v5410, 4294901760
    %5412 = vmatpush1.msra.mxu0 %v5411
    %5413 = vmatprep.subr.mxu0 0.0
    %v5414 = vand.u32 %v3538, 4294901760
    %v5415 = vsub.f32 %v3538, %v5414
    %v5416 = vand.u32 %v5415, 4294901760
    %5417 = vmatpush1.msra.mxu0 %v5416
    %5418 = vmatprep.subr.mxu0 0.0
    %v5419 = vand.u32 %v3539, 4294901760
    %v5420 = vsub.f32 %v3539, %v5419
    %v5421 = vand.u32 %v5420, 4294901760
    %5422 = vmatpush1.msra.mxu0 %v5421
    %5423 = vmatprep.subr.mxu0 0.0
    %v5424 = vand.u32 %v3540, 4294901760
    %v5425 = vsub.f32 %v3540, %v5424
    %v5426 = vand.u32 %v5425, 4294901760
    %5427 = vmatpush1.msra.mxu0 %v5426
    %5428 = vmatprep.subr.mxu0 0.0
    %v5429 = vand.u32 %v3541, 4294901760
    %v5430 = vsub.f32 %v3541, %v5429
    %v5431 = vand.u32 %v5430, 4294901760
    %5432 = vmatpush1.msra.mxu0 %v5431
    %5433 = vmatprep.subr.mxu0 0.0
    %v5434 = vand.u32 %v3542, 4294901760
    %v5435 = vsub.f32 %v3542, %v5434
    %v5436 = vand.u32 %v5435, 4294901760
    %5437 = vmatpush1.msra.mxu0 %v5436
    %5438 = vmatprep.subr.mxu0 0.0
    %v5439 = vand.u32 %v3543, 4294901760
    %v5440 = vsub.f32 %v3543, %v5439
    %v5441 = vand.u32 %v5440, 4294901760
    %5442 = vmatpush1.msra.mxu0 %v5441
    %5443 = vmatprep.subr.mxu0 0.0
    %v5444 = vand.u32 %v3544, 4294901760
    %v5445 = vsub.f32 %v3544, %v5444
    %v5446 = vand.u32 %v5445, 4294901760
    %5447 = vmatpush1.msra.mxu0 %v5446
    %5448 = vmatprep.subr.mxu0 0.0
    %v5449 = vand.u32 %v3545, 4294901760
    %v5450 = vsub.f32 %v3545, %v5449
    %v5451 = vand.u32 %v5450, 4294901760
    %5452 = vmatpush1.msra.mxu0 %v5451
    %v5453 = vand.u32 %v3469, 4294901760
    %5454 = vmatprep.mubr.f32.mxu0 %v5453
    %v5455 = vand.u32 %v3468, 4294901760
    %5456 = vmatmul.mubr.f32.gmra.mrb[0].mxu0 %v5455
    %v5457 = vpop.f32.mrb[0].mxu0
    %v5458 = vadd.f32 %v5257, %v5457
    %v5459 = vpop.f32.mrb[0].mxu0
    %v5460 = vand.u32 %v3473, 4294901760
    %5461 = vmatprep.mubr.f32.mxu0 %v5460
    %v5462 = vand.u32 %v3472, 4294901760
    %5463 = vmatmul.mubr.f32.gmra.mrb[0].mxu0 %v5462
    %v5464 = vpop.f32.mrb[0].mxu0
    %v5465 = vadd.f32 %v5268, %v5464
    %v5466 = vpop.f32.mrb[0].mxu0
    %v5467 = vand.u32 %v3477, 4294901760
    %5468 = vmatprep.mubr.f32.mxu0 %v5467
    %v5469 = vand.u32 %v3476, 4294901760
    %5470 = vmatmul.mubr.f32.gmra.mrb[0].mxu0 %v5469
    %v5471 = vpop.f32.mrb[0].mxu0
    %v5472 = vadd.f32 %v5279, %v5471
    %v5473 = vpop.f32.mrb[0].mxu0
    %v5474 = vand.u32 %v3481, 4294901760
    %5475 = vmatprep.mubr.f32.mxu0 %v5474
    %v5476 = vand.u32 %v3480, 4294901760
    %5477 = vmatmul.mubr.f32.gmra.mrb[0].mxu0 %v5476
    %v5478 = vpop.f32.mrb[0].mxu0
    %v5479 = vadd.f32 %v5290, %v5478
    %v5480 = vpop.f32.mrb[0].mxu0
    %5481 = vdwg.mxu0
    %5482 = vmatprep.subr.mxu0 0.0
    %v5483 = vand.u32 %v3514, 4294901760
    %5484 = vmatpush1.msra.mxu0 %v5483
    %5485 = vmatprep.subr.mxu0 0.0
    %v5486 = vand.u32 %v3515, 4294901760
    %5487 = vmatpush1.msra.mxu0 %v5486
    %5488 = vmatprep.subr.mxu0 0.0
    %v5489 = vand.u32 %v3516, 4294901760
    %5490 = vmatpush1.msra.mxu0 %v5489
    %5491 = vmatprep.subr.mxu0 0.0
    %v5492 = vand.u32 %v3517, 4294901760
    %5493 = vmatpush1.msra.mxu0 %v5492
    %5494 = vmatprep.subr.mxu0 0.0
    %v5495 = vand.u32 %v3518, 4294901760
    %5496 = vmatpush1.msra.mxu0 %v5495
    %5497 = vmatprep.subr.mxu0 0.0
    %v5498 = vand.u32 %v3519, 4294901760
    %5499 = vmatpush1.msra.mxu0 %v5498
    %5500 = vmatprep.subr.mxu0 0.0
    %v5501 = vand.u32 %v3520, 4294901760
    %5502 = vmatpush1.msra.mxu0 %v5501
    %5503 = vmatprep.subr.mxu0 0.0
    %v5504 = vand.u32 %v3521, 4294901760
    %5505 = vmatpush1.msra.mxu0 %v5504
    %5506 = vmatprep.subr.mxu0 0.0
    %v5507 = vand.u32 %v3522, 4294901760
    %5508 = vmatpush1.msra.mxu0 %v5507
    %5509 = vmatprep.subr.mxu0 0.0
    %v5510 = vand.u32 %v3523, 4294901760
    %5511 = vmatpush1.msra.mxu0 %v5510
    %5512 = vmatprep.subr.mxu0 0.0
    %v5513 = vand.u32 %v3524, 4294901760
    %5514 = vmatpush1.msra.mxu0 %v5513
    %5515 = vmatprep.subr.mxu0 0.0
    %v5516 = vand.u32 %v3525, 4294901760
    %5517 = vmatpush1.msra.mxu0 %v5516
    %5518 = vmatprep.subr.mxu0 0.0
    %v5519 = vand.u32 %v3526, 4294901760
    %5520 = vmatpush1.msra.mxu0 %v5519
    %5521 = vmatprep.subr.mxu0 0.0
    %v5522 = vand.u32 %v3527, 4294901760
    %5523 = vmatpush1.msra.mxu0 %v5522
    %5524 = vmatprep.subr.mxu0 0.0
    %v5525 = vand.u32 %v3528, 4294901760
    %5526 = vmatpush1.msra.mxu0 %v5525
    %5527 = vmatprep.subr.mxu0 0.0
    %v5528 = vand.u32 %v3529, 4294901760
    %5529 = vmatpush1.msra.mxu0 %v5528
    %5530 = vmatprep.subr.mxu0 0.0
    %v5531 = vand.u32 %v3530, 4294901760
    %5532 = vmatpush1.msra.mxu0 %v5531
    %5533 = vmatprep.subr.mxu0 0.0
    %v5534 = vand.u32 %v3531, 4294901760
    %5535 = vmatpush1.msra.mxu0 %v5534
    %5536 = vmatprep.subr.mxu0 0.0
    %v5537 = vand.u32 %v3532, 4294901760
    %5538 = vmatpush1.msra.mxu0 %v5537
    %5539 = vmatprep.subr.mxu0 0.0
    %v5540 = vand.u32 %v3533, 4294901760
    %5541 = vmatpush1.msra.mxu0 %v5540
    %5542 = vmatprep.subr.mxu0 0.0
    %v5543 = vand.u32 %v3534, 4294901760
    %5544 = vmatpush1.msra.mxu0 %v5543
    %5545 = vmatprep.subr.mxu0 0.0
    %v5546 = vand.u32 %v3535, 4294901760
    %5547 = vmatpush1.msra.mxu0 %v5546
    %5548 = vmatprep.subr.mxu0 0.0
    %v5549 = vand.u32 %v3536, 4294901760
    %5550 = vmatpush1.msra.mxu0 %v5549
    %5551 = vmatprep.subr.mxu0 0.0
    %v5552 = vand.u32 %v3537, 4294901760
    %5553 = vmatpush1.msra.mxu0 %v5552
    %5554 = vmatprep.subr.mxu0 0.0
    %v5555 = vand.u32 %v3538, 4294901760
    %5556 = vmatpush1.msra.mxu0 %v5555
    %5557 = vmatprep.subr.mxu0 0.0
    %v5558 = vand.u32 %v3539, 4294901760
    %5559 = vmatpush1.msra.mxu0 %v5558
    %5560 = vmatprep.subr.mxu0 0.0
    %v5561 = vand.u32 %v3540, 4294901760
    %5562 = vmatpush1.msra.mxu0 %v5561
    %5563 = vmatprep.subr.mxu0 0.0
    %v5564 = vand.u32 %v3541, 4294901760
    %5565 = vmatpush1.msra.mxu0 %v5564
    %5566 = vmatprep.subr.mxu0 0.0
    %v5567 = vand.u32 %v3542, 4294901760
    %5568 = vmatpush1.msra.mxu0 %v5567
    %5569 = vmatprep.subr.mxu0 0.0
    %v5570 = vand.u32 %v3543, 4294901760
    %5571 = vmatpush1.msra.mxu0 %v5570
    %5572 = vmatprep.subr.mxu0 0.0
    %v5573 = vand.u32 %v3544, 4294901760
    %5574 = vmatpush1.msra.mxu0 %v5573
    %5575 = vmatprep.subr.mxu0 0.0
    %v5576 = vand.u32 %v3545, 4294901760
    %5577 = vmatpush1.msra.mxu0 %v5576
    %v5578 = vand.u32 %v3469, 4294901760
    %5579 = vmatprep.mubr.f32.mxu0 %v5578
    %v5580 = vand.u32 %v3468, 4294901760
    %5581 = vmatmul.mubr.f32.gmra.mrb[0].mxu0 %v5580
    %v5582 = vpop.f32.mrb[0].mxu0
    %v5583 = vadd.f32 %v5458, %v5582
    %v5584 = vpop.f32.mrb[0].mxu0
    %v5585 = vand.u32 %v3473, 4294901760
    %5586 = vmatprep.mubr.f32.mxu0 %v5585
    %v5587 = vand.u32 %v3472, 4294901760
    %5588 = vmatmul.mubr.f32.gmra.mrb[0].mxu0 %v5587
    %v5589 = vpop.f32.mrb[0].mxu0
    %v5590 = vadd.f32 %v5465, %v5589
    %v5591 = vpop.f32.mrb[0].mxu0
    %v5592 = vand.u32 %v3477, 4294901760
    %5593 = vmatprep.mubr.f32.mxu0 %v5592
    %v5594 = vand.u32 %v3476, 4294901760
    %5595 = vmatmul.mubr.f32.gmra.mrb[0].mxu0 %v5594
    %v5596 = vpop.f32.mrb[0].mxu0
    %v5597 = vadd.f32 %v5472, %v5596
    %v5598 = vpop.f32.mrb[0].mxu0
    %v5599 = vand.u32 %v3481, 4294901760
    %5600 = vmatprep.mubr.f32.mxu0 %v5599
    %v5601 = vand.u32 %v3480, 4294901760
    %5602 = vmatmul.mubr.f32.gmra.mrb[0].mxu0 %v5601
    %v5603 = vpop.f32.mrb[0].mxu0
    %v5604 = vadd.f32 %v5479, %v5603
    %v5605 = vpop.f32.mrb[0].mxu0
    %5606 = vdwg.mxu0
    %v5607 = vadd.f32 %v5583, %v48
    %v5608 = vadd.f32 %v5590, %v49
    %v5609 = vadd.f32 %v5597, %v50
    %v5610 = vadd.f32 %v5604, %v51
    %5611 = vst [vmem:[%s5] sm:$0xff] %v5607
    %5612 = vst [vmem:[%s5 + $0x8] sm:$0xff] %v5608
    %5613 = vst [vmem:[%s5 + $0x10] sm:$0xff] %v5609
    %5614 = vst [vmem:[%s5 + $0x18] sm:$0xff] %v5610
    // Predicated region
    $region30: #{mbconv_forward.1} parent=1 // pred_check
      _
    $region31: #{mbconv_forward.1} parent=1 // pred_check_branch
      %5616 = sbr.rel (0) target = $region33
    $region32: #{mbconv_forward.1} parent=1 // pred_region
      _
    $region33: #{mbconv_forward.1} parent=1 // pred_fallthru
      _
    // Predicated region
    $region34: #{mbconv_forward.1} parent=1 // pred_check
      _
    $region35: #{mbconv_forward.1} parent=1 // pred_check_branch
      %5618 = sbr.rel (0) target = $region37
    $region36: #{mbconv_forward.1} parent=1 // pred_region
      _
    $region37: #{mbconv_forward.1} parent=1 // pred_fallthru
      _
    %5619 = vsyncpa [#allocation3], 1
    %5620 = vsyncpa [#allocation5], 1

</llo_original>
